<compile_context>
chip_gen: v5e
topology: v5e:2x2
jax: 0.10.0
libtpu: 0.0.40
codegen_flags: <defaults>
</compile_context>

<pallas_src>
import functools
import math

import jax
import jax.numpy as jnp
from jax import lax
from jax.experimental import pallas as pl
from jax.experimental.pallas import tpu as pltpu


# ----------------------- config (mirrors DTPConfig fields used) --------------
class Config:
    d_input = 32
    d_model = 32
    n_heads = 2
    d_model_ff = 64
    n_layers = 2
    n_cands = 4
    use_text_query = True
    use_text_cands = True
    sel_dropout = 0.0   # eval mode -> identity
    enc_dropout = 0.0
    use_ste = True      # unused on the eval path


def _layer_norm(x, g, b, eps=1e-5):
    mu = jnp.mean(x, axis=-1, keepdims=True)
    var = jnp.mean((x - mu) ** 2, axis=-1, keepdims=True)
    return (x - mu) * lax.rsqrt(var + eps) * g + b


# ----------------------------- the Pallas kernel ------------------------------
def selector_kernel(x_ref, xvis_ref, embW_ref, embB_ref, mod_ref,
                    qW_ref, qB_ref, kW_ref, kB_ref, vW_ref, vB_ref,
                    outW_ref, outB_ref,
                    ff1W_ref, ff1B_ref, ff2W_ref, ff2B_ref,
                    ln1g_ref, ln1b_ref, ln2g_ref, ln2b_ref,
                    logW_ref, logB_ref,
                    sel_ref, mask_ref, logit_ref,
                    *, batch, n_text_feats, n_heads, n_layers):
    BS, Din = x_ref.shape               # flat batch-major rows: row = b*S + s
    B = batch
    S = BS // B
    T = xvis_ref.shape[1]
    D = embW_ref.shape[1]               # d_model
    Dh = qW_ref.shape[3]                # head dim

    f32 = jnp.float32
    bf16 = jnp.bfloat16

    def mm(a, w):
        # bf16 MXU matmul with f32 accumulation (weights are stored bf16).
        return jnp.dot(a.astype(bf16), w, preferred_element_type=f32)

    # embedding (dropout is identity in eval mode), then DTP encoder prologue:
    # scale by sqrt(d_model) + modality encoding (pre-flattened to (B*S, D)).
    x = x_ref[...]                                             # (B*S, Din) f32
    h = mm(x, embW_ref[...]) + embB_ref[...]
    h = h * f32(math.sqrt(D)) + mod_ref[...]

    inv_sqrt_dh = f32(1.0 / math.sqrt(Dh))

    # post-LN transformer encoder layers (nn.TransformerEncoderLayer defaults,
    # relu activation).  Heads use per-head pre-split weights; the attention
    # itself is one batched einsum per head over the full batch.
    for l in range(n_layers):
        hb = h.astype(bf16)
        attn = jnp.zeros((BS, D), f32)
        for hh in range(n_heads):
            q = (jnp.dot(hb, qW_ref[l, hh], preferred_element_type=f32)
                 + qB_ref[l, hh]).reshape(B, S, Dh)
            k = (jnp.dot(hb, kW_ref[l, hh], preferred_element_type=f32)
                 + kB_ref[l, hh]).reshape(B, S, Dh)
            v = (jnp.dot(hb, vW_ref[l, hh], preferred_element_type=f32)
                 + vB_ref[l, hh]).astype(bf16).reshape(B, S, Dh)

            s = jnp.einsum('bqd,bkd->bqk', q.astype(bf16), k.astype(bf16),
                           preferred_element_type=f32) * inv_sqrt_dh  # (B,S,S)
            s = s - jnp.max(s, axis=-1, keepdims=True)
            p = jnp.exp(s)
            p = p * pl.reciprocal(jnp.sum(p, axis=-1, keepdims=True),
                                  approx=True)
            o = jnp.einsum('bqk,bkd->bqd', p.astype(bf16), v,
                           preferred_element_type=f32)                # (B,S,Dh)
            # out_proj applied per head-block and summed == out_proj(concat).
            attn = attn + jnp.dot(o.reshape(BS, Dh).astype(bf16),
                                  outW_ref[l, hh],
                                  preferred_element_type=f32)
        attn = attn + outB_ref[l]

        h = _layer_norm(h + attn, ln1g_ref[l], ln1b_ref[l])
        ff = jnp.maximum(mm(h, ff1W_ref[l]) + ff1B_ref[l], 0.0)
        ff = mm(ff, ff2W_ref[l]) + ff2B_ref[l]
        h = _layer_norm(h + ff, ln2g_ref[l], ln2b_ref[l])

    # logits head as a matmul over all rows (text rows are cheap and dropped
    # right after): Linear(d_model, 1), f32 for argmax stability.
    logits_col = jnp.dot(h, logW_ref[...], preferred_element_type=f32)  # (B*S,1)
    logits_bs = logits_col.reshape(B, S) + logB_ref[...]                # (B,S)
    logits_bt = logits_bs[:, n_text_feats:]                             # (B,T)

    # eval-mode selection: one-hot of (first) argmax over the frame axis.
    iota_t = lax.broadcasted_iota(jnp.int32, (B, T), 1)
    maxv = jnp.max(logits_bt, axis=-1, keepdims=True)
    cand = jnp.where(logits_bt >= maxv, iota_t, T)
    first = jnp.min(cand, axis=-1, keepdims=True)
    mask_bt = (iota_t == first).astype(f32)                             # (B,T)

    # selected_frames = mask @ x_vis (unmodified visual embeddings), f32 exact.
    x_vis = xvis_ref[...]                                               # (B,T,Din)
    sel = jnp.einsum('bqt,btd->bqd', mask_bt[:, None, :], x_vis,
                     preferred_element_type=f32)                        # (B,1,Din)

    sel_ref[...] = sel[:, 0, :]
    mask_ref[...] = mask_bt
    logit_ref[...] = logits_bt


# ----------------------------- parameters ------------------------------------
def init_params(key, cfg):
    """Parameters in torch layout (Linear weight = (out, in))."""
    D_in, D = cfg.d_input, cfg.d_model
    Dff, L = cfg.d_model_ff, cfg.n_layers
    keys = jax.random.split(key, 13)
    s = 0.02

    def rnd(k, shape):
        return jax.random.normal(k, shape, jnp.float32) * s

    return dict(
        emb_W=rnd(keys[0], (D, D_in)),
        emb_b=rnd(keys[1], (D,)),
        mod_table=rnd(keys[2], (3, D)),       # modality: query / cands / visual
        qkv_W=rnd(keys[3], (L, 3 * D, D)),    # nn.MultiheadAttention in_proj_weight
        qkv_b=rnd(keys[4], (L, 3 * D)),
        out_W=rnd(keys[5], (L, D, D)),
        out_b=rnd(keys[6], (L, D)),
        ff1_W=rnd(keys[7], (L, Dff, D)),
        ff1_b=rnd(keys[8], (L, Dff)),
        ff2_W=rnd(keys[9], (L, D, Dff)),
        ff2_b=rnd(keys[10], (L, D)),
        ln1_g=jnp.ones((L, D), jnp.float32),
        ln1_b=jnp.zeros((L, D), jnp.float32),
        ln2_g=jnp.ones((L, D), jnp.float32),
        ln2_b=jnp.zeros((L, D), jnp.float32),
        log_W=rnd(keys[11], (1, D)),
        log_b=rnd(keys[12], (1,)),
    )


def prepare_params(params, cfg, T, B):
    """One-time weight prep: transposes, per-head split, bf16 cast, modality
    encoding flattened to the kernel's batch-major (B*S, D) layout."""
    D_in, D = cfg.d_input, cfg.d_model
    Dff, L, H = cfg.d_model_ff, cfg.n_layers, cfg.n_heads
    Dh = D // H
    n_q = 1 if cfg.use_text_query else 0
    n_c = cfg.n_cands if cfg.use_text_cands else 0
    n_text_feats = n_q + n_c
    S = n_text_feats + T

    bf16, f32 = jnp.bfloat16, jnp.float32
    qkv_W, qkv_b = params["qkv_W"], params["qkv_b"]

    def head_w(base):
        # rows [base+hh*Dh, base+(hh+1)*Dh) of in_proj_weight, transposed so
        # the kernel computes x @ W directly: (L, H, D, Dh), bf16.
        w = qkv_W[:, base:base + D, :].reshape(L, H, Dh, D)
        return jnp.transpose(w, (0, 1, 3, 2)).astype(bf16)

    def head_b(base):
        return qkv_b[:, base:base + D].reshape(L, H, 1, Dh).astype(f32)

    # out_proj(concat(heads)) == sum_h head_h @ out_W[:, h-block].T
    outWh = jnp.transpose(params["out_W"].reshape(L, D, H, Dh),
                          (0, 2, 3, 1)).astype(bf16)           # (L, H, Dh, D)

    # modality encoding, repeated per batch to match flat rows (b*S + s).
    ids = jnp.concatenate([
        jnp.zeros((n_q,), jnp.int32),
        jnp.full((n_c,), 1, jnp.int32),
        jnp.full((T,), 2, jnp.int32)])
    mod_seq = params["mod_table"][ids]                         # (S, D)
    mod_flat = jnp.tile(mod_seq, (B, 1)).astype(f32)           # (B*S, D)

    return dict(
        n_text_feats=n_text_feats,
        embW=params["emb_W"].T.astype(bf16),                   # (Din, D)
        embB=params["emb_b"][None, :].astype(f32),             # (1, D)
        mod=mod_flat,
        qW=head_w(0),      qB=head_b(0),
        kW=head_w(D),      kB=head_b(D),
        vW=head_w(2 * D),  vB=head_b(2 * D),
        outW=outWh,        outB=params["out_b"][:, None, :].astype(f32),
        ff1W=jnp.transpose(params["ff1_W"], (0, 2, 1)).astype(bf16),
        ff1B=params["ff1_b"][:, None, :].astype(f32),
        ff2W=jnp.transpose(params["ff2_W"], (0, 2, 1)).astype(bf16),
        ff2B=params["ff2_b"][:, None, :].astype(f32),
        ln1g=params["ln1_g"][:, None, :], ln1b=params["ln1_b"][:, None, :],
        ln2g=params["ln2_g"][:, None, :], ln2b=params["ln2_b"][:, None, :],
        logW=params["log_W"].T.astype(f32),                    # (D, 1)
        logB=params["log_b"][None, :].astype(f32),             # (1, 1)
    )


# ----------------------------- wrapper ----------------------------------------
def selector_forward(prepped, cfg, x_vis_seq, x_txt_query, x_txt_cands):
    B, T, D_in = x_vis_seq.shape

    # Batch-major concatenation (query, cands, visual) -> flat (B*S, D_in).
    parts = []
    if cfg.use_text_query:
        parts.append(x_txt_query[:, None, :])                  # (B, 1, D_in)
    if cfg.use_text_cands:
        parts.append(x_txt_cands)                              # (B, n_cands, D_in)
    parts.append(x_vis_seq)                                    # (B, T, D_in)
    x_in = jnp.concatenate(parts, axis=1)                      # (B, S, D_in)
    S = x_in.shape[1]
    x_flat = x_in.reshape(B * S, D_in)

    kern = functools.partial(selector_kernel,
                             batch=B,
                             n_text_feats=prepped["n_text_feats"],
                             n_heads=cfg.n_heads,
                             n_layers=cfg.n_layers)
    vmem = pl.BlockSpec(memory_space=pltpu.MemorySpace.VMEM)

    args = (x_flat, x_vis_seq,
            prepped["embW"], prepped["embB"], prepped["mod"],
            prepped["qW"], prepped["qB"], prepped["kW"], prepped["kB"],
            prepped["vW"], prepped["vB"],
            prepped["outW"], prepped["outB"],
            prepped["ff1W"], prepped["ff1B"], prepped["ff2W"], prepped["ff2B"],
            prepped["ln1g"], prepped["ln1b"], prepped["ln2g"], prepped["ln2b"],
            prepped["logW"], prepped["logB"])

    sel, mask_bt, logits_bt = pl.pallas_call(
        kern,
        out_shape=(
            jax.ShapeDtypeStruct((B, D_in), jnp.float32),   # selected_frames
            jax.ShapeDtypeStruct((B, T), jnp.float32),      # selection_mask
            jax.ShapeDtypeStruct((B, T), jnp.float32),      # x_logits
        ),
        in_specs=[vmem] * len(args),
        out_specs=(vmem, vmem, vmem),
    )(*args)

    # Back to torch shapes: selection_mask / x_logits are (T, B, 1).
    return (sel,
            jnp.transpose(mask_bt)[:, :, None],
            jnp.transpose(logits_bt)[:, :, None])


# ----------------------------- main -------------------------------------------
if __name__ == "__main__":
    cfg = Config()
    B, T = 2, 8

    key = jax.random.PRNGKey(0)
    k_p, k_v, k_q, k_c = jax.random.split(key, 4)

    params = init_params(k_p, cfg)
    prepped = prepare_params(params, cfg, T=T, B=B)   # one-time weight prep

    x_vis_seq = jax.random.normal(k_v, (B, T, cfg.d_input), jnp.float32)
    x_txt_query = jax.random.normal(k_q, (B, cfg.d_input), jnp.float32)
    x_txt_cands = jax.random.normal(k_c, (B, cfg.n_cands, cfg.d_input), jnp.float32)

    selected_frames, selection_mask, x_logits = selector_forward(
        prepped, cfg, x_vis_seq, x_txt_query, x_txt_cands)

    jax.block_until_ready((selected_frames, selection_mask, x_logits))
    assert selected_frames.shape == (B, cfg.d_input)
    assert selection_mask.shape == (T, B, 1)
    assert x_logits.shape == (T, B, 1)
    print("KERNEL_OK")
</pallas_src>

<mosaic_0001>
module attributes {stable_mosaic.version = 11 : i64} {
  func.func @selector_kernel(%arg0: memref<26x32xf32, #tpu.memory_space<vmem>>, %arg1: memref<2x8x32xf32, #tpu.memory_space<vmem>>, %arg2: memref<32x32xbf16, #tpu.memory_space<vmem>>, %arg3: memref<1x32xf32, #tpu.memory_space<vmem>>, %arg4: memref<26x32xf32, #tpu.memory_space<vmem>>, %arg5: memref<2x2x32x16xbf16, #tpu.memory_space<vmem>>, %arg6: memref<2x2x1x16xf32, #tpu.memory_space<vmem>>, %arg7: memref<2x2x32x16xbf16, #tpu.memory_space<vmem>>, %arg8: memref<2x2x1x16xf32, #tpu.memory_space<vmem>>, %arg9: memref<2x2x32x16xbf16, #tpu.memory_space<vmem>>, %arg10: memref<2x2x1x16xf32, #tpu.memory_space<vmem>>, %arg11: memref<2x2x16x32xbf16, #tpu.memory_space<vmem>>, %arg12: memref<2x1x32xf32, #tpu.memory_space<vmem>>, %arg13: memref<2x32x64xbf16, #tpu.memory_space<vmem>>, %arg14: memref<2x1x64xf32, #tpu.memory_space<vmem>>, %arg15: memref<2x64x32xbf16, #tpu.memory_space<vmem>>, %arg16: memref<2x1x32xf32, #tpu.memory_space<vmem>>, %arg17: memref<2x1x32xf32, #tpu.memory_space<vmem>>, %arg18: memref<2x1x32xf32, #tpu.memory_space<vmem>>, %arg19: memref<2x1x32xf32, #tpu.memory_space<vmem>>, %arg20: memref<2x1x32xf32, #tpu.memory_space<vmem>>, %arg21: memref<32x1xf32, #tpu.memory_space<vmem>>, %arg22: memref<1x1xf32, #tpu.memory_space<vmem>>, %arg23: memref<2x32xf32, #tpu.memory_space<vmem>>, %arg24: memref<2x8xf32, #tpu.memory_space<vmem>>, %arg25: memref<2x8xf32, #tpu.memory_space<vmem>>) attributes {dimension_semantics = [], scalar_prefetch = 0 : i64, scratch_operands = 0 : i64, tpu.core_type = #tpu.core_type<tc>} {
    %c0 = arith.constant 0 : index
    %c0_0 = arith.constant 0 : index
    %0 = vector.load %arg0[%c0, %c0_0] : memref<26x32xf32, #tpu.memory_space<vmem>>, vector<26x32xf32>
    %c0_1 = arith.constant 0 : index
    %c0_2 = arith.constant 0 : index
    %1 = vector.load %arg2[%c0_1, %c0_2] : memref<32x32xbf16, #tpu.memory_space<vmem>>, vector<32x32xbf16>
    %2 = arith.truncf %0 : vector<26x32xf32> to vector<26x32xbf16>
    %cst = arith.constant dense<0.000000e+00> : vector<26x32xf32>
    %3 = tpu.matmul %2, %1, %cst {dimension_numbers = #tpu.dot_dimension_numbers<[1], [0], [0], [1], [0, 0, 1, 1], [], []>} : vector<26x32xbf16>, vector<32x32xbf16>, vector<26x32xf32> -> vector<26x32xf32>
    %c0_3 = arith.constant 0 : index
    %c0_4 = arith.constant 0 : index
    %4 = vector.load %arg3[%c0_3, %c0_4] : memref<1x32xf32, #tpu.memory_space<vmem>>, vector<1x32xf32>
    %5 = vector.broadcast %4 : vector<1x32xf32> to vector<26x32xf32>
    %6 = arith.addf %3, %5 : vector<26x32xf32>
    %cst_5 = arith.constant 5.65685415 : f32
    %7 = vector.broadcast %cst_5 : f32 to vector<26x32xf32>
    %8 = arith.mulf %6, %7 : vector<26x32xf32>
    %c0_6 = arith.constant 0 : index
    %c0_7 = arith.constant 0 : index
    %9 = vector.load %arg4[%c0_6, %c0_7] : memref<26x32xf32, #tpu.memory_space<vmem>>, vector<26x32xf32>
    %10 = arith.addf %8, %9 : vector<26x32xf32>
    %11 = arith.truncf %10 : vector<26x32xf32> to vector<26x32xbf16>
    %cst_8 = arith.constant 0.000000e+00 : f32
    %12 = vector.broadcast %cst_8 : f32 to vector<26x32xf32>
    %c0_9 = arith.constant 0 : index
    %c0_10 = arith.constant 0 : index
    %c0_11 = arith.constant 0 : index
    %c0_12 = arith.constant 0 : index
    %13 = vector.load %arg5[%c0_9, %c0_10, %c0_11, %c0_12] : memref<2x2x32x16xbf16, #tpu.memory_space<vmem>>, vector<1x1x32x16xbf16>
    %14 = vector.shape_cast %13 : vector<1x1x32x16xbf16> to vector<32x16xbf16>
    %cst_13 = arith.constant dense<0.000000e+00> : vector<26x16xf32>
    %15 = tpu.matmul %11, %14, %cst_13 {dimension_numbers = #tpu.dot_dimension_numbers<[1], [0], [0], [1], [0, 0, 1, 1], [], []>} : vector<26x32xbf16>, vector<32x16xbf16>, vector<26x16xf32> -> vector<26x16xf32>
    %c0_14 = arith.constant 0 : index
    %c0_15 = arith.constant 0 : index
    %c0_16 = arith.constant 0 : index
    %c0_17 = arith.constant 0 : index
    %16 = vector.load %arg6[%c0_14, %c0_15, %c0_16, %c0_17] : memref<2x2x1x16xf32, #tpu.memory_space<vmem>>, vector<1x1x1x16xf32>
    %17 = vector.shape_cast %16 : vector<1x1x1x16xf32> to vector<1x16xf32>
    %18 = vector.broadcast %17 : vector<1x16xf32> to vector<26x16xf32>
    %19 = arith.addf %15, %18 : vector<26x16xf32>
    %20 = vector.shape_cast %19 : vector<26x16xf32> to vector<2x13x16xf32>
    %c0_18 = arith.constant 0 : index
    %c0_19 = arith.constant 0 : index
    %c0_20 = arith.constant 0 : index
    %c0_21 = arith.constant 0 : index
    %21 = vector.load %arg7[%c0_18, %c0_19, %c0_20, %c0_21] : memref<2x2x32x16xbf16, #tpu.memory_space<vmem>>, vector<1x1x32x16xbf16>
    %22 = vector.shape_cast %21 : vector<1x1x32x16xbf16> to vector<32x16xbf16>
    %cst_22 = arith.constant dense<0.000000e+00> : vector<26x16xf32>
    %23 = tpu.matmul %11, %22, %cst_22 {dimension_numbers = #tpu.dot_dimension_numbers<[1], [0], [0], [1], [0, 0, 1, 1], [], []>} : vector<26x32xbf16>, vector<32x16xbf16>, vector<26x16xf32> -> vector<26x16xf32>
    %c0_23 = arith.constant 0 : index
    %c0_24 = arith.constant 0 : index
    %c0_25 = arith.constant 0 : index
    %c0_26 = arith.constant 0 : index
    %24 = vector.load %arg8[%c0_23, %c0_24, %c0_25, %c0_26] : memref<2x2x1x16xf32, #tpu.memory_space<vmem>>, vector<1x1x1x16xf32>
    %25 = vector.shape_cast %24 : vector<1x1x1x16xf32> to vector<1x16xf32>
    %26 = vector.broadcast %25 : vector<1x16xf32> to vector<26x16xf32>
    %27 = arith.addf %23, %26 : vector<26x16xf32>
    %28 = vector.shape_cast %27 : vector<26x16xf32> to vector<2x13x16xf32>
    %c0_27 = arith.constant 0 : index
    %c0_28 = arith.constant 0 : index
    %c0_29 = arith.constant 0 : index
    %c0_30 = arith.constant 0 : index
    %29 = vector.load %arg9[%c0_27, %c0_28, %c0_29, %c0_30] : memref<2x2x32x16xbf16, #tpu.memory_space<vmem>>, vector<1x1x32x16xbf16>
    %30 = vector.shape_cast %29 : vector<1x1x32x16xbf16> to vector<32x16xbf16>
    %cst_31 = arith.constant dense<0.000000e+00> : vector<26x16xf32>
    %31 = tpu.matmul %11, %30, %cst_31 {dimension_numbers = #tpu.dot_dimension_numbers<[1], [0], [0], [1], [0, 0, 1, 1], [], []>} : vector<26x32xbf16>, vector<32x16xbf16>, vector<26x16xf32> -> vector<26x16xf32>
    %c0_32 = arith.constant 0 : index
    %c0_33 = arith.constant 0 : index
    %c0_34 = arith.constant 0 : index
    %c0_35 = arith.constant 0 : index
    %32 = vector.load %arg10[%c0_32, %c0_33, %c0_34, %c0_35] : memref<2x2x1x16xf32, #tpu.memory_space<vmem>>, vector<1x1x1x16xf32>
    %33 = vector.shape_cast %32 : vector<1x1x1x16xf32> to vector<1x16xf32>
    %34 = vector.broadcast %33 : vector<1x16xf32> to vector<26x16xf32>
    %35 = arith.addf %31, %34 : vector<26x16xf32>
    %36 = arith.truncf %35 : vector<26x16xf32> to vector<26x16xbf16>
    %37 = vector.shape_cast %36 : vector<26x16xbf16> to vector<2x13x16xbf16>
    %38 = arith.truncf %20 : vector<2x13x16xf32> to vector<2x13x16xbf16>
    %39 = arith.truncf %28 : vector<2x13x16xf32> to vector<2x13x16xbf16>
    "tpu.trace_start"() <{level = 10 : i32, message = "bqd,bkd->bqk"}> : () -> ()
    %cst_36 = arith.constant dense<0.000000e+00> : vector<2x13x13xf32>
    %40 = tpu.matmul %38, %39, %cst_36 {dimension_numbers = #tpu.dot_dimension_numbers<[2], [2], [1], [1], [0, 0, 0, 1, 1, 1], [0], [0]>} : vector<2x13x16xbf16>, vector<2x13x16xbf16>, vector<2x13x13xf32> -> vector<2x13x13xf32>
    "tpu.trace_stop"() : () -> ()
    %cst_37 = arith.constant 2.500000e-01 : f32
    %41 = vector.broadcast %cst_37 : f32 to vector<2x13x13xf32>
    %42 = arith.mulf %40, %41 : vector<2x13x13xf32>
    %cst_38 = arith.constant dense<0xFF800000> : vector<2x13xf32>
    %43 = vector.multi_reduction <maximumf>, %42, %cst_38 [2] : vector<2x13x13xf32> to vector<2x13xf32>
    %44 = vector.shape_cast %43 : vector<2x13xf32> to vector<2x13x1xf32>
    %45 = vector.broadcast %44 : vector<2x13x1xf32> to vector<2x13x13xf32>
    %46 = arith.subf %42, %45 : vector<2x13x13xf32>
    %47 = math.exp %46 : vector<2x13x13xf32>
    %cst_39 = arith.constant dense<0.000000e+00> : vector<2x13xf32>
    %48 = vector.multi_reduction <add>, %47, %cst_39 [2] : vector<2x13x13xf32> to vector<2x13xf32>
    %49 = vector.shape_cast %48 : vector<2x13xf32> to vector<2x13x1xf32>
    %50 = tpu.reciprocal %49 {approx = true} : vector<2x13x1xf32> -> vector<2x13x1xf32>
    %51 = vector.broadcast %50 : vector<2x13x1xf32> to vector<2x13x13xf32>
    %52 = arith.mulf %47, %51 : vector<2x13x13xf32>
    %53 = arith.truncf %52 : vector<2x13x13xf32> to vector<2x13x13xbf16>
    "tpu.trace_start"() <{level = 10 : i32, message = "bqk,bkd->bqd"}> : () -> ()
    %cst_40 = arith.constant dense<0.000000e+00> : vector<2x13x16xf32>
    %54 = tpu.matmul %53, %37, %cst_40 {dimension_numbers = #tpu.dot_dimension_numbers<[2], [1], [1], [2], [0, 0, 0, 1, 1, 2], [0], [0]>} : vector<2x13x13xbf16>, vector<2x13x16xbf16>, vector<2x13x16xf32> -> vector<2x13x16xf32>
    "tpu.trace_stop"() : () -> ()
    %55 = vector.shape_cast %54 : vector<2x13x16xf32> to vector<26x16xf32>
    %56 = arith.truncf %55 : vector<26x16xf32> to vector<26x16xbf16>
    %c0_41 = arith.constant 0 : index
    %c0_42 = arith.constant 0 : index
    %c0_43 = arith.constant 0 : index
    %c0_44 = arith.constant 0 : index
    %57 = vector.load %arg11[%c0_41, %c0_42, %c0_43, %c0_44] : memref<2x2x16x32xbf16, #tpu.memory_space<vmem>>, vector<1x1x16x32xbf16>
    %58 = vector.shape_cast %57 : vector<1x1x16x32xbf16> to vector<16x32xbf16>
    %cst_45 = arith.constant dense<0.000000e+00> : vector<26x32xf32>
    %59 = tpu.matmul %56, %58, %cst_45 {dimension_numbers = #tpu.dot_dimension_numbers<[1], [0], [0], [1], [0, 0, 1, 1], [], []>} : vector<26x16xbf16>, vector<16x32xbf16>, vector<26x32xf32> -> vector<26x32xf32>
    %60 = arith.addf %12, %59 : vector<26x32xf32>
    %c0_46 = arith.constant 0 : index
    %c1 = arith.constant 1 : index
    %c0_47 = arith.constant 0 : index
    %c0_48 = arith.constant 0 : index
    %61 = vector.load %arg5[%c0_46, %c1, %c0_47, %c0_48] : memref<2x2x32x16xbf16, #tpu.memory_space<vmem>>, vector<1x1x32x16xbf16>
    %62 = vector.shape_cast %61 : vector<1x1x32x16xbf16> to vector<32x16xbf16>
    %cst_49 = arith.constant dense<0.000000e+00> : vector<26x16xf32>
    %63 = tpu.matmul %11, %62, %cst_49 {dimension_numbers = #tpu.dot_dimension_numbers<[1], [0], [0], [1], [0, 0, 1, 1], [], []>} : vector<26x32xbf16>, vector<32x16xbf16>, vector<26x16xf32> -> vector<26x16xf32>
    %c0_50 = arith.constant 0 : index
    %c1_51 = arith.constant 1 : index
    %c0_52 = arith.constant 0 : index
    %c0_53 = arith.constant 0 : index
    %64 = vector.load %arg6[%c0_50, %c1_51, %c0_52, %c0_53] : memref<2x2x1x16xf32, #tpu.memory_space<vmem>>, vector<1x1x1x16xf32>
    %65 = vector.shape_cast %64 : vector<1x1x1x16xf32> to vector<1x16xf32>
    %66 = vector.broadcast %65 : vector<1x16xf32> to vector<26x16xf32>
    %67 = arith.addf %63, %66 : vector<26x16xf32>
    %68 = vector.shape_cast %67 : vector<26x16xf32> to vector<2x13x16xf32>
    %c0_54 = arith.constant 0 : index
    %c1_55 = arith.constant 1 : index
    %c0_56 = arith.constant 0 : index
    %c0_57 = arith.constant 0 : index
    %69 = vector.load %arg7[%c0_54, %c1_55, %c0_56, %c0_57] : memref<2x2x32x16xbf16, #tpu.memory_space<vmem>>, vector<1x1x32x16xbf16>
    %70 = vector.shape_cast %69 : vector<1x1x32x16xbf16> to vector<32x16xbf16>
    %cst_58 = arith.constant dense<0.000000e+00> : vector<26x16xf32>
    %71 = tpu.matmul %11, %70, %cst_58 {dimension_numbers = #tpu.dot_dimension_numbers<[1], [0], [0], [1], [0, 0, 1, 1], [], []>} : vector<26x32xbf16>, vector<32x16xbf16>, vector<26x16xf32> -> vector<26x16xf32>
    %c0_59 = arith.constant 0 : index
    %c1_60 = arith.constant 1 : index
    %c0_61 = arith.constant 0 : index
    %c0_62 = arith.constant 0 : index
    %72 = vector.load %arg8[%c0_59, %c1_60, %c0_61, %c0_62] : memref<2x2x1x16xf32, #tpu.memory_space<vmem>>, vector<1x1x1x16xf32>
    %73 = vector.shape_cast %72 : vector<1x1x1x16xf32> to vector<1x16xf32>
    %74 = vector.broadcast %73 : vector<1x16xf32> to vector<26x16xf32>
    %75 = arith.addf %71, %74 : vector<26x16xf32>
    %76 = vector.shape_cast %75 : vector<26x16xf32> to vector<2x13x16xf32>
    %c0_63 = arith.constant 0 : index
    %c1_64 = arith.constant 1 : index
    %c0_65 = arith.constant 0 : index
    %c0_66 = arith.constant 0 : index
    %77 = vector.load %arg9[%c0_63, %c1_64, %c0_65, %c0_66] : memref<2x2x32x16xbf16, #tpu.memory_space<vmem>>, vector<1x1x32x16xbf16>
    %78 = vector.shape_cast %77 : vector<1x1x32x16xbf16> to vector<32x16xbf16>
    %cst_67 = arith.constant dense<0.000000e+00> : vector<26x16xf32>
    %79 = tpu.matmul %11, %78, %cst_67 {dimension_numbers = #tpu.dot_dimension_numbers<[1], [0], [0], [1], [0, 0, 1, 1], [], []>} : vector<26x32xbf16>, vector<32x16xbf16>, vector<26x16xf32> -> vector<26x16xf32>
    %c0_68 = arith.constant 0 : index
    %c1_69 = arith.constant 1 : index
    %c0_70 = arith.constant 0 : index
    %c0_71 = arith.constant 0 : index
    %80 = vector.load %arg10[%c0_68, %c1_69, %c0_70, %c0_71] : memref<2x2x1x16xf32, #tpu.memory_space<vmem>>, vector<1x1x1x16xf32>
    %81 = vector.shape_cast %80 : vector<1x1x1x16xf32> to vector<1x16xf32>
    %82 = vector.broadcast %81 : vector<1x16xf32> to vector<26x16xf32>
    %83 = arith.addf %79, %82 : vector<26x16xf32>
    %84 = arith.truncf %83 : vector<26x16xf32> to vector<26x16xbf16>
    %85 = vector.shape_cast %84 : vector<26x16xbf16> to vector<2x13x16xbf16>
    %86 = arith.truncf %68 : vector<2x13x16xf32> to vector<2x13x16xbf16>
    %87 = arith.truncf %76 : vector<2x13x16xf32> to vector<2x13x16xbf16>
    "tpu.trace_start"() <{level = 10 : i32, message = "bqd,bkd->bqk"}> : () -> ()
    %cst_72 = arith.constant dense<0.000000e+00> : vector<2x13x13xf32>
    %88 = tpu.matmul %86, %87, %cst_72 {dimension_numbers = #tpu.dot_dimension_numbers<[2], [2], [1], [1], [0, 0, 0, 1, 1, 1], [0], [0]>} : vector<2x13x16xbf16>, vector<2x13x16xbf16>, vector<2x13x13xf32> -> vector<2x13x13xf32>
    "tpu.trace_stop"() : () -> ()
    %cst_73 = arith.constant 2.500000e-01 : f32
    %89 = vector.broadcast %cst_73 : f32 to vector<2x13x13xf32>
    %90 = arith.mulf %88, %89 : vector<2x13x13xf32>
    %cst_74 = arith.constant dense<0xFF800000> : vector<2x13xf32>
    %91 = vector.multi_reduction <maximumf>, %90, %cst_74 [2] : vector<2x13x13xf32> to vector<2x13xf32>
    %92 = vector.shape_cast %91 : vector<2x13xf32> to vector<2x13x1xf32>
    %93 = vector.broadcast %92 : vector<2x13x1xf32> to vector<2x13x13xf32>
    %94 = arith.subf %90, %93 : vector<2x13x13xf32>
    %95 = math.exp %94 : vector<2x13x13xf32>
    %cst_75 = arith.constant dense<0.000000e+00> : vector<2x13xf32>
    %96 = vector.multi_reduction <add>, %95, %cst_75 [2] : vector<2x13x13xf32> to vector<2x13xf32>
    %97 = vector.shape_cast %96 : vector<2x13xf32> to vector<2x13x1xf32>
    %98 = tpu.reciprocal %97 {approx = true} : vector<2x13x1xf32> -> vector<2x13x1xf32>
    %99 = vector.broadcast %98 : vector<2x13x1xf32> to vector<2x13x13xf32>
    %100 = arith.mulf %95, %99 : vector<2x13x13xf32>
    %101 = arith.truncf %100 : vector<2x13x13xf32> to vector<2x13x13xbf16>
    "tpu.trace_start"() <{level = 10 : i32, message = "bqk,bkd->bqd"}> : () -> ()
    %cst_76 = arith.constant dense<0.000000e+00> : vector<2x13x16xf32>
    %102 = tpu.matmul %101, %85, %cst_76 {dimension_numbers = #tpu.dot_dimension_numbers<[2], [1], [1], [2], [0, 0, 0, 1, 1, 2], [0], [0]>} : vector<2x13x13xbf16>, vector<2x13x16xbf16>, vector<2x13x16xf32> -> vector<2x13x16xf32>
    "tpu.trace_stop"() : () -> ()
    %103 = vector.shape_cast %102 : vector<2x13x16xf32> to vector<26x16xf32>
    %104 = arith.truncf %103 : vector<26x16xf32> to vector<26x16xbf16>
    %c0_77 = arith.constant 0 : index
    %c1_78 = arith.constant 1 : index
    %c0_79 = arith.constant 0 : index
    %c0_80 = arith.constant 0 : index
    %105 = vector.load %arg11[%c0_77, %c1_78, %c0_79, %c0_80] : memref<2x2x16x32xbf16, #tpu.memory_space<vmem>>, vector<1x1x16x32xbf16>
    %106 = vector.shape_cast %105 : vector<1x1x16x32xbf16> to vector<16x32xbf16>
    %cst_81 = arith.constant dense<0.000000e+00> : vector<26x32xf32>
    %107 = tpu.matmul %104, %106, %cst_81 {dimension_numbers = #tpu.dot_dimension_numbers<[1], [0], [0], [1], [0, 0, 1, 1], [], []>} : vector<26x16xbf16>, vector<16x32xbf16>, vector<26x32xf32> -> vector<26x32xf32>
    %108 = arith.addf %60, %107 : vector<26x32xf32>
    %c0_82 = arith.constant 0 : index
    %c0_83 = arith.constant 0 : index
    %c0_84 = arith.constant 0 : index
    %109 = vector.load %arg12[%c0_82, %c0_83, %c0_84] : memref<2x1x32xf32, #tpu.memory_space<vmem>>, vector<1x1x32xf32>
    %110 = vector.shape_cast %109 : vector<1x1x32xf32> to vector<1x32xf32>
    %111 = vector.broadcast %110 : vector<1x32xf32> to vector<26x32xf32>
    %112 = arith.addf %108, %111 : vector<26x32xf32>
    %113 = arith.addf %10, %112 : vector<26x32xf32>
    %c0_85 = arith.constant 0 : index
    %c0_86 = arith.constant 0 : index
    %c0_87 = arith.constant 0 : index
    %114 = vector.load %arg17[%c0_85, %c0_86, %c0_87] : memref<2x1x32xf32, #tpu.memory_space<vmem>>, vector<1x1x32xf32>
    %115 = vector.shape_cast %114 : vector<1x1x32xf32> to vector<1x32xf32>
    %c0_88 = arith.constant 0 : index
    %c0_89 = arith.constant 0 : index
    %c0_90 = arith.constant 0 : index
    %116 = vector.load %arg18[%c0_88, %c0_89, %c0_90] : memref<2x1x32xf32, #tpu.memory_space<vmem>>, vector<1x1x32xf32>
    %117 = vector.shape_cast %116 : vector<1x1x32xf32> to vector<1x32xf32>
    %cst_91 = arith.constant dense<0.000000e+00> : vector<26xf32>
    %118 = vector.multi_reduction <add>, %113, %cst_91 [1] : vector<26x32xf32> to vector<26xf32>
    %119 = vector.shape_cast %118 : vector<26xf32> to vector<26x1xf32>
    %cst_92 = arith.constant 3.200000e+01 : f32
    %120 = vector.broadcast %cst_92 : f32 to vector<26x1xf32>
    %121 = arith.divf %119, %120 : vector<26x1xf32>
    %122 = vector.broadcast %121 : vector<26x1xf32> to vector<26x32xf32>
    %123 = arith.subf %113, %122 : vector<26x32xf32>
    %124 = arith.mulf %123, %123 : vector<26x32xf32>
    %cst_93 = arith.constant dense<0.000000e+00> : vector<26xf32>
    %125 = vector.multi_reduction <add>, %124, %cst_93 [1] : vector<26x32xf32> to vector<26xf32>
    %126 = vector.shape_cast %125 : vector<26xf32> to vector<26x1xf32>
    %cst_94 = arith.constant 3.200000e+01 : f32
    %127 = vector.broadcast %cst_94 : f32 to vector<26x1xf32>
    %128 = arith.divf %126, %127 : vector<26x1xf32>
    %129 = vector.broadcast %121 : vector<26x1xf32> to vector<26x32xf32>
    %130 = arith.subf %113, %129 : vector<26x32xf32>
    %cst_95 = arith.constant 9.99999974E-6 : f32
    %131 = vector.broadcast %cst_95 : f32 to vector<26x1xf32>
    %132 = arith.addf %128, %131 : vector<26x1xf32>
    %133 = math.rsqrt %132 : vector<26x1xf32>
    %134 = vector.broadcast %133 : vector<26x1xf32> to vector<26x32xf32>
    %135 = arith.mulf %130, %134 : vector<26x32xf32>
    %136 = vector.broadcast %115 : vector<1x32xf32> to vector<26x32xf32>
    %137 = arith.mulf %135, %136 : vector<26x32xf32>
    %138 = vector.broadcast %117 : vector<1x32xf32> to vector<26x32xf32>
    %139 = arith.addf %137, %138 : vector<26x32xf32>
    %c0_96 = arith.constant 0 : index
    %c0_97 = arith.constant 0 : index
    %c0_98 = arith.constant 0 : index
    %140 = vector.load %arg13[%c0_96, %c0_97, %c0_98] : memref<2x32x64xbf16, #tpu.memory_space<vmem>>, vector<1x32x64xbf16>
    %141 = vector.shape_cast %140 : vector<1x32x64xbf16> to vector<32x64xbf16>
    %142 = arith.truncf %139 : vector<26x32xf32> to vector<26x32xbf16>
    %cst_99 = arith.constant dense<0.000000e+00> : vector<26x64xf32>
    %143 = tpu.matmul %142, %141, %cst_99 {dimension_numbers = #tpu.dot_dimension_numbers<[1], [0], [0], [1], [0, 0, 1, 1], [], []>} : vector<26x32xbf16>, vector<32x64xbf16>, vector<26x64xf32> -> vector<26x64xf32>
    %c0_100 = arith.constant 0 : index
    %c0_101 = arith.constant 0 : index
    %c0_102 = arith.constant 0 : index
    %144 = vector.load %arg14[%c0_100, %c0_101, %c0_102] : memref<2x1x64xf32, #tpu.memory_space<vmem>>, vector<1x1x64xf32>
    %145 = vector.shape_cast %144 : vector<1x1x64xf32> to vector<1x64xf32>
    %146 = vector.broadcast %145 : vector<1x64xf32> to vector<26x64xf32>
    %147 = arith.addf %143, %146 : vector<26x64xf32>
    %cst_103 = arith.constant 0.000000e+00 : f32
    %148 = vector.broadcast %cst_103 : f32 to vector<26x64xf32>
    %149 = arith.maximumf %147, %148 : vector<26x64xf32>
    %c0_104 = arith.constant 0 : index
    %c0_105 = arith.constant 0 : index
    %c0_106 = arith.constant 0 : index
    %150 = vector.load %arg15[%c0_104, %c0_105, %c0_106] : memref<2x64x32xbf16, #tpu.memory_space<vmem>>, vector<1x64x32xbf16>
    %151 = vector.shape_cast %150 : vector<1x64x32xbf16> to vector<64x32xbf16>
    %152 = arith.truncf %149 : vector<26x64xf32> to vector<26x64xbf16>
    %cst_107 = arith.constant dense<0.000000e+00> : vector<26x32xf32>
    %153 = tpu.matmul %152, %151, %cst_107 {dimension_numbers = #tpu.dot_dimension_numbers<[1], [0], [0], [1], [0, 0, 1, 1], [], []>} : vector<26x64xbf16>, vector<64x32xbf16>, vector<26x32xf32> -> vector<26x32xf32>
    %c0_108 = arith.constant 0 : index
    %c0_109 = arith.constant 0 : index
    %c0_110 = arith.constant 0 : index
    %154 = vector.load %arg16[%c0_108, %c0_109, %c0_110] : memref<2x1x32xf32, #tpu.memory_space<vmem>>, vector<1x1x32xf32>
    %155 = vector.shape_cast %154 : vector<1x1x32xf32> to vector<1x32xf32>
    %156 = vector.broadcast %155 : vector<1x32xf32> to vector<26x32xf32>
    %157 = arith.addf %153, %156 : vector<26x32xf32>
    %158 = arith.addf %139, %157 : vector<26x32xf32>
    %c0_111 = arith.constant 0 : index
    %c0_112 = arith.constant 0 : index
    %c0_113 = arith.constant 0 : index
    %159 = vector.load %arg19[%c0_111, %c0_112, %c0_113] : memref<2x1x32xf32, #tpu.memory_space<vmem>>, vector<1x1x32xf32>
    %160 = vector.shape_cast %159 : vector<1x1x32xf32> to vector<1x32xf32>
    %c0_114 = arith.constant 0 : index
    %c0_115 = arith.constant 0 : index
    %c0_116 = arith.constant 0 : index
    %161 = vector.load %arg20[%c0_114, %c0_115, %c0_116] : memref<2x1x32xf32, #tpu.memory_space<vmem>>, vector<1x1x32xf32>
    %162 = vector.shape_cast %161 : vector<1x1x32xf32> to vector<1x32xf32>
    %cst_117 = arith.constant dense<0.000000e+00> : vector<26xf32>
    %163 = vector.multi_reduction <add>, %158, %cst_117 [1] : vector<26x32xf32> to vector<26xf32>
    %164 = vector.shape_cast %163 : vector<26xf32> to vector<26x1xf32>
    %cst_118 = arith.constant 3.200000e+01 : f32
    %165 = vector.broadcast %cst_118 : f32 to vector<26x1xf32>
    %166 = arith.divf %164, %165 : vector<26x1xf32>
    %167 = vector.broadcast %166 : vector<26x1xf32> to vector<26x32xf32>
    %168 = arith.subf %158, %167 : vector<26x32xf32>
    %169 = arith.mulf %168, %168 : vector<26x32xf32>
    %cst_119 = arith.constant dense<0.000000e+00> : vector<26xf32>
    %170 = vector.multi_reduction <add>, %169, %cst_119 [1] : vector<26x32xf32> to vector<26xf32>
    %171 = vector.shape_cast %170 : vector<26xf32> to vector<26x1xf32>
    %cst_120 = arith.constant 3.200000e+01 : f32
    %172 = vector.broadcast %cst_120 : f32 to vector<26x1xf32>
    %173 = arith.divf %171, %172 : vector<26x1xf32>
    %174 = vector.broadcast %166 : vector<26x1xf32> to vector<26x32xf32>
    %175 = arith.subf %158, %174 : vector<26x32xf32>
    %cst_121 = arith.constant 9.99999974E-6 : f32
    %176 = vector.broadcast %cst_121 : f32 to vector<26x1xf32>
    %177 = arith.addf %173, %176 : vector<26x1xf32>
    %178 = math.rsqrt %177 : vector<26x1xf32>
    %179 = vector.broadcast %178 : vector<26x1xf32> to vector<26x32xf32>
    %180 = arith.mulf %175, %179 : vector<26x32xf32>
    %181 = vector.broadcast %160 : vector<1x32xf32> to vector<26x32xf32>
    %182 = arith.mulf %180, %181 : vector<26x32xf32>
    %183 = vector.broadcast %162 : vector<1x32xf32> to vector<26x32xf32>
    %184 = arith.addf %182, %183 : vector<26x32xf32>
    %185 = arith.truncf %184 : vector<26x32xf32> to vector<26x32xbf16>
    %cst_122 = arith.constant 0.000000e+00 : f32
    %186 = vector.broadcast %cst_122 : f32 to vector<26x32xf32>
    %c1_123 = arith.constant 1 : index
    %c0_124 = arith.constant 0 : index
    %c0_125 = arith.constant 0 : index
    %c0_126 = arith.constant 0 : index
    %187 = vector.load %arg5[%c1_123, %c0_124, %c0_125, %c0_126] : memref<2x2x32x16xbf16, #tpu.memory_space<vmem>>, vector<1x1x32x16xbf16>
    %188 = vector.shape_cast %187 : vector<1x1x32x16xbf16> to vector<32x16xbf16>
    %cst_127 = arith.constant dense<0.000000e+00> : vector<26x16xf32>
    %189 = tpu.matmul %185, %188, %cst_127 {dimension_numbers = #tpu.dot_dimension_numbers<[1], [0], [0], [1], [0, 0, 1, 1], [], []>} : vector<26x32xbf16>, vector<32x16xbf16>, vector<26x16xf32> -> vector<26x16xf32>
    %c1_128 = arith.constant 1 : index
    %c0_129 = arith.constant 0 : index
    %c0_130 = arith.constant 0 : index
    %c0_131 = arith.constant 0 : index
    %190 = vector.load %arg6[%c1_128, %c0_129, %c0_130, %c0_131] : memref<2x2x1x16xf32, #tpu.memory_space<vmem>>, vector<1x1x1x16xf32>
    %191 = vector.shape_cast %190 : vector<1x1x1x16xf32> to vector<1x16xf32>
    %192 = vector.broadcast %191 : vector<1x16xf32> to vector<26x16xf32>
    %193 = arith.addf %189, %192 : vector<26x16xf32>
    %194 = vector.shape_cast %193 : vector<26x16xf32> to vector<2x13x16xf32>
    %c1_132 = arith.constant 1 : index
    %c0_133 = arith.constant 0 : index
    %c0_134 = arith.constant 0 : index
    %c0_135 = arith.constant 0 : index
    %195 = vector.load %arg7[%c1_132, %c0_133, %c0_134, %c0_135] : memref<2x2x32x16xbf16, #tpu.memory_space<vmem>>, vector<1x1x32x16xbf16>
    %196 = vector.shape_cast %195 : vector<1x1x32x16xbf16> to vector<32x16xbf16>
    %cst_136 = arith.constant dense<0.000000e+00> : vector<26x16xf32>
    %197 = tpu.matmul %185, %196, %cst_136 {dimension_numbers = #tpu.dot_dimension_numbers<[1], [0], [0], [1], [0, 0, 1, 1], [], []>} : vector<26x32xbf16>, vector<32x16xbf16>, vector<26x16xf32> -> vector<26x16xf32>
    %c1_137 = arith.constant 1 : index
    %c0_138 = arith.constant 0 : index
    %c0_139 = arith.constant 0 : index
    %c0_140 = arith.constant 0 : index
    %198 = vector.load %arg8[%c1_137, %c0_138, %c0_139, %c0_140] : memref<2x2x1x16xf32, #tpu.memory_space<vmem>>, vector<1x1x1x16xf32>
    %199 = vector.shape_cast %198 : vector<1x1x1x16xf32> to vector<1x16xf32>
    %200 = vector.broadcast %199 : vector<1x16xf32> to vector<26x16xf32>
    %201 = arith.addf %197, %200 : vector<26x16xf32>
    %202 = vector.shape_cast %201 : vector<26x16xf32> to vector<2x13x16xf32>
    %c1_141 = arith.constant 1 : index
    %c0_142 = arith.constant 0 : index
    %c0_143 = arith.constant 0 : index
    %c0_144 = arith.constant 0 : index
    %203 = vector.load %arg9[%c1_141, %c0_142, %c0_143, %c0_144] : memref<2x2x32x16xbf16, #tpu.memory_space<vmem>>, vector<1x1x32x16xbf16>
    %204 = vector.shape_cast %203 : vector<1x1x32x16xbf16> to vector<32x16xbf16>
    %cst_145 = arith.constant dense<0.000000e+00> : vector<26x16xf32>
    %205 = tpu.matmul %185, %204, %cst_145 {dimension_numbers = #tpu.dot_dimension_numbers<[1], [0], [0], [1], [0, 0, 1, 1], [], []>} : vector<26x32xbf16>, vector<32x16xbf16>, vector<26x16xf32> -> vector<26x16xf32>
    %c1_146 = arith.constant 1 : index
    %c0_147 = arith.constant 0 : index
    %c0_148 = arith.constant 0 : index
    %c0_149 = arith.constant 0 : index
    %206 = vector.load %arg10[%c1_146, %c0_147, %c0_148, %c0_149] : memref<2x2x1x16xf32, #tpu.memory_space<vmem>>, vector<1x1x1x16xf32>
    %207 = vector.shape_cast %206 : vector<1x1x1x16xf32> to vector<1x16xf32>
    %208 = vector.broadcast %207 : vector<1x16xf32> to vector<26x16xf32>
    %209 = arith.addf %205, %208 : vector<26x16xf32>
    %210 = arith.truncf %209 : vector<26x16xf32> to vector<26x16xbf16>
    %211 = vector.shape_cast %210 : vector<26x16xbf16> to vector<2x13x16xbf16>
    %212 = arith.truncf %194 : vector<2x13x16xf32> to vector<2x13x16xbf16>
    %213 = arith.truncf %202 : vector<2x13x16xf32> to vector<2x13x16xbf16>
    "tpu.trace_start"() <{level = 10 : i32, message = "bqd,bkd->bqk"}> : () -> ()
    %cst_150 = arith.constant dense<0.000000e+00> : vector<2x13x13xf32>
    %214 = tpu.matmul %212, %213, %cst_150 {dimension_numbers = #tpu.dot_dimension_numbers<[2], [2], [1], [1], [0, 0, 0, 1, 1, 1], [0], [0]>} : vector<2x13x16xbf16>, vector<2x13x16xbf16>, vector<2x13x13xf32> -> vector<2x13x13xf32>
    "tpu.trace_stop"() : () -> ()
    %cst_151 = arith.constant 2.500000e-01 : f32
    %215 = vector.broadcast %cst_151 : f32 to vector<2x13x13xf32>
    %216 = arith.mulf %214, %215 : vector<2x13x13xf32>
    %cst_152 = arith.constant dense<0xFF800000> : vector<2x13xf32>
    %217 = vector.multi_reduction <maximumf>, %216, %cst_152 [2] : vector<2x13x13xf32> to vector<2x13xf32>
    %218 = vector.shape_cast %217 : vector<2x13xf32> to vector<2x13x1xf32>
    %219 = vector.broadcast %218 : vector<2x13x1xf32> to vector<2x13x13xf32>
    %220 = arith.subf %216, %219 : vector<2x13x13xf32>
    %221 = math.exp %220 : vector<2x13x13xf32>
    %cst_153 = arith.constant dense<0.000000e+00> : vector<2x13xf32>
    %222 = vector.multi_reduction <add>, %221, %cst_153 [2] : vector<2x13x13xf32> to vector<2x13xf32>
    %223 = vector.shape_cast %222 : vector<2x13xf32> to vector<2x13x1xf32>
    %224 = tpu.reciprocal %223 {approx = true} : vector<2x13x1xf32> -> vector<2x13x1xf32>
    %225 = vector.broadcast %224 : vector<2x13x1xf32> to vector<2x13x13xf32>
    %226 = arith.mulf %221, %225 : vector<2x13x13xf32>
    %227 = arith.truncf %226 : vector<2x13x13xf32> to vector<2x13x13xbf16>
    "tpu.trace_start"() <{level = 10 : i32, message = "bqk,bkd->bqd"}> : () -> ()
    %cst_154 = arith.constant dense<0.000000e+00> : vector<2x13x16xf32>
    %228 = tpu.matmul %227, %211, %cst_154 {dimension_numbers = #tpu.dot_dimension_numbers<[2], [1], [1], [2], [0, 0, 0, 1, 1, 2], [0], [0]>} : vector<2x13x13xbf16>, vector<2x13x16xbf16>, vector<2x13x16xf32> -> vector<2x13x16xf32>
    "tpu.trace_stop"() : () -> ()
    %229 = vector.shape_cast %228 : vector<2x13x16xf32> to vector<26x16xf32>
    %230 = arith.truncf %229 : vector<26x16xf32> to vector<26x16xbf16>
    %c1_155 = arith.constant 1 : index
    %c0_156 = arith.constant 0 : index
    %c0_157 = arith.constant 0 : index
    %c0_158 = arith.constant 0 : index
    %231 = vector.load %arg11[%c1_155, %c0_156, %c0_157, %c0_158] : memref<2x2x16x32xbf16, #tpu.memory_space<vmem>>, vector<1x1x16x32xbf16>
    %232 = vector.shape_cast %231 : vector<1x1x16x32xbf16> to vector<16x32xbf16>
    %cst_159 = arith.constant dense<0.000000e+00> : vector<26x32xf32>
    %233 = tpu.matmul %230, %232, %cst_159 {dimension_numbers = #tpu.dot_dimension_numbers<[1], [0], [0], [1], [0, 0, 1, 1], [], []>} : vector<26x16xbf16>, vector<16x32xbf16>, vector<26x32xf32> -> vector<26x32xf32>
    %234 = arith.addf %186, %233 : vector<26x32xf32>
    %c1_160 = arith.constant 1 : index
    %c1_161 = arith.constant 1 : index
    %c0_162 = arith.constant 0 : index
    %c0_163 = arith.constant 0 : index
    %235 = vector.load %arg5[%c1_160, %c1_161, %c0_162, %c0_163] : memref<2x2x32x16xbf16, #tpu.memory_space<vmem>>, vector<1x1x32x16xbf16>
    %236 = vector.shape_cast %235 : vector<1x1x32x16xbf16> to vector<32x16xbf16>
    %cst_164 = arith.constant dense<0.000000e+00> : vector<26x16xf32>
    %237 = tpu.matmul %185, %236, %cst_164 {dimension_numbers = #tpu.dot_dimension_numbers<[1], [0], [0], [1], [0, 0, 1, 1], [], []>} : vector<26x32xbf16>, vector<32x16xbf16>, vector<26x16xf32> -> vector<26x16xf32>
    %c1_165 = arith.constant 1 : index
    %c1_166 = arith.constant 1 : index
    %c0_167 = arith.constant 0 : index
    %c0_168 = arith.constant 0 : index
    %238 = vector.load %arg6[%c1_165, %c1_166, %c0_167, %c0_168] : memref<2x2x1x16xf32, #tpu.memory_space<vmem>>, vector<1x1x1x16xf32>
    %239 = vector.shape_cast %238 : vector<1x1x1x16xf32> to vector<1x16xf32>
    %240 = vector.broadcast %239 : vector<1x16xf32> to vector<26x16xf32>
    %241 = arith.addf %237, %240 : vector<26x16xf32>
    %242 = vector.shape_cast %241 : vector<26x16xf32> to vector<2x13x16xf32>
    %c1_169 = arith.constant 1 : index
    %c1_170 = arith.constant 1 : index
    %c0_171 = arith.constant 0 : index
    %c0_172 = arith.constant 0 : index
    %243 = vector.load %arg7[%c1_169, %c1_170, %c0_171, %c0_172] : memref<2x2x32x16xbf16, #tpu.memory_space<vmem>>, vector<1x1x32x16xbf16>
    %244 = vector.shape_cast %243 : vector<1x1x32x16xbf16> to vector<32x16xbf16>
    %cst_173 = arith.constant dense<0.000000e+00> : vector<26x16xf32>
    %245 = tpu.matmul %185, %244, %cst_173 {dimension_numbers = #tpu.dot_dimension_numbers<[1], [0], [0], [1], [0, 0, 1, 1], [], []>} : vector<26x32xbf16>, vector<32x16xbf16>, vector<26x16xf32> -> vector<26x16xf32>
    %c1_174 = arith.constant 1 : index
    %c1_175 = arith.constant 1 : index
    %c0_176 = arith.constant 0 : index
    %c0_177 = arith.constant 0 : index
    %246 = vector.load %arg8[%c1_174, %c1_175, %c0_176, %c0_177] : memref<2x2x1x16xf32, #tpu.memory_space<vmem>>, vector<1x1x1x16xf32>
    %247 = vector.shape_cast %246 : vector<1x1x1x16xf32> to vector<1x16xf32>
    %248 = vector.broadcast %247 : vector<1x16xf32> to vector<26x16xf32>
    %249 = arith.addf %245, %248 : vector<26x16xf32>
    %250 = vector.shape_cast %249 : vector<26x16xf32> to vector<2x13x16xf32>
    %c1_178 = arith.constant 1 : index
    %c1_179 = arith.constant 1 : index
    %c0_180 = arith.constant 0 : index
    %c0_181 = arith.constant 0 : index
    %251 = vector.load %arg9[%c1_178, %c1_179, %c0_180, %c0_181] : memref<2x2x32x16xbf16, #tpu.memory_space<vmem>>, vector<1x1x32x16xbf16>
    %252 = vector.shape_cast %251 : vector<1x1x32x16xbf16> to vector<32x16xbf16>
    %cst_182 = arith.constant dense<0.000000e+00> : vector<26x16xf32>
    %253 = tpu.matmul %185, %252, %cst_182 {dimension_numbers = #tpu.dot_dimension_numbers<[1], [0], [0], [1], [0, 0, 1, 1], [], []>} : vector<26x32xbf16>, vector<32x16xbf16>, vector<26x16xf32> -> vector<26x16xf32>
    %c1_183 = arith.constant 1 : index
    %c1_184 = arith.constant 1 : index
    %c0_185 = arith.constant 0 : index
    %c0_186 = arith.constant 0 : index
    %254 = vector.load %arg10[%c1_183, %c1_184, %c0_185, %c0_186] : memref<2x2x1x16xf32, #tpu.memory_space<vmem>>, vector<1x1x1x16xf32>
    %255 = vector.shape_cast %254 : vector<1x1x1x16xf32> to vector<1x16xf32>
    %256 = vector.broadcast %255 : vector<1x16xf32> to vector<26x16xf32>
    %257 = arith.addf %253, %256 : vector<26x16xf32>
    %258 = arith.truncf %257 : vector<26x16xf32> to vector<26x16xbf16>
    %259 = vector.shape_cast %258 : vector<26x16xbf16> to vector<2x13x16xbf16>
    %260 = arith.truncf %242 : vector<2x13x16xf32> to vector<2x13x16xbf16>
    %261 = arith.truncf %250 : vector<2x13x16xf32> to vector<2x13x16xbf16>
    "tpu.trace_start"() <{level = 10 : i32, message = "bqd,bkd->bqk"}> : () -> ()
    %cst_187 = arith.constant dense<0.000000e+00> : vector<2x13x13xf32>
    %262 = tpu.matmul %260, %261, %cst_187 {dimension_numbers = #tpu.dot_dimension_numbers<[2], [2], [1], [1], [0, 0, 0, 1, 1, 1], [0], [0]>} : vector<2x13x16xbf16>, vector<2x13x16xbf16>, vector<2x13x13xf32> -> vector<2x13x13xf32>
    "tpu.trace_stop"() : () -> ()
    %cst_188 = arith.constant 2.500000e-01 : f32
    %263 = vector.broadcast %cst_188 : f32 to vector<2x13x13xf32>
    %264 = arith.mulf %262, %263 : vector<2x13x13xf32>
    %cst_189 = arith.constant dense<0xFF800000> : vector<2x13xf32>
    %265 = vector.multi_reduction <maximumf>, %264, %cst_189 [2] : vector<2x13x13xf32> to vector<2x13xf32>
    %266 = vector.shape_cast %265 : vector<2x13xf32> to vector<2x13x1xf32>
    %267 = vector.broadcast %266 : vector<2x13x1xf32> to vector<2x13x13xf32>
    %268 = arith.subf %264, %267 : vector<2x13x13xf32>
    %269 = math.exp %268 : vector<2x13x13xf32>
    %cst_190 = arith.constant dense<0.000000e+00> : vector<2x13xf32>
    %270 = vector.multi_reduction <add>, %269, %cst_190 [2] : vector<2x13x13xf32> to vector<2x13xf32>
    %271 = vector.shape_cast %270 : vector<2x13xf32> to vector<2x13x1xf32>
    %272 = tpu.reciprocal %271 {approx = true} : vector<2x13x1xf32> -> vector<2x13x1xf32>
    %273 = vector.broadcast %272 : vector<2x13x1xf32> to vector<2x13x13xf32>
    %274 = arith.mulf %269, %273 : vector<2x13x13xf32>
    %275 = arith.truncf %274 : vector<2x13x13xf32> to vector<2x13x13xbf16>
    "tpu.trace_start"() <{level = 10 : i32, message = "bqk,bkd->bqd"}> : () -> ()
    %cst_191 = arith.constant dense<0.000000e+00> : vector<2x13x16xf32>
    %276 = tpu.matmul %275, %259, %cst_191 {dimension_numbers = #tpu.dot_dimension_numbers<[2], [1], [1], [2], [0, 0, 0, 1, 1, 2], [0], [0]>} : vector<2x13x13xbf16>, vector<2x13x16xbf16>, vector<2x13x16xf32> -> vector<2x13x16xf32>
    "tpu.trace_stop"() : () -> ()
    %277 = vector.shape_cast %276 : vector<2x13x16xf32> to vector<26x16xf32>
    %278 = arith.truncf %277 : vector<26x16xf32> to vector<26x16xbf16>
    %c1_192 = arith.constant 1 : index
    %c1_193 = arith.constant 1 : index
    %c0_194 = arith.constant 0 : index
    %c0_195 = arith.constant 0 : index
    %279 = vector.load %arg11[%c1_192, %c1_193, %c0_194, %c0_195] : memref<2x2x16x32xbf16, #tpu.memory_space<vmem>>, vector<1x1x16x32xbf16>
    %280 = vector.shape_cast %279 : vector<1x1x16x32xbf16> to vector<16x32xbf16>
    %cst_196 = arith.constant dense<0.000000e+00> : vector<26x32xf32>
    %281 = tpu.matmul %278, %280, %cst_196 {dimension_numbers = #tpu.dot_dimension_numbers<[1], [0], [0], [1], [0, 0, 1, 1], [], []>} : vector<26x16xbf16>, vector<16x32xbf16>, vector<26x32xf32> -> vector<26x32xf32>
    %282 = arith.addf %234, %281 : vector<26x32xf32>
    %c1_197 = arith.constant 1 : index
    %c0_198 = arith.constant 0 : index
    %c0_199 = arith.constant 0 : index
    %283 = vector.load %arg12[%c1_197, %c0_198, %c0_199] : memref<2x1x32xf32, #tpu.memory_space<vmem>>, vector<1x1x32xf32>
    %284 = vector.shape_cast %283 : vector<1x1x32xf32> to vector<1x32xf32>
    %285 = vector.broadcast %284 : vector<1x32xf32> to vector<26x32xf32>
    %286 = arith.addf %282, %285 : vector<26x32xf32>
    %287 = arith.addf %184, %286 : vector<26x32xf32>
    %c1_200 = arith.constant 1 : index
    %c0_201 = arith.constant 0 : index
    %c0_202 = arith.constant 0 : index
    %288 = vector.load %arg17[%c1_200, %c0_201, %c0_202] : memref<2x1x32xf32, #tpu.memory_space<vmem>>, vector<1x1x32xf32>
    %289 = vector.shape_cast %288 : vector<1x1x32xf32> to vector<1x32xf32>
    %c1_203 = arith.constant 1 : index
    %c0_204 = arith.constant 0 : index
    %c0_205 = arith.constant 0 : index
    %290 = vector.load %arg18[%c1_203, %c0_204, %c0_205] : memref<2x1x32xf32, #tpu.memory_space<vmem>>, vector<1x1x32xf32>
    %291 = vector.shape_cast %290 : vector<1x1x32xf32> to vector<1x32xf32>
    %cst_206 = arith.constant dense<0.000000e+00> : vector<26xf32>
    %292 = vector.multi_reduction <add>, %287, %cst_206 [1] : vector<26x32xf32> to vector<26xf32>
    %293 = vector.shape_cast %292 : vector<26xf32> to vector<26x1xf32>
    %cst_207 = arith.constant 3.200000e+01 : f32
    %294 = vector.broadcast %cst_207 : f32 to vector<26x1xf32>
    %295 = arith.divf %293, %294 : vector<26x1xf32>
    %296 = vector.broadcast %295 : vector<26x1xf32> to vector<26x32xf32>
    %297 = arith.subf %287, %296 : vector<26x32xf32>
    %298 = arith.mulf %297, %297 : vector<26x32xf32>
    %cst_208 = arith.constant dense<0.000000e+00> : vector<26xf32>
    %299 = vector.multi_reduction <add>, %298, %cst_208 [1] : vector<26x32xf32> to vector<26xf32>
    %300 = vector.shape_cast %299 : vector<26xf32> to vector<26x1xf32>
    %cst_209 = arith.constant 3.200000e+01 : f32
    %301 = vector.broadcast %cst_209 : f32 to vector<26x1xf32>
    %302 = arith.divf %300, %301 : vector<26x1xf32>
    %303 = vector.broadcast %295 : vector<26x1xf32> to vector<26x32xf32>
    %304 = arith.subf %287, %303 : vector<26x32xf32>
    %cst_210 = arith.constant 9.99999974E-6 : f32
    %305 = vector.broadcast %cst_210 : f32 to vector<26x1xf32>
    %306 = arith.addf %302, %305 : vector<26x1xf32>
    %307 = math.rsqrt %306 : vector<26x1xf32>
    %308 = vector.broadcast %307 : vector<26x1xf32> to vector<26x32xf32>
    %309 = arith.mulf %304, %308 : vector<26x32xf32>
    %310 = vector.broadcast %289 : vector<1x32xf32> to vector<26x32xf32>
    %311 = arith.mulf %309, %310 : vector<26x32xf32>
    %312 = vector.broadcast %291 : vector<1x32xf32> to vector<26x32xf32>
    %313 = arith.addf %311, %312 : vector<26x32xf32>
    %c1_211 = arith.constant 1 : index
    %c0_212 = arith.constant 0 : index
    %c0_213 = arith.constant 0 : index
    %314 = vector.load %arg13[%c1_211, %c0_212, %c0_213] : memref<2x32x64xbf16, #tpu.memory_space<vmem>>, vector<1x32x64xbf16>
    %315 = vector.shape_cast %314 : vector<1x32x64xbf16> to vector<32x64xbf16>
    %316 = arith.truncf %313 : vector<26x32xf32> to vector<26x32xbf16>
    %cst_214 = arith.constant dense<0.000000e+00> : vector<26x64xf32>
    %317 = tpu.matmul %316, %315, %cst_214 {dimension_numbers = #tpu.dot_dimension_numbers<[1], [0], [0], [1], [0, 0, 1, 1], [], []>} : vector<26x32xbf16>, vector<32x64xbf16>, vector<26x64xf32> -> vector<26x64xf32>
    %c1_215 = arith.constant 1 : index
    %c0_216 = arith.constant 0 : index
    %c0_217 = arith.constant 0 : index
    %318 = vector.load %arg14[%c1_215, %c0_216, %c0_217] : memref<2x1x64xf32, #tpu.memory_space<vmem>>, vector<1x1x64xf32>
    %319 = vector.shape_cast %318 : vector<1x1x64xf32> to vector<1x64xf32>
    %320 = vector.broadcast %319 : vector<1x64xf32> to vector<26x64xf32>
    %321 = arith.addf %317, %320 : vector<26x64xf32>
    %cst_218 = arith.constant 0.000000e+00 : f32
    %322 = vector.broadcast %cst_218 : f32 to vector<26x64xf32>
    %323 = arith.maximumf %321, %322 : vector<26x64xf32>
    %c1_219 = arith.constant 1 : index
    %c0_220 = arith.constant 0 : index
    %c0_221 = arith.constant 0 : index
    %324 = vector.load %arg15[%c1_219, %c0_220, %c0_221] : memref<2x64x32xbf16, #tpu.memory_space<vmem>>, vector<1x64x32xbf16>
    %325 = vector.shape_cast %324 : vector<1x64x32xbf16> to vector<64x32xbf16>
    %326 = arith.truncf %323 : vector<26x64xf32> to vector<26x64xbf16>
    %cst_222 = arith.constant dense<0.000000e+00> : vector<26x32xf32>
    %327 = tpu.matmul %326, %325, %cst_222 {dimension_numbers = #tpu.dot_dimension_numbers<[1], [0], [0], [1], [0, 0, 1, 1], [], []>} : vector<26x64xbf16>, vector<64x32xbf16>, vector<26x32xf32> -> vector<26x32xf32>
    %c1_223 = arith.constant 1 : index
    %c0_224 = arith.constant 0 : index
    %c0_225 = arith.constant 0 : index
    %328 = vector.load %arg16[%c1_223, %c0_224, %c0_225] : memref<2x1x32xf32, #tpu.memory_space<vmem>>, vector<1x1x32xf32>
    %329 = vector.shape_cast %328 : vector<1x1x32xf32> to vector<1x32xf32>
    %330 = vector.broadcast %329 : vector<1x32xf32> to vector<26x32xf32>
    %331 = arith.addf %327, %330 : vector<26x32xf32>
    %332 = arith.addf %313, %331 : vector<26x32xf32>
    %c1_226 = arith.constant 1 : index
    %c0_227 = arith.constant 0 : index
    %c0_228 = arith.constant 0 : index
    %333 = vector.load %arg19[%c1_226, %c0_227, %c0_228] : memref<2x1x32xf32, #tpu.memory_space<vmem>>, vector<1x1x32xf32>
    %334 = vector.shape_cast %333 : vector<1x1x32xf32> to vector<1x32xf32>
    %c1_229 = arith.constant 1 : index
    %c0_230 = arith.constant 0 : index
    %c0_231 = arith.constant 0 : index
    %335 = vector.load %arg20[%c1_229, %c0_230, %c0_231] : memref<2x1x32xf32, #tpu.memory_space<vmem>>, vector<1x1x32xf32>
    %336 = vector.shape_cast %335 : vector<1x1x32xf32> to vector<1x32xf32>
    %cst_232 = arith.constant dense<0.000000e+00> : vector<26xf32>
    %337 = vector.multi_reduction <add>, %332, %cst_232 [1] : vector<26x32xf32> to vector<26xf32>
    %338 = vector.shape_cast %337 : vector<26xf32> to vector<26x1xf32>
    %cst_233 = arith.constant 3.200000e+01 : f32
    %339 = vector.broadcast %cst_233 : f32 to vector<26x1xf32>
    %340 = arith.divf %338, %339 : vector<26x1xf32>
    %341 = vector.broadcast %340 : vector<26x1xf32> to vector<26x32xf32>
    %342 = arith.subf %332, %341 : vector<26x32xf32>
    %343 = arith.mulf %342, %342 : vector<26x32xf32>
    %cst_234 = arith.constant dense<0.000000e+00> : vector<26xf32>
    %344 = vector.multi_reduction <add>, %343, %cst_234 [1] : vector<26x32xf32> to vector<26xf32>
    %345 = vector.shape_cast %344 : vector<26xf32> to vector<26x1xf32>
    %cst_235 = arith.constant 3.200000e+01 : f32
    %346 = vector.broadcast %cst_235 : f32 to vector<26x1xf32>
    %347 = arith.divf %345, %346 : vector<26x1xf32>
    %348 = vector.broadcast %340 : vector<26x1xf32> to vector<26x32xf32>
    %349 = arith.subf %332, %348 : vector<26x32xf32>
    %cst_236 = arith.constant 9.99999974E-6 : f32
    %350 = vector.broadcast %cst_236 : f32 to vector<26x1xf32>
    %351 = arith.addf %347, %350 : vector<26x1xf32>
    %352 = math.rsqrt %351 : vector<26x1xf32>
    %353 = vector.broadcast %352 : vector<26x1xf32> to vector<26x32xf32>
    %354 = arith.mulf %349, %353 : vector<26x32xf32>
    %355 = vector.broadcast %334 : vector<1x32xf32> to vector<26x32xf32>
    %356 = arith.mulf %354, %355 : vector<26x32xf32>
    %357 = vector.broadcast %336 : vector<1x32xf32> to vector<26x32xf32>
    %358 = arith.addf %356, %357 : vector<26x32xf32>
    %c0_237 = arith.constant 0 : index
    %c0_238 = arith.constant 0 : index
    %359 = vector.load %arg21[%c0_237, %c0_238] : memref<32x1xf32, #tpu.memory_space<vmem>>, vector<32x1xf32>
    %cst_239 = arith.constant dense<0.000000e+00> : vector<26x1xf32>
    %360 = tpu.matmul %358, %359, %cst_239 {dimension_numbers = #tpu.dot_dimension_numbers<[1], [0], [0], [1], [0, 0, 1, 1], [], []>} : vector<26x32xf32>, vector<32x1xf32>, vector<26x1xf32> -> vector<26x1xf32>
    %361 = vector.shape_cast %360 : vector<26x1xf32> to vector<2x13xf32>
    %c0_240 = arith.constant 0 : index
    %c0_241 = arith.constant 0 : index
    %362 = vector.load %arg22[%c0_240, %c0_241] : memref<1x1xf32, #tpu.memory_space<vmem>>, vector<1x1xf32>
    %363 = vector.broadcast %362 : vector<1x1xf32> to vector<2x13xf32>
    %364 = arith.addf %361, %363 : vector<2x13xf32>
    %365 = vector.extract_strided_slice %364 {offsets = [0, 5], sizes = [2, 8], strides = [1, 1]} : vector<2x13xf32> to vector<2x8xf32>
    %366 = tpu.iota {dimensions = array<i32: 1>} : vector<2x8xi32>
    %cst_242 = arith.constant dense<0xFF800000> : vector<2xf32>
    %367 = vector.multi_reduction <maximumf>, %365, %cst_242 [1] : vector<2x8xf32> to vector<2xf32>
    %368 = vector.shape_cast %367 : vector<2xf32> to vector<2x1xf32>
    %369 = vector.broadcast %368 : vector<2x1xf32> to vector<2x8xf32>
    %370 = arith.cmpf oge, %365, %369 : vector<2x8xf32>
    %c8_i32 = arith.constant 8 : i32
    %371 = vector.broadcast %c8_i32 : i32 to vector<2x8xi32>
    %372 = arith.select %370, %366, %371 : vector<2x8xi1>, vector<2x8xi32>
    %cst_243 = arith.constant dense<2147483647> : vector<2xi32>
    %373 = vector.multi_reduction <minsi>, %372, %cst_243 [1] : vector<2x8xi32> to vector<2xi32>
    %374 = vector.shape_cast %373 : vector<2xi32> to vector<2x1xi32>
    %375 = vector.broadcast %374 : vector<2x1xi32> to vector<2x8xi32>
    %376 = arith.cmpi eq, %366, %375 : vector<2x8xi32>
    %377 = arith.extui %376 : vector<2x8xi1> to vector<2x8xi32>
    %378 = arith.sitofp %377 : vector<2x8xi32> to vector<2x8xf32>
    %c0_244 = arith.constant 0 : index
    %c0_245 = arith.constant 0 : index
    %c0_246 = arith.constant 0 : index
    %379 = vector.load %arg1[%c0_244, %c0_245, %c0_246] : memref<2x8x32xf32, #tpu.memory_space<vmem>>, vector<2x8x32xf32>
    %380 = vector.shape_cast %378 : vector<2x8xf32> to vector<2x1x8xf32>
    "tpu.trace_start"() <{level = 10 : i32, message = "bqt,btd->bqd"}> : () -> ()
    %cst_247 = arith.constant dense<0.000000e+00> : vector<2x1x32xf32>
    %381 = tpu.matmul %380, %379, %cst_247 {dimension_numbers = #tpu.dot_dimension_numbers<[2], [1], [1], [2], [0, 0, 0, 1, 1, 2], [0], [0]>} : vector<2x1x8xf32>, vector<2x8x32xf32>, vector<2x1x32xf32> -> vector<2x1x32xf32>
    "tpu.trace_stop"() : () -> ()
    %382 = vector.shape_cast %381 : vector<2x1x32xf32> to vector<2x32xf32>
    %c0_248 = arith.constant 0 : index
    %c0_249 = arith.constant 0 : index
    %383 = vector.load %arg23[%c0_248, %c0_249] : memref<2x32xf32, #tpu.memory_space<vmem>>, vector<2x32xf32>
    tpu.vector_store %arg23[%c0_248, %c0_249], %382 {strides = array<i32>} : memref<2x32xf32, #tpu.memory_space<vmem>>, vector<2x32xf32>,
    %c0_250 = arith.constant 0 : index
    %c0_251 = arith.constant 0 : index
    %384 = vector.load %arg24[%c0_250, %c0_251] : memref<2x8xf32, #tpu.memory_space<vmem>>, vector<2x8xf32>
    tpu.vector_store %arg24[%c0_250, %c0_251], %378 {strides = array<i32>} : memref<2x8xf32, #tpu.memory_space<vmem>>, vector<2x8xf32>,
    %c0_252 = arith.constant 0 : index
    %c0_253 = arith.constant 0 : index
    %385 = vector.load %arg25[%c0_252, %c0_253] : memref<2x8xf32, #tpu.memory_space<vmem>>, vector<2x8xf32>
    tpu.vector_store %arg25[%c0_252, %c0_253], %365 {strides = array<i32>} : memref<2x8xf32, #tpu.memory_space<vmem>>, vector<2x8xf32>,
    return
  }
}

</mosaic_0001>

<llo_original>
// kernel: tpu_custom_call.1
$region0: #{tpu_custom_call.1}
  #allocation0 [shape = 'u32[]', space=smem, size = 0x4, offset = 0x4, fixed_abs, tag = 'smem constant byte address 0x4 - core index']
  #allocation1 [shape = 'u32[72,128]{1,0:T(1,128)}', space=vmem, size = 0x9000, scoped, tag = 'internal scratch']
  #allocation2 [shape = 'f32[1,1]{1,0:T(1,128)S(1)}', space=vmem, size = 0x200, scoped, tag = 'scoped memory for tpu_custom_call.1']
  %s0 = inlined_call_operand.vmem [shape: f32[26,32], index: 0, kind: input, shape index: {}]
  %s1 = inlined_call_operand.vmem [shape: f32[2,8,32], index: 1, kind: input, shape index: {}]
  %s2 = inlined_call_operand.vmem [shape: bf16[32,32], index: 2, kind: input, shape index: {}]
  %s3 = inlined_call_operand.vmem [shape: f32[1,32], index: 3, kind: input, shape index: {}]
  %s4 = inlined_call_operand.vmem [shape: f32[26,32], index: 4, kind: input, shape index: {}]
  %s5 = inlined_call_operand.vmem [shape: bf16[2,2,32,16], index: 5, kind: input, shape index: {}]
  %s6 = inlined_call_operand.vmem [shape: f32[2,2,1,16], index: 6, kind: input, shape index: {}]
  %s7 = inlined_call_operand.vmem [shape: bf16[2,2,32,16], index: 7, kind: input, shape index: {}]
  %s8 = inlined_call_operand.vmem [shape: f32[2,2,1,16], index: 8, kind: input, shape index: {}]
  %s9 = inlined_call_operand.vmem [shape: bf16[2,2,32,16], index: 9, kind: input, shape index: {}]
  %s10 = inlined_call_operand.vmem [shape: f32[2,2,1,16], index: 10, kind: input, shape index: {}]
  %s11 = inlined_call_operand.vmem [shape: bf16[2,2,16,32], index: 11, kind: input, shape index: {}]
  %s12 = inlined_call_operand.vmem [shape: f32[2,1,32], index: 12, kind: input, shape index: {}]
  %s13 = inlined_call_operand.vmem [shape: bf16[2,32,64], index: 13, kind: input, shape index: {}]
  %s14 = inlined_call_operand.vmem [shape: f32[2,1,64], index: 14, kind: input, shape index: {}]
  %s15 = inlined_call_operand.vmem [shape: bf16[2,64,32], index: 15, kind: input, shape index: {}]
  %s16 = inlined_call_operand.vmem [shape: f32[2,1,32], index: 16, kind: input, shape index: {}]
  %s17 = inlined_call_operand.vmem [shape: f32[2,1,32], index: 17, kind: input, shape index: {}]
  %s18 = inlined_call_operand.vmem [shape: f32[2,1,32], index: 18, kind: input, shape index: {}]
  %s19 = inlined_call_operand.vmem [shape: f32[2,1,32], index: 19, kind: input, shape index: {}]
  %s20 = inlined_call_operand.vmem [shape: f32[2,1,32], index: 20, kind: input, shape index: {}]
  %s21 = inlined_call_operand.vmem [shape: f32[32,1], index: 21, kind: input, shape index: {}]
  %s22 = inlined_call_operand.<no memory space> [shape: f32[1,1], index: 22, kind: input, shape index: {}]
  %s23 = inlined_call_operand.hbm [shape: f32[2,32], index: 23, kind: output, shape index: {0}]
  %s24 = inlined_call_operand.hbm [shape: f32[2,8], index: 24, kind: output, shape index: {1}]
  %s25 = inlined_call_operand.hbm [shape: f32[2,8], index: 25, kind: output, shape index: {2}]
  %26 = xla_tuple %s23, %s24, %s25
  %s27 = sld [smem:[#allocation0]]
  $region118: #{tpu_custom_call.1} parent=0
    _
  %s29 = ssub.s32 1, %s27
  %s30 = scalar_select 0, %s29, %s27
  %v31 = vstv %s22
  %32 = vst [vmem:[#allocation2] sm:$0x1] %v31
  $region1: #{tpu_custom_call.1} parent=0
    #allocation3 [shape = 'u8[1024]{0}', space=vmem, size = 0x400, scoped, tag = 'output window, operand 0, single buffered']
    #allocation4 [shape = 's32[1]{0}', space=sflag, size = 0x4, scoped, tag = 'scoped memory for tpu_custom_call.1']
    #allocation5 [shape = 'u8[1024]{0}', space=vmem, size = 0x400, scoped, tag = 'output window, operand 1, single buffered']
    #allocation6 [shape = 's32[1]{0}', space=sflag, size = 0x4, scoped, tag = 'scoped memory for tpu_custom_call.1']
    #allocation7 [shape = 'u8[1024]{0}', space=vmem, size = 0x400, scoped, tag = 'output window, operand 2, single buffered']
    %33 = vsyncpa [#allocation4], 0
    %34 = vsyncpa [#allocation6], 0
    // Predicated region
    $region2: #{tpu_custom_call.1} parent=1 // pred_check
      _
    $region3: #{tpu_custom_call.1} parent=1 // pred_check_branch
      %36 = sbr.rel (0) target = $region5
    $region4: #{tpu_custom_call.1} parent=1 // pred_region
      _
    $region5: #{tpu_custom_call.1} parent=1 // pred_fallthru
      _
    // Predicated region
    $region6: #{tpu_custom_call.1} parent=1 // pred_check
      _
    $region7: #{tpu_custom_call.1} parent=1 // pred_check_branch
      %38 = sbr.rel (0) target = $region9
    $region8: #{tpu_custom_call.1} parent=1 // pred_region
      _
    $region9: #{tpu_custom_call.1} parent=1 // pred_fallthru
      _
    // Predicated region
    $region10: #{tpu_custom_call.1} parent=1 // pred_check
      _
    $region11: #{tpu_custom_call.1} parent=1 // pred_check_branch
      %40 = sbr.rel (0) target = $region13
    $region12: #{tpu_custom_call.1} parent=1 // pred_region
      _
    $region13: #{tpu_custom_call.1} parent=1 // pred_fallthru
      _
    // Predicated region
    $region14: #{tpu_custom_call.1} parent=1 // pred_check
      _
    $region15: #{tpu_custom_call.1} parent=1 // pred_check_branch
      %42 = sbr.rel (0) target = $region17
    $region16: #{tpu_custom_call.1} parent=1 // pred_region
      _
    $region17: #{tpu_custom_call.1} parent=1 // pred_fallthru
      _
    // Predicated region
    $region18: #{tpu_custom_call.1} parent=1 // pred_check
      _
    $region19: #{tpu_custom_call.1} parent=1 // pred_check_branch
      %44 = sbr.rel (0) target = $region21
    $region20: #{tpu_custom_call.1} parent=1 // pred_region
      _
    $region21: #{tpu_custom_call.1} parent=1 // pred_fallthru
      _
    // Predicated region
    $region22: #{tpu_custom_call.1} parent=1 // pred_check
      _
    $region23: #{tpu_custom_call.1} parent=1 // pred_check_branch
      %46 = sbr.rel (0) target = $region25
    $region24: #{tpu_custom_call.1} parent=1 // pred_region
      _
    $region25: #{tpu_custom_call.1} parent=1 // pred_fallthru
      _
    // Predicated region
    $region26: #{tpu_custom_call.1} parent=1 // pred_check
      _
    $region27: #{tpu_custom_call.1} parent=1 // pred_check_branch
      %48 = sbr.rel (0) target = $region29
    $region28: #{tpu_custom_call.1} parent=1 // pred_region
      _
    $region29: #{tpu_custom_call.1} parent=1 // pred_fallthru
      _
    // Predicated region
    $region30: #{tpu_custom_call.1} parent=1 // pred_check
      _
    $region31: #{tpu_custom_call.1} parent=1 // pred_check_branch
      %50 = sbr.rel (0) target = $region33
    $region32: #{tpu_custom_call.1} parent=1 // pred_region
      _
    $region33: #{tpu_custom_call.1} parent=1 // pred_fallthru
      _
    // Predicated region
    $region34: #{tpu_custom_call.1} parent=1 // pred_check
      _
    $region35: #{tpu_custom_call.1} parent=1 // pred_check_branch
      %52 = sbr.rel (0) target = $region37
    $region36: #{tpu_custom_call.1} parent=1 // pred_region
      _
    $region37: #{tpu_custom_call.1} parent=1 // pred_fallthru
      _
    // Predicated region
    $region38: #{tpu_custom_call.1} parent=1 // pred_check
      _
    $region39: #{tpu_custom_call.1} parent=1 // pred_check_branch
      %54 = sbr.rel (0) target = $region41
    $region40: #{tpu_custom_call.1} parent=1 // pred_region
      _
    $region41: #{tpu_custom_call.1} parent=1 // pred_fallthru
      _
    // Predicated region
    $region42: #{tpu_custom_call.1} parent=1 // pred_check
      _
    $region43: #{tpu_custom_call.1} parent=1 // pred_check_branch
      %56 = sbr.rel (0) target = $region45
    $region44: #{tpu_custom_call.1} parent=1 // pred_region
      _
    $region45: #{tpu_custom_call.1} parent=1 // pred_fallthru
      _
    // Predicated region
    $region46: #{tpu_custom_call.1} parent=1 // pred_check
      _
    $region47: #{tpu_custom_call.1} parent=1 // pred_check_branch
      %58 = sbr.rel (0) target = $region49
    $region48: #{tpu_custom_call.1} parent=1 // pred_region
      _
    $region49: #{tpu_custom_call.1} parent=1 // pred_fallthru
      _
    // Predicated region
    $region50: #{tpu_custom_call.1} parent=1 // pred_check
      _
    $region51: #{tpu_custom_call.1} parent=1 // pred_check_branch
      %60 = sbr.rel (0) target = $region53
    $region52: #{tpu_custom_call.1} parent=1 // pred_region
      _
    $region53: #{tpu_custom_call.1} parent=1 // pred_fallthru
      _
    // Predicated region
    $region54: #{tpu_custom_call.1} parent=1 // pred_check
      _
    $region55: #{tpu_custom_call.1} parent=1 // pred_check_branch
      %62 = sbr.rel (0) target = $region57
    $region56: #{tpu_custom_call.1} parent=1 // pred_region
      _
    $region57: #{tpu_custom_call.1} parent=1 // pred_fallthru
      _
    // Predicated region
    $region58: #{tpu_custom_call.1} parent=1 // pred_check
      _
    $region59: #{tpu_custom_call.1} parent=1 // pred_check_branch
      %64 = sbr.rel (0) target = $region61
    $region60: #{tpu_custom_call.1} parent=1 // pred_region
      _
    $region61: #{tpu_custom_call.1} parent=1 // pred_fallthru
      _
    // Predicated region
    $region62: #{tpu_custom_call.1} parent=1 // pred_check
      _
    $region63: #{tpu_custom_call.1} parent=1 // pred_check_branch
      %66 = sbr.rel (0) target = $region65
    $region64: #{tpu_custom_call.1} parent=1 // pred_region
      _
    $region65: #{tpu_custom_call.1} parent=1 // pred_fallthru
      _
    // Predicated region
    $region66: #{tpu_custom_call.1} parent=1 // pred_check
      _
    $region67: #{tpu_custom_call.1} parent=1 // pred_check_branch
      %68 = sbr.rel (0) target = $region69
    $region68: #{tpu_custom_call.1} parent=1 // pred_region
      _
    $region69: #{tpu_custom_call.1} parent=1 // pred_fallthru
      _
    // Predicated region
    $region70: #{tpu_custom_call.1} parent=1 // pred_check
      _
    $region71: #{tpu_custom_call.1} parent=1 // pred_check_branch
      %70 = sbr.rel (0) target = $region73
    $region72: #{tpu_custom_call.1} parent=1 // pred_region
      _
    $region73: #{tpu_custom_call.1} parent=1 // pred_fallthru
      _
    // Predicated region
    $region74: #{tpu_custom_call.1} parent=1 // pred_check
      _
    $region75: #{tpu_custom_call.1} parent=1 // pred_check_branch
      %72 = sbr.rel (0) target = $region77
    $region76: #{tpu_custom_call.1} parent=1 // pred_region
      _
    $region77: #{tpu_custom_call.1} parent=1 // pred_fallthru
      _
    // Predicated region
    $region78: #{tpu_custom_call.1} parent=1 // pred_check
      _
    $region79: #{tpu_custom_call.1} parent=1 // pred_check_branch
      %74 = sbr.rel (0) target = $region81
    $region80: #{tpu_custom_call.1} parent=1 // pred_region
      _
    $region81: #{tpu_custom_call.1} parent=1 // pred_fallthru
      _
    // Predicated region
    $region82: #{tpu_custom_call.1} parent=1 // pred_check
      _
    $region83: #{tpu_custom_call.1} parent=1 // pred_check_branch
      %76 = sbr.rel (0) target = $region85
    $region84: #{tpu_custom_call.1} parent=1 // pred_region
      _
    $region85: #{tpu_custom_call.1} parent=1 // pred_fallthru
      _
    // Predicated region
    $region86: #{tpu_custom_call.1} parent=1 // pred_check
      _
    $region87: #{tpu_custom_call.1} parent=1 // pred_check_branch
      %78 = sbr.rel (0) target = $region89
    $region88: #{tpu_custom_call.1} parent=1 // pred_region
      _
    $region89: #{tpu_custom_call.1} parent=1 // pred_fallthru
      _
    // Predicated region
    $region90: #{tpu_custom_call.1} parent=1 // pred_check
      _
    $region91: #{tpu_custom_call.1} parent=1 // pred_check_branch
      %80 = sbr.rel (0) target = $region93
    $region92: #{tpu_custom_call.1} parent=1 // pred_region
      _
    $region93: #{tpu_custom_call.1} parent=1 // pred_fallthru
      _
    %v82 = vld [vmem:[%s0] sm:$0xff]
    %v83 = vld [vmem:[%s0 + $0x8] sm:$0xff]
    %v84 = vld [vmem:[%s0 + $0x10] sm:$0xff]
    %v85 = vld [vmem:[%s0 + $0x18] sm:$0x3]
    %v86 = vld [vmem:[%s2] sm:$0xf]
    %v87 = vld [vmem:[%s2 + $0x4] sm:$0xf]
    %v88 = vld [vmem:[%s2 + $0x8] sm:$0xf]
    %v89 = vld [vmem:[%s2 + $0xc] sm:$0xf]
    %v90 = vpack.c.bf16 %v83, %v82
    %v91 = vpack.c.bf16 %v85, %v84
    %v92 = vld [vmem:[%s3] sm:$0x1]
    %v94 = vperm.slane %v92, 0
    %v100 = vunpack.c.l.b16 %v86
    %v101 = vunpack.c.l.b16 %v87
    %v102 = vunpack.c.l.b16 %v88
    %v103 = vunpack.c.l.b16 %v89
    %v104 = vpack.c.b16 %v101, %v100
    %v105 = vpack.c.b16 %v103, %v102
    %vm108 = vcmask 261120
    %v110 = vsel %vm108, %v90, 0
    %v113 = vsel %vm108, %v91, 0
    %115 = vmatpush.bf16.msra.mxu0 0
    %116 = vmatpush.bf16.msra.mxu0 0
    %117 = vmatpush.bf16.msra.mxu0 0
    %118 = vmatpush.bf16.msra.mxu0 0
    %119 = vmatpush.bf16.msra.mxu0 0
    %120 = vmatpush.bf16.msra.mxu0 0
    %121 = vmatpush.bf16.msra.mxu0 %v105
    %122 = vmatpush.bf16.msra.mxu0 %v104
    %123 = vmatmul.bf16.gmra.mxu0 %v110
    %v124 = vpop.f32.mrf.mxu0
    %v125 = vadd.f32 %v94, %v124
    %v126 = vpop.f32.mrf.mxu0
    %v127 = vadd.f32 %v94, %v126
    %128 = vmatmul.bf16.gmra.mxu0 %v113
    %v129 = vpop.f32.mrf.mxu0
    %v130 = vadd.f32 %v94, %v129
    %v131 = vpop.f32.mrf.mxu0
    %v132 = vadd.f32 %v94, %v131
    %133 = vdwg.mxu0
    %v134 = vmul.f32 %v125, 5.656854
    %v135 = vmul.f32 %v127, 5.656854
    %v136 = vmul.f32 %v130, 5.656854
    %v137 = vmul.f32 %v132, 5.656854
    %v138 = vld [vmem:[%s4] sm:$0xff]
    %v139 = vld [vmem:[%s4 + $0x8] sm:$0xff]
    %v140 = vld [vmem:[%s4 + $0x10] sm:$0xff]
    %v141 = vld [vmem:[%s4 + $0x18] sm:$0x3]
    %v142 = vadd.f32 %v134, %v138
    %v143 = vadd.f32 %v135, %v139
    %v144 = vadd.f32 %v136, %v140
    %v145 = vadd.f32 %v137, %v141
    %v146 = vpack.c.bf16 %v143, %v142
    %v147 = vpack.c.bf16 %v145, %v144
    %v148 = vld [vmem:[%s5] sm:$0xf]
    %v149 = vld [vmem:[%s5 + $0x4] sm:$0xf]
    %v150 = vld [vmem:[%s5 + $0x8] sm:$0xf]
    %v151 = vld [vmem:[%s5 + $0xc] sm:$0xf]
    %v152 = vld [vmem:[%s6] sm:$0x1]
    %v154 = vperm.slane %v152, 0
    %v160 = vunpack.c.l.b16 %v148
    %v161 = vunpack.c.l.b16 %v149
    %v162 = vunpack.c.l.b16 %v150
    %v163 = vunpack.c.l.b16 %v151
    %v164 = vpack.c.b16 %v161, %v160
    %v165 = vpack.c.b16 %v163, %v162
    %v169 = vsel %vm108, %v146, 0
    %v172 = vsel %vm108, %v147, 0
    %174 = vmatpush.bf16.msra.mxu0 0
    %175 = vmatpush.bf16.msra.mxu0 0
    %176 = vmatpush.bf16.msra.mxu0 0
    %177 = vmatpush.bf16.msra.mxu0 0
    %178 = vmatpush.bf16.msra.mxu0 0
    %179 = vmatpush.bf16.msra.mxu0 0
    %180 = vmatpush.bf16.msra.mxu0 %v165
    %181 = vmatpush.bf16.msra.mxu0 %v164
    %182 = vmatmul.bf16.gmra.mxu0 %v169
    %v183 = vpop.f32.mrf.mxu0
    %v184 = vadd.f32 %v154, %v183
    %v185 = vpop.f32.mrf.mxu0
    %v186 = vadd.f32 %v154, %v185
    %187 = vmatmul.bf16.gmra.mxu0 %v172
    %v188 = vpop.f32.mrf.mxu0
    %v189 = vadd.f32 %v154, %v188
    %v190 = vpop.f32.mrf.mxu0
    %v191 = vadd.f32 %v154, %v190
    %192 = vdwg.mxu0
    %v197 = vrot.slane %v184, 1
    %v198 = vrot.slane %v184, 2
    %v199 = vrot.slane %v184, 3
    %v200 = vrot.slane %v184, 4
    %v201 = vrot.slane %v184, 5
    %v202 = vrot.slane %v184, 6
    %v203 = vrot.slane %v184, 7
    %v204 = vrot.slane %v186, 1
    %v205 = vrot.slane %v186, 2
    %v206 = vrot.slane %v186, 3
    %v207 = vrot.slane %v186, 4
    %v208 = vrot.slane %v186, 5
    %v209 = vrot.slane %v186, 6
    %v210 = vrot.slane %v186, 7
    %v211 = vrot.slane %v189, 1
    %v212 = vrot.slane %v189, 2
    %v213 = vrot.slane %v189, 3
    %v214 = vrot.slane %v189, 4
    %v215 = vrot.slane %v189, 5
    %v216 = vrot.slane %v189, 6
    %v217 = vrot.slane %v189, 7
    %v218 = vrot.slane %v191, 1
    %v219 = vld [vmem:[%s7] sm:$0xf]
    %v220 = vld [vmem:[%s7 + $0x4] sm:$0xf]
    %v221 = vld [vmem:[%s7 + $0x8] sm:$0xf]
    %v222 = vld [vmem:[%s7 + $0xc] sm:$0xf]
    %v223 = vld [vmem:[%s8] sm:$0x1]
    %v225 = vperm.slane %v223, 0
    %v231 = vunpack.c.l.b16 %v219
    %v232 = vunpack.c.l.b16 %v220
    %v233 = vunpack.c.l.b16 %v221
    %v234 = vunpack.c.l.b16 %v222
    %v235 = vpack.c.b16 %v232, %v231
    %v236 = vpack.c.b16 %v234, %v233
    %239 = vmatpush.bf16.msra.mxu0 0
    %240 = vmatpush.bf16.msra.mxu0 0
    %241 = vmatpush.bf16.msra.mxu0 0
    %242 = vmatpush.bf16.msra.mxu0 0
    %243 = vmatpush.bf16.msra.mxu0 0
    %244 = vmatpush.bf16.msra.mxu0 0
    %245 = vmatpush.bf16.msra.mxu0 %v236
    %246 = vmatpush.bf16.msra.mxu0 %v235
    %247 = vmatmul.bf16.gmra.mxu0 %v169
    %v248 = vpop.f32.mrf.mxu0
    %v249 = vadd.f32 %v225, %v248
    %v250 = vpop.f32.mrf.mxu0
    %v251 = vadd.f32 %v225, %v250
    %252 = vmatmul.bf16.gmra.mxu0 %v172
    %v253 = vpop.f32.mrf.mxu0
    %v254 = vadd.f32 %v225, %v253
    %v255 = vpop.f32.mrf.mxu0
    %v256 = vadd.f32 %v225, %v255
    %257 = vdwg.mxu0
    %v262 = vrot.slane %v249, 1
    %v263 = vrot.slane %v249, 2
    %v264 = vrot.slane %v249, 3
    %v265 = vrot.slane %v249, 4
    %v266 = vrot.slane %v249, 5
    %v267 = vrot.slane %v249, 6
    %v268 = vrot.slane %v249, 7
    %v269 = vrot.slane %v251, 1
    %v270 = vrot.slane %v251, 2
    %v271 = vrot.slane %v251, 3
    %v272 = vrot.slane %v251, 4
    %v273 = vrot.slane %v251, 5
    %v274 = vrot.slane %v251, 6
    %v275 = vrot.slane %v251, 7
    %v276 = vrot.slane %v254, 1
    %v277 = vrot.slane %v254, 2
    %v278 = vrot.slane %v254, 3
    %v279 = vrot.slane %v254, 4
    %v280 = vrot.slane %v254, 5
    %v281 = vrot.slane %v254, 6
    %v282 = vrot.slane %v254, 7
    %v283 = vrot.slane %v256, 1
    %v284 = vld [vmem:[%s9] sm:$0xf]
    %v285 = vld [vmem:[%s9 + $0x4] sm:$0xf]
    %v286 = vld [vmem:[%s9 + $0x8] sm:$0xf]
    %v287 = vld [vmem:[%s9 + $0xc] sm:$0xf]
    %v288 = vld [vmem:[%s10] sm:$0x1]
    %v290 = vperm.slane %v288, 0
    %v296 = vunpack.c.l.b16 %v284
    %v297 = vunpack.c.l.b16 %v285
    %v298 = vunpack.c.l.b16 %v286
    %v299 = vunpack.c.l.b16 %v287
    %v300 = vpack.c.b16 %v297, %v296
    %v301 = vpack.c.b16 %v299, %v298
    %304 = vmatpush.bf16.msra.mxu0 0
    %305 = vmatpush.bf16.msra.mxu0 0
    %306 = vmatpush.bf16.msra.mxu0 0
    %307 = vmatpush.bf16.msra.mxu0 0
    %308 = vmatpush.bf16.msra.mxu0 0
    %309 = vmatpush.bf16.msra.mxu0 0
    %310 = vmatpush.bf16.msra.mxu0 %v301
    %311 = vmatpush.bf16.msra.mxu0 %v300
    %312 = vmatmul.bf16.gmra.mxu0 %v169
    %v313 = vpop.f32.mrf.mxu0
    %v314 = vadd.f32 %v290, %v313
    %v315 = vpop.f32.mrf.mxu0
    %v316 = vadd.f32 %v290, %v315
    %317 = vmatmul.bf16.gmra.mxu0 %v172
    %v318 = vpop.f32.mrf.mxu0
    %v319 = vadd.f32 %v290, %v318
    %v320 = vpop.f32.mrf.mxu0
    %v321 = vadd.f32 %v290, %v320
    %322 = vdwg.mxu0
    %v323 = vpack.c.bf16 %v314, %v314
    %v324 = vpack.c.bf16 %v316, %v316
    %v325 = vpack.c.bf16 %v319, %v319
    %v326 = vpack.c.bf16 %v321, %v321
    %v331 = vrot.slane %v323, 3
    %v332 = vrot.slane %v324, 3
    %v333 = vrot.slane %v325, 3
    %v334 = vrot.slane %v326, 3
    %vm335 = vcmask 1040384
    %v338 = vsel %vm335, %v323, %v331
    %vm340 = vcmask 1041409
    %v341 = vsel %vm340, %v323, %v331
    %v343 = vrot.slane %v341, 1
    %vm344 = vcmask 1042434
    %v345 = vsel %vm344, %v323, %v331
    %v347 = vrot.slane %v345, 2
    %vm348 = vcmask 1043459
    %v349 = vsel %vm348, %v323, %v331
    %v351 = vrot.slane %v349, 3
    %v354 = vsel %vm335, %v324, %v332
    %v356 = vsel %vm340, %v324, %v332
    %v358 = vrot.slane %v356, 1
    %v359 = vsel %vm344, %v324, %v332
    %v361 = vrot.slane %v359, 2
    %v362 = vsel %vm348, %v324, %v332
    %v364 = vrot.slane %v362, 3
    %v367 = vsel %vm335, %v325, %v333
    %v369 = vsel %vm340, %v325, %v333
    %v371 = vrot.slane %v369, 1
    %v372 = vsel %vm344, %v325, %v333
    %v374 = vrot.slane %v372, 2
    %v375 = vsel %vm348, %v325, %v333
    %v377 = vrot.slane %v375, 3
    %v380 = vsel %vm335, %v326, %v334
    %v382 = vunpack.i.l.s16 %v338
    %v383 = vunpack.i.h.s16 %v338
    %v384 = vunpack.i.l.s16 %v343
    %v385 = vunpack.i.h.s16 %v343
    %v386 = vunpack.i.l.s16 %v347
    %v387 = vunpack.i.h.s16 %v347
    %v388 = vunpack.i.l.s16 %v351
    %v389 = vunpack.i.h.s16 %v351
    %v390 = vunpack.i.l.s16 %v354
    %v391 = vunpack.i.h.s16 %v354
    %v392 = vunpack.i.l.s16 %v358
    %v393 = vunpack.i.h.s16 %v358
    %v394 = vunpack.i.l.s16 %v361
    %v395 = vunpack.i.h.s16 %v361
    %v396 = vunpack.i.l.s16 %v364
    %v397 = vunpack.i.h.s16 %v364
    %v398 = vunpack.i.l.s16 %v367
    %v399 = vunpack.i.h.s16 %v367
    %v400 = vunpack.i.l.s16 %v371
    %v401 = vunpack.i.h.s16 %v371
    %v402 = vunpack.i.l.s16 %v374
    %v403 = vunpack.i.h.s16 %v374
    %v404 = vunpack.i.l.s16 %v377
    %v405 = vunpack.i.h.s16 %v377
    %v406 = vunpack.i.l.s16 %v380
    %v407 = vunpack.i.h.s16 %v380
    %408 = vst [vmem:[#allocation1] ss:$9 sm:$0xff] %v184
    %s409 = scalar_lea.vmem [#allocation1], 1
    %410 = vst [vmem:[%s409] ss:$9 sm:$0xff] %v197
    %s411 = scalar_lea.vmem [#allocation1], 2
    %412 = vst [vmem:[%s411] ss:$9 sm:$0xff] %v198
    %s413 = scalar_lea.vmem [#allocation1], 3
    %414 = vst [vmem:[%s413] ss:$9 sm:$0xff] %v199
    %s415 = scalar_lea.vmem [#allocation1], 4
    %416 = vst [vmem:[%s415] ss:$9 sm:$0xff] %v200
    %s417 = scalar_lea.vmem [#allocation1], 5
    %418 = vst [vmem:[%s417] ss:$9 sm:$0xff] %v201
    %s419 = scalar_lea.vmem [#allocation1], 6
    %420 = vst [vmem:[%s419] ss:$9 sm:$0xff] %v202
    %s421 = scalar_lea.vmem [#allocation1], 7
    %422 = vst [vmem:[%s421] ss:$9 sm:$0xff] %v203
    %v423 = vld [vmem:[#allocation1] sm:$0xff]
    %424 = vst [vmem:[#allocation1] ss:$9 sm:$0xff] %v186
    %425 = vst [vmem:[%s409] ss:$9 sm:$0xff] %v204
    %426 = vst [vmem:[%s411] ss:$9 sm:$0xff] %v205
    %427 = vst [vmem:[%s413] ss:$9 sm:$0xff] %v206
    %428 = vst [vmem:[%s415] ss:$9 sm:$0xff] %v207
    %v429 = vld [vmem:[#allocation1] sm:$0xff]
    %430 = vst [vmem:[#allocation1] ss:$9 sm:$0xff] %v208
    %431 = vst [vmem:[%s409] ss:$9 sm:$0xff] %v209
    %432 = vst [vmem:[%s411] ss:$9 sm:$0xff] %v210
    %433 = vst [vmem:[%s413] ss:$9 sm:$0xff] %v189
    %434 = vst [vmem:[%s415] ss:$9 sm:$0xff] %v211
    %435 = vst [vmem:[%s417] ss:$9 sm:$0xff] %v212
    %436 = vst [vmem:[%s419] ss:$9 sm:$0xff] %v213
    %437 = vst [vmem:[%s421] ss:$9 sm:$0xff] %v214
    %v438 = vld [vmem:[#allocation1] sm:$0xff]
    %439 = vst [vmem:[#allocation1] ss:$9 sm:$0xff] %v215
    %440 = vst [vmem:[%s409] ss:$9 sm:$0xff] %v216
    %441 = vst [vmem:[%s411] ss:$9 sm:$0xff] %v217
    %442 = vst [vmem:[%s413] ss:$9 sm:$0xff] %v191
    %443 = vst [vmem:[%s415] ss:$9 sm:$0xff] %v218
    %v444 = vld [vmem:[#allocation1] sm:$0xff]
    %v449 = vpack.c.bf16 %v423, %v423
    %v450 = vpack.c.bf16 %v429, %v429
    %v451 = vpack.c.bf16 %v438, %v438
    %v452 = vpack.c.bf16 %v444, %v444
    %453 = vst [vmem:[#allocation1] ss:$9 sm:$0xff] %v249
    %s454 = scalar_lea.vmem [#allocation1], 1
    %455 = vst [vmem:[%s454] ss:$9 sm:$0xff] %v262
    %s456 = scalar_lea.vmem [#allocation1], 2
    %457 = vst [vmem:[%s456] ss:$9 sm:$0xff] %v263
    %s458 = scalar_lea.vmem [#allocation1], 3
    %459 = vst [vmem:[%s458] ss:$9 sm:$0xff] %v264
    %s460 = scalar_lea.vmem [#allocation1], 4
    %461 = vst [vmem:[%s460] ss:$9 sm:$0xff] %v265
    %s462 = scalar_lea.vmem [#allocation1], 5
    %463 = vst [vmem:[%s462] ss:$9 sm:$0xff] %v266
    %s464 = scalar_lea.vmem [#allocation1], 6
    %465 = vst [vmem:[%s464] ss:$9 sm:$0xff] %v267
    %s466 = scalar_lea.vmem [#allocation1], 7
    %467 = vst [vmem:[%s466] ss:$9 sm:$0xff] %v268
    %v468 = vld [vmem:[#allocation1] sm:$0xff]
    %469 = vst [vmem:[#allocation1] ss:$9 sm:$0xff] %v251
    %470 = vst [vmem:[%s454] ss:$9 sm:$0xff] %v269
    %471 = vst [vmem:[%s456] ss:$9 sm:$0xff] %v270
    %472 = vst [vmem:[%s458] ss:$9 sm:$0xff] %v271
    %473 = vst [vmem:[%s460] ss:$9 sm:$0xff] %v272
    %v474 = vld [vmem:[#allocation1] sm:$0xff]
    %475 = vst [vmem:[#allocation1] ss:$9 sm:$0xff] %v273
    %476 = vst [vmem:[%s454] ss:$9 sm:$0xff] %v274
    %477 = vst [vmem:[%s456] ss:$9 sm:$0xff] %v275
    %478 = vst [vmem:[%s458] ss:$9 sm:$0xff] %v254
    %479 = vst [vmem:[%s460] ss:$9 sm:$0xff] %v276
    %480 = vst [vmem:[%s462] ss:$9 sm:$0xff] %v277
    %481 = vst [vmem:[%s464] ss:$9 sm:$0xff] %v278
    %482 = vst [vmem:[%s466] ss:$9 sm:$0xff] %v279
    %v483 = vld [vmem:[#allocation1] sm:$0xff]
    %484 = vst [vmem:[#allocation1] ss:$9 sm:$0xff] %v280
    %485 = vst [vmem:[%s454] ss:$9 sm:$0xff] %v281
    %486 = vst [vmem:[%s456] ss:$9 sm:$0xff] %v282
    %487 = vst [vmem:[%s458] ss:$9 sm:$0xff] %v256
    %488 = vst [vmem:[%s460] ss:$9 sm:$0xff] %v283
    %v489 = vld [vmem:[#allocation1] sm:$0xff]
    %v494 = vpack.c.bf16 %v468, %v468
    %v495 = vpack.c.bf16 %v474, %v474
    %v496 = vpack.c.bf16 %v483, %v483
    %v497 = vpack.c.bf16 %v489, %v489
    %v500 = vunpack.c.l.b16 %v449
    %v501 = vunpack.c.l.b16 %v450
    %v502 = vpack.c.b16 %v501, %v500
    %v505 = vunpack.c.l.b16 %v494
    %v506 = vunpack.c.l.b16 %v495
    %v507 = vpack.c.b16 %v506, %v505
    %vm508 = vcmask 130048
    %v510 = vsel %vm508, %v502, 0
    %v513 = vsel %vm508, %v507, 0
    %515 = vmatpush.bf16.xpose.msra.mxu0 0
    %516 = vmatpush.bf16.xpose.msra.mxu0 0
    %517 = vmatpush.bf16.xpose.msra.mxu0 0
    %518 = vmatpush.bf16.xpose.msra.mxu0 0
    %519 = vmatpush.bf16.xpose.msra.mxu0 0
    %520 = vmatpush.bf16.xpose.msra.mxu0 0
    %521 = vmatpush.bf16.xpose.msra.mxu0 0
    %522 = vmatpush.bf16.xpose.msra.mxu0 %v513
    %523 = vmatmul.bf16.gmra.mxu0 %v510
    %v524 = vpop.f32.mrf.mxu0
    %v525 = vadd.f32 0.0, %v524
    %v526 = vpop.f32.mrf.mxu0
    %v527 = vadd.f32 0.0, %v526
    %528 = vdwg.mxu0
    %v531 = vunpack.c.l.b16 %v451
    %v532 = vunpack.c.l.b16 %v452
    %v533 = vpack.c.b16 %v532, %v531
    %v536 = vunpack.c.l.b16 %v496
    %v537 = vunpack.c.l.b16 %v497
    %v538 = vpack.c.b16 %v537, %v536
    %v540 = vsel %vm508, %v533, 0
    %v543 = vsel %vm508, %v538, 0
    %545 = vmatpush.bf16.xpose.msra.mxu0 0
    %546 = vmatpush.bf16.xpose.msra.mxu0 0
    %547 = vmatpush.bf16.xpose.msra.mxu0 0
    %548 = vmatpush.bf16.xpose.msra.mxu0 0
    %549 = vmatpush.bf16.xpose.msra.mxu0 0
    %550 = vmatpush.bf16.xpose.msra.mxu0 0
    %551 = vmatpush.bf16.xpose.msra.mxu0 0
    %552 = vmatpush.bf16.xpose.msra.mxu0 %v543
    %553 = vmatmul.bf16.gmra.mxu0 %v540
    %v554 = vpop.f32.mrf.mxu0
    %v555 = vadd.f32 0.0, %v554
    %v556 = vpop.f32.mrf.mxu0
    %v557 = vadd.f32 0.0, %v556
    %558 = vdwg.mxu0
    %v559 = vmul.f32 %v525, 0.25
    %v560 = vmul.f32 %v527, 0.25
    %v561 = vmul.f32 %v555, 0.25
    %v562 = vmul.f32 %v557, 0.25
    %vm563 = vcmask 105472
    %v564 = vsel %vm563, %v559, -inf
    %565 = vmax.xlane.f32.xlu0 %v564
    %v566 = vpop.xlane.xlu0 %565
    %vm567 = vcmask 102400
    %v568 = vsel %vm567, %v560, -inf
    %569 = vmax.xlane.f32.xlu0 %v568
    %v570 = vpop.xlane.xlu0 %569
    %v571 = vsel %vm563, %v561, -inf
    %572 = vmax.xlane.f32.xlu0 %v571
    %v573 = vpop.xlane.xlu0 %572
    %v574 = vsel %vm567, %v562, -inf
    %575 = vmax.xlane.f32.xlu0 %v574
    %v576 = vpop.xlane.xlu0 %575
    %v577 = vsub.f32 %v559, %v566
    %v578 = vsub.f32 %v560, %v570
    %v579 = vsub.f32 %v561, %v573
    %v580 = vsub.f32 %v562, %v576
    %v581 = vmul.f32 %v577, 1.442695
    %v582 = vpow.pop %v581
    %v583 = vmul.f32 %v578, 1.442695
    %v584 = vpow.pop %v583
    %v585 = vmul.f32 %v579, 1.442695
    %v586 = vpow.pop %v585
    %v587 = vmul.f32 %v580, 1.442695
    %v588 = vpow.pop %v587
    %v589 = vsel %vm563, %v582, 0.0
    %590 = vadd.xlane.f32.xlu0 %v589
    %v591 = vpop.xlane.xlu0 %590
    %v592 = vsel %vm567, %v584, 0.0
    %593 = vadd.xlane.f32.xlu0 %v592
    %v594 = vpop.xlane.xlu0 %593
    %v595 = vsel %vm563, %v586, 0.0
    %596 = vadd.xlane.f32.xlu0 %v595
    %v597 = vpop.xlane.xlu0 %596
    %v598 = vsel %vm567, %v588, 0.0
    %599 = vadd.xlane.f32.xlu0 %v598
    %v600 = vpop.xlane.xlu0 %599
    %v601 = vrcp.pop %v591
    %v602 = vrcp.pop %v594
    %v603 = vrcp.pop %v597
    %v604 = vrcp.pop %v600
    %v605 = vmul.f32 %v582, %v601
    %v606 = vmul.f32 %v584, %v602
    %v607 = vmul.f32 %v586, %v603
    %v608 = vmul.f32 %v588, %v604
    %v609 = vpack.c.bf16 %v605, %v605
    %v610 = vpack.c.bf16 %v606, %v606
    %v611 = vpack.c.bf16 %v607, %v607
    %v612 = vpack.c.bf16 %v608, %v608
    %v615 = vunpack.c.l.b16 %v609
    %v616 = vunpack.c.l.b16 %v610
    %v617 = vpack.c.b16 %v616, %v615
    %v618 = vpack.i.b16 %v383, %v382
    %v619 = vpack.i.b16 %v385, %v384
    %v620 = vpack.i.b16 %v387, %v386
    %v621 = vpack.i.b16 %v389, %v388
    %v622 = vpack.i.b16 %v391, %v390
    %v623 = vpack.i.b16 %v393, %v392
    %626 = vst [vmem:[#allocation1] ss:$9 sm:$0xff] %v618
    %s628 = scalar_lea.vmem [#allocation1], 1
    %629 = vst [vmem:[%s628] ss:$9 sm:$0xff] %v619
    %s631 = scalar_lea.vmem [#allocation1], 2
    %632 = vst [vmem:[%s631] ss:$9 sm:$0xff] %v620
    %s634 = scalar_lea.vmem [#allocation1], 3
    %635 = vst [vmem:[%s634] ss:$9 sm:$0xff] %v621
    %s637 = scalar_lea.vmem [#allocation1], 4
    %638 = vst [vmem:[%s637] ss:$9 sm:$0xff] %v622
    %s640 = scalar_lea.vmem [#allocation1], 5
    %641 = vst [vmem:[%s640] ss:$9 sm:$0xff] %v623
    %s643 = scalar_lea.vmem [#allocation1], 6
    %644 = vst [vmem:[%s643] ss:$9 sm:$0xff] %v394
    %v645 = vld [vmem:[#allocation1] sm:$0xff]
    %v647 = vsel %vm563, %v617, 0
    %vm649 = vcmask 1045504
    %vm650 = vcmask 1046528
    %v651 = vsel %vm649, 4294967295, 65535
    %v652 = vsel %vm650, %v651, 0
    %v653 = vand.u32 %v645, %v652
    %655 = vmatpush.bf16.msra.mxu0 0
    %656 = vmatpush.bf16.msra.mxu0 0
    %657 = vmatpush.bf16.msra.mxu0 0
    %658 = vmatpush.bf16.msra.mxu0 0
    %659 = vmatpush.bf16.msra.mxu0 0
    %660 = vmatpush.bf16.msra.mxu0 0
    %661 = vmatpush.bf16.msra.mxu0 0
    %662 = vmatpush.bf16.msra.mxu0 %v653
    %663 = vmatmul.bf16.gmra.mxu0 %v647
    %v664 = vpop.f32.mrf.mxu0
    %v665 = vadd.f32 0.0, %v664
    %v666 = vpop.f32.mrf.mxu0
    %v667 = vadd.f32 0.0, %v666
    %668 = vdwg.mxu0
    %v671 = vunpack.c.l.b16 %v611
    %v672 = vunpack.c.l.b16 %v612
    %v673 = vpack.c.b16 %v672, %v671
    %v674 = vpack.i.b16 %v396, %v395
    %v675 = vpack.i.b16 %v398, %v397
    %v676 = vpack.i.b16 %v400, %v399
    %v677 = vpack.i.b16 %v402, %v401
    %v678 = vpack.i.b16 %v404, %v403
    %v679 = vpack.i.b16 %v406, %v405
    %682 = vst [vmem:[#allocation1] ss:$9 sm:$0xff] %v674
    %s684 = scalar_lea.vmem [#allocation1], 1
    %685 = vst [vmem:[%s684] ss:$9 sm:$0xff] %v675
    %s687 = scalar_lea.vmem [#allocation1], 2
    %688 = vst [vmem:[%s687] ss:$9 sm:$0xff] %v676
    %s690 = scalar_lea.vmem [#allocation1], 3
    %691 = vst [vmem:[%s690] ss:$9 sm:$0xff] %v677
    %s693 = scalar_lea.vmem [#allocation1], 4
    %694 = vst [vmem:[%s693] ss:$9 sm:$0xff] %v678
    %s696 = scalar_lea.vmem [#allocation1], 5
    %697 = vst [vmem:[%s696] ss:$9 sm:$0xff] %v679
    %s699 = scalar_lea.vmem [#allocation1], 6
    %700 = vst [vmem:[%s699] ss:$9 sm:$0xff] %v407
    %v701 = vld [vmem:[#allocation1] sm:$0xff]
    %v703 = vsel %vm563, %v673, 0
    %v705 = vand.u32 %v701, %v652
    %707 = vmatpush.bf16.msra.mxu0 0
    %708 = vmatpush.bf16.msra.mxu0 0
    %709 = vmatpush.bf16.msra.mxu0 0
    %710 = vmatpush.bf16.msra.mxu0 0
    %711 = vmatpush.bf16.msra.mxu0 0
    %712 = vmatpush.bf16.msra.mxu0 0
    %713 = vmatpush.bf16.msra.mxu0 0
    %714 = vmatpush.bf16.msra.mxu0 %v705
    %715 = vmatmul.bf16.gmra.mxu0 %v703
    %v716 = vpop.f32.mrf.mxu0
    %v717 = vadd.f32 0.0, %v716
    %v718 = vpop.f32.mrf.mxu0
    %v719 = vadd.f32 0.0, %v718
    %720 = vdwg.mxu0
    %v725 = vrot.slane %v665, 1
    %v726 = vrot.slane %v665, 2
    %v727 = vrot.slane %v665, 3
    %v728 = vrot.slane %v665, 4
    %v729 = vrot.slane %v665, 5
    %v730 = vrot.slane %v665, 6
    %v731 = vrot.slane %v665, 7
    %v732 = vrot.slane %v667, 1
    %v733 = vrot.slane %v667, 2
    %v734 = vrot.slane %v667, 3
    %v735 = vrot.slane %v667, 4
    %v736 = vrot.slane %v717, 1
    %v737 = vrot.slane %v717, 2
    %v738 = vrot.slane %v717, 3
    %v739 = vrot.slane %v717, 4
    %v740 = vrot.slane %v717, 5
    %v741 = vrot.slane %v717, 6
    %v742 = vrot.slane %v717, 7
    %v743 = vrot.slane %v719, 1
    %v744 = vrot.slane %v719, 2
    %v745 = vrot.slane %v719, 3
    %v746 = vrot.slane %v719, 4
    %747 = vst [vmem:[#allocation1] ss:$9 sm:$0xff] %v665
    %s748 = scalar_lea.vmem [#allocation1], 1
    %749 = vst [vmem:[%s748] ss:$9 sm:$0xff] %v725
    %s750 = scalar_lea.vmem [#allocation1], 2
    %751 = vst [vmem:[%s750] ss:$9 sm:$0xff] %v726
    %s752 = scalar_lea.vmem [#allocation1], 3
    %753 = vst [vmem:[%s752] ss:$9 sm:$0xff] %v727
    %s754 = scalar_lea.vmem [#allocation1], 4
    %755 = vst [vmem:[%s754] ss:$9 sm:$0xff] %v728
    %s756 = scalar_lea.vmem [#allocation1], 5
    %757 = vst [vmem:[%s756] ss:$9 sm:$0xff] %v729
    %s758 = scalar_lea.vmem [#allocation1], 6
    %759 = vst [vmem:[%s758] ss:$9 sm:$0xff] %v730
    %s760 = scalar_lea.vmem [#allocation1], 7
    %761 = vst [vmem:[%s760] ss:$9 sm:$0xff] %v731
    %v762 = vld [vmem:[#allocation1] sm:$0xff]
    %763 = vst [vmem:[#allocation1] ss:$9 sm:$0xff] %v667
    %764 = vst [vmem:[%s748] ss:$9 sm:$0xff] %v732
    %765 = vst [vmem:[%s750] ss:$9 sm:$0xff] %v733
    %766 = vst [vmem:[%s752] ss:$9 sm:$0xff] %v734
    %767 = vst [vmem:[%s754] ss:$9 sm:$0xff] %v735
    %768 = vst [vmem:[%s756] ss:$9 sm:$0xff] %v717
    %769 = vst [vmem:[%s758] ss:$9 sm:$0xff] %v736
    %770 = vst [vmem:[%s760] ss:$9 sm:$0xff] %v737
    %v771 = vld [vmem:[#allocation1] sm:$0xff]
    %772 = vst [vmem:[#allocation1] ss:$9 sm:$0xff] %v738
    %773 = vst [vmem:[%s748] ss:$9 sm:$0xff] %v739
    %774 = vst [vmem:[%s750] ss:$9 sm:$0xff] %v740
    %775 = vst [vmem:[%s752] ss:$9 sm:$0xff] %v741
    %776 = vst [vmem:[%s754] ss:$9 sm:$0xff] %v742
    %777 = vst [vmem:[%s756] ss:$9 sm:$0xff] %v719
    %778 = vst [vmem:[%s758] ss:$9 sm:$0xff] %v743
    %779 = vst [vmem:[%s760] ss:$9 sm:$0xff] %v744
    %v780 = vld [vmem:[#allocation1] sm:$0xff]
    %781 = vst [vmem:[#allocation1] ss:$9 sm:$0xff] %v745
    %782 = vst [vmem:[%s748] ss:$9 sm:$0xff] %v746
    %v783 = vld [vmem:[#allocation1] sm:$0xff]
    %v788 = vpack.c.bf16 %v771, %v762
    %v789 = vpack.c.bf16 %v783, %v780
    %v790 = vld [vmem:[%s11] sm:$0xf]
    %v791 = vld [vmem:[%s11 + $0x4] sm:$0xf]
    %s792 = scalar_lea.vmem %s5, 16
    %v793 = vld [vmem:[%s792] sm:$0xf]
    %v794 = vld [vmem:[%s792 + $0x4] sm:$0xf]
    %v795 = vld [vmem:[%s792 + $0x8] sm:$0xf]
    %v796 = vld [vmem:[%s792 + $0xc] sm:$0xf]
    %s797 = scalar_lea.vmem %s6, 1
    %v798 = vld [vmem:[%s797] sm:$0x1]
    %v800 = vperm.slane %v798, 0
    %v806 = vunpack.c.l.b16 %v793
    %v807 = vunpack.c.l.b16 %v794
    %v808 = vunpack.c.l.b16 %v795
    %v809 = vunpack.c.l.b16 %v796
    %v810 = vpack.c.b16 %v807, %v806
    %v811 = vpack.c.b16 %v809, %v808
    %814 = vmatpush.bf16.msra.mxu0 0
    %815 = vmatpush.bf16.msra.mxu0 0
    %816 = vmatpush.bf16.msra.mxu0 0
    %817 = vmatpush.bf16.msra.mxu0 0
    %818 = vmatpush.bf16.msra.mxu0 0
    %819 = vmatpush.bf16.msra.mxu0 0
    %820 = vmatpush.bf16.msra.mxu0 %v811
    %821 = vmatpush.bf16.msra.mxu0 %v810
    %822 = vmatmul.bf16.gmra.mxu0 %v169
    %v823 = vpop.f32.mrf.mxu0
    %v824 = vadd.f32 %v800, %v823
    %v825 = vpop.f32.mrf.mxu0
    %v826 = vadd.f32 %v800, %v825
    %827 = vmatmul.bf16.gmra.mxu0 %v172
    %v828 = vpop.f32.mrf.mxu0
    %v829 = vadd.f32 %v800, %v828
    %v830 = vpop.f32.mrf.mxu0
    %v831 = vadd.f32 %v800, %v830
    %832 = vdwg.mxu0
    %v837 = vrot.slane %v824, 1
    %v838 = vrot.slane %v824, 2
    %v839 = vrot.slane %v824, 3
    %v840 = vrot.slane %v824, 4
    %v841 = vrot.slane %v824, 5
    %v842 = vrot.slane %v824, 6
    %v843 = vrot.slane %v824, 7
    %v844 = vrot.slane %v826, 1
    %v845 = vrot.slane %v826, 2
    %v846 = vrot.slane %v826, 3
    %v847 = vrot.slane %v826, 4
    %v848 = vrot.slane %v826, 5
    %v849 = vrot.slane %v826, 6
    %v850 = vrot.slane %v826, 7
    %v851 = vrot.slane %v829, 1
    %v852 = vrot.slane %v829, 2
    %v853 = vrot.slane %v829, 3
    %v854 = vrot.slane %v829, 4
    %v855 = vrot.slane %v829, 5
    %v856 = vrot.slane %v829, 6
    %v857 = vrot.slane %v829, 7
    %v858 = vrot.slane %v831, 1
    %s859 = scalar_lea.vmem %s7, 16
    %v860 = vld [vmem:[%s859] sm:$0xf]
    %v861 = vld [vmem:[%s859 + $0x4] sm:$0xf]
    %v862 = vld [vmem:[%s859 + $0x8] sm:$0xf]
    %v863 = vld [vmem:[%s859 + $0xc] sm:$0xf]
    %s864 = scalar_lea.vmem %s8, 1
    %v865 = vld [vmem:[%s864] sm:$0x1]
    %v867 = vperm.slane %v865, 0
    %v873 = vunpack.c.l.b16 %v860
    %v874 = vunpack.c.l.b16 %v861
    %v875 = vunpack.c.l.b16 %v862
    %v876 = vunpack.c.l.b16 %v863
    %v877 = vpack.c.b16 %v874, %v873
    %v878 = vpack.c.b16 %v876, %v875
    %881 = vmatpush.bf16.msra.mxu0 0
    %882 = vmatpush.bf16.msra.mxu0 0
    %883 = vmatpush.bf16.msra.mxu0 0
    %884 = vmatpush.bf16.msra.mxu0 0
    %885 = vmatpush.bf16.msra.mxu0 0
    %886 = vmatpush.bf16.msra.mxu0 0
    %887 = vmatpush.bf16.msra.mxu0 %v878
    %888 = vmatpush.bf16.msra.mxu0 %v877
    %889 = vmatmul.bf16.gmra.mxu0 %v169
    %v890 = vpop.f32.mrf.mxu0
    %v891 = vadd.f32 %v867, %v890
    %v892 = vpop.f32.mrf.mxu0
    %v893 = vadd.f32 %v867, %v892
    %894 = vmatmul.bf16.gmra.mxu0 %v172
    %v895 = vpop.f32.mrf.mxu0
    %v896 = vadd.f32 %v867, %v895
    %v897 = vpop.f32.mrf.mxu0
    %v898 = vadd.f32 %v867, %v897
    %899 = vdwg.mxu0
    %v904 = vrot.slane %v891, 1
    %v905 = vrot.slane %v891, 2
    %v906 = vrot.slane %v891, 3
    %v907 = vrot.slane %v891, 4
    %v908 = vrot.slane %v891, 5
    %v909 = vrot.slane %v891, 6
    %v910 = vrot.slane %v891, 7
    %v911 = vrot.slane %v893, 1
    %v912 = vrot.slane %v893, 2
    %v913 = vrot.slane %v893, 3
    %v914 = vrot.slane %v893, 4
    %v915 = vrot.slane %v893, 5
    %v916 = vrot.slane %v893, 6
    %v917 = vrot.slane %v893, 7
    %v918 = vrot.slane %v896, 1
    %v919 = vrot.slane %v896, 2
    %v920 = vrot.slane %v896, 3
    %v921 = vrot.slane %v896, 4
    %v922 = vrot.slane %v896, 5
    %v923 = vrot.slane %v896, 6
    %v924 = vrot.slane %v896, 7
    %v925 = vrot.slane %v898, 1
    %s926 = scalar_lea.vmem %s9, 16
    %v927 = vld [vmem:[%s926] sm:$0xf]
    %v928 = vld [vmem:[%s926 + $0x4] sm:$0xf]
    %v929 = vld [vmem:[%s926 + $0x8] sm:$0xf]
    %v930 = vld [vmem:[%s926 + $0xc] sm:$0xf]
    %s931 = scalar_lea.vmem %s10, 1
    %v932 = vld [vmem:[%s931] sm:$0x1]
    %v934 = vperm.slane %v932, 0
    %v940 = vunpack.c.l.b16 %v927
    %v941 = vunpack.c.l.b16 %v928
    %v942 = vunpack.c.l.b16 %v929
    %v943 = vunpack.c.l.b16 %v930
    %v944 = vpack.c.b16 %v941, %v940
    %v945 = vpack.c.b16 %v943, %v942
    %948 = vmatpush.bf16.msra.mxu0 0
    %949 = vmatpush.bf16.msra.mxu0 0
    %950 = vmatpush.bf16.msra.mxu0 0
    %951 = vmatpush.bf16.msra.mxu0 0
    %952 = vmatpush.bf16.msra.mxu0 0
    %953 = vmatpush.bf16.msra.mxu0 0
    %954 = vmatpush.bf16.msra.mxu0 %v945
    %955 = vmatpush.bf16.msra.mxu0 %v944
    %956 = vmatmul.bf16.gmra.mxu0 %v169
    %v957 = vpop.f32.mrf.mxu0
    %v958 = vadd.f32 %v934, %v957
    %v959 = vpop.f32.mrf.mxu0
    %v960 = vadd.f32 %v934, %v959
    %961 = vmatmul.bf16.gmra.mxu0 %v172
    %v962 = vpop.f32.mrf.mxu0
    %v963 = vadd.f32 %v934, %v962
    %v964 = vpop.f32.mrf.mxu0
    %v965 = vadd.f32 %v934, %v964
    %966 = vdwg.mxu0
    %v967 = vpack.c.bf16 %v958, %v958
    %v968 = vpack.c.bf16 %v960, %v960
    %v969 = vpack.c.bf16 %v963, %v963
    %v970 = vpack.c.bf16 %v965, %v965
    %v975 = vrot.slane %v967, 3
    %v976 = vrot.slane %v968, 3
    %v977 = vrot.slane %v969, 3
    %v978 = vrot.slane %v970, 3
    %v981 = vsel %vm335, %v967, %v975
    %v983 = vsel %vm340, %v967, %v975
    %v985 = vrot.slane %v983, 1
    %v986 = vsel %vm344, %v967, %v975
    %v988 = vrot.slane %v986, 2
    %v989 = vsel %vm348, %v967, %v975
    %v991 = vrot.slane %v989, 3
    %v994 = vsel %vm335, %v968, %v976
    %v996 = vsel %vm340, %v968, %v976
    %v998 = vrot.slane %v996, 1
    %v999 = vsel %vm344, %v968, %v976
    %v1001 = vrot.slane %v999, 2
    %v1002 = vsel %vm348, %v968, %v976
    %v1004 = vrot.slane %v1002, 3
    %v1007 = vsel %vm335, %v969, %v977
    %v1009 = vsel %vm340, %v969, %v977
    %v1011 = vrot.slane %v1009, 1
    %v1012 = vsel %vm344, %v969, %v977
    %v1014 = vrot.slane %v1012, 2
    %v1015 = vsel %vm348, %v969, %v977
    %v1017 = vrot.slane %v1015, 3
    %v1020 = vsel %vm335, %v970, %v978
    %v1022 = vunpack.i.l.s16 %v981
    %v1023 = vunpack.i.h.s16 %v981
    %v1024 = vunpack.i.l.s16 %v985
    %v1025 = vunpack.i.h.s16 %v985
    %v1026 = vunpack.i.l.s16 %v988
    %v1027 = vunpack.i.h.s16 %v988
    %v1028 = vunpack.i.l.s16 %v991
    %v1029 = vunpack.i.h.s16 %v991
    %v1030 = vunpack.i.l.s16 %v994
    %v1031 = vunpack.i.h.s16 %v994
    %v1032 = vunpack.i.l.s16 %v998
    %v1033 = vunpack.i.h.s16 %v998
    %v1034 = vunpack.i.l.s16 %v1001
    %v1035 = vunpack.i.h.s16 %v1001
    %v1036 = vunpack.i.l.s16 %v1004
    %v1037 = vunpack.i.h.s16 %v1004
    %v1038 = vunpack.i.l.s16 %v1007
    %v1039 = vunpack.i.h.s16 %v1007
    %v1040 = vunpack.i.l.s16 %v1011
    %v1041 = vunpack.i.h.s16 %v1011
    %v1042 = vunpack.i.l.s16 %v1014
    %v1043 = vunpack.i.h.s16 %v1014
    %v1044 = vunpack.i.l.s16 %v1017
    %v1045 = vunpack.i.h.s16 %v1017
    %v1046 = vunpack.i.l.s16 %v1020
    %v1047 = vunpack.i.h.s16 %v1020
    %1048 = vst [vmem:[#allocation1] ss:$9 sm:$0xff] %v824
    %s1049 = scalar_lea.vmem [#allocation1], 1
    %1050 = vst [vmem:[%s1049] ss:$9 sm:$0xff] %v837
    %s1051 = scalar_lea.vmem [#allocation1], 2
    %1052 = vst [vmem:[%s1051] ss:$9 sm:$0xff] %v838
    %s1053 = scalar_lea.vmem [#allocation1], 3
    %1054 = vst [vmem:[%s1053] ss:$9 sm:$0xff] %v839
    %s1055 = scalar_lea.vmem [#allocation1], 4
    %1056 = vst [vmem:[%s1055] ss:$9 sm:$0xff] %v840
    %s1057 = scalar_lea.vmem [#allocation1], 5
    %1058 = vst [vmem:[%s1057] ss:$9 sm:$0xff] %v841
    %s1059 = scalar_lea.vmem [#allocation1], 6
    %1060 = vst [vmem:[%s1059] ss:$9 sm:$0xff] %v842
    %s1061 = scalar_lea.vmem [#allocation1], 7
    %1062 = vst [vmem:[%s1061] ss:$9 sm:$0xff] %v843
    %v1063 = vld [vmem:[#allocation1] sm:$0xff]
    %1064 = vst [vmem:[#allocation1] ss:$9 sm:$0xff] %v826
    %1065 = vst [vmem:[%s1049] ss:$9 sm:$0xff] %v844
    %1066 = vst [vmem:[%s1051] ss:$9 sm:$0xff] %v845
    %1067 = vst [vmem:[%s1053] ss:$9 sm:$0xff] %v846
    %1068 = vst [vmem:[%s1055] ss:$9 sm:$0xff] %v847
    %v1069 = vld [vmem:[#allocation1] sm:$0xff]
    %1070 = vst [vmem:[#allocation1] ss:$9 sm:$0xff] %v848
    %1071 = vst [vmem:[%s1049] ss:$9 sm:$0xff] %v849
    %1072 = vst [vmem:[%s1051] ss:$9 sm:$0xff] %v850
    %1073 = vst [vmem:[%s1053] ss:$9 sm:$0xff] %v829
    %1074 = vst [vmem:[%s1055] ss:$9 sm:$0xff] %v851
    %1075 = vst [vmem:[%s1057] ss:$9 sm:$0xff] %v852
    %1076 = vst [vmem:[%s1059] ss:$9 sm:$0xff] %v853
    %1077 = vst [vmem:[%s1061] ss:$9 sm:$0xff] %v854
    %v1078 = vld [vmem:[#allocation1] sm:$0xff]
    %1079 = vst [vmem:[#allocation1] ss:$9 sm:$0xff] %v855
    %1080 = vst [vmem:[%s1049] ss:$9 sm:$0xff] %v856
    %1081 = vst [vmem:[%s1051] ss:$9 sm:$0xff] %v857
    %1082 = vst [vmem:[%s1053] ss:$9 sm:$0xff] %v831
    %1083 = vst [vmem:[%s1055] ss:$9 sm:$0xff] %v858
    %v1084 = vld [vmem:[#allocation1] sm:$0xff]
    %v1089 = vpack.c.bf16 %v1063, %v1063
    %v1090 = vpack.c.bf16 %v1069, %v1069
    %v1091 = vpack.c.bf16 %v1078, %v1078
    %v1092 = vpack.c.bf16 %v1084, %v1084
    %1093 = vst [vmem:[#allocation1] ss:$9 sm:$0xff] %v891
    %s1094 = scalar_lea.vmem [#allocation1], 1
    %1095 = vst [vmem:[%s1094] ss:$9 sm:$0xff] %v904
    %s1096 = scalar_lea.vmem [#allocation1], 2
    %1097 = vst [vmem:[%s1096] ss:$9 sm:$0xff] %v905
    %s1098 = scalar_lea.vmem [#allocation1], 3
    %1099 = vst [vmem:[%s1098] ss:$9 sm:$0xff] %v906
    %s1100 = scalar_lea.vmem [#allocation1], 4
    %1101 = vst [vmem:[%s1100] ss:$9 sm:$0xff] %v907
    %s1102 = scalar_lea.vmem [#allocation1], 5
    %1103 = vst [vmem:[%s1102] ss:$9 sm:$0xff] %v908
    %s1104 = scalar_lea.vmem [#allocation1], 6
    %1105 = vst [vmem:[%s1104] ss:$9 sm:$0xff] %v909
    %s1106 = scalar_lea.vmem [#allocation1], 7
    %1107 = vst [vmem:[%s1106] ss:$9 sm:$0xff] %v910
    %v1108 = vld [vmem:[#allocation1] sm:$0xff]
    %1109 = vst [vmem:[#allocation1] ss:$9 sm:$0xff] %v893
    %1110 = vst [vmem:[%s1094] ss:$9 sm:$0xff] %v911
    %1111 = vst [vmem:[%s1096] ss:$9 sm:$0xff] %v912
    %1112 = vst [vmem:[%s1098] ss:$9 sm:$0xff] %v913
    %1113 = vst [vmem:[%s1100] ss:$9 sm:$0xff] %v914
    %v1114 = vld [vmem:[#allocation1] sm:$0xff]
    %1115 = vst [vmem:[#allocation1] ss:$9 sm:$0xff] %v915
    %1116 = vst [vmem:[%s1094] ss:$9 sm:$0xff] %v916
    %1117 = vst [vmem:[%s1096] ss:$9 sm:$0xff] %v917
    %1118 = vst [vmem:[%s1098] ss:$9 sm:$0xff] %v896
    %1119 = vst [vmem:[%s1100] ss:$9 sm:$0xff] %v918
    %1120 = vst [vmem:[%s1102] ss:$9 sm:$0xff] %v919
    %1121 = vst [vmem:[%s1104] ss:$9 sm:$0xff] %v920
    %1122 = vst [vmem:[%s1106] ss:$9 sm:$0xff] %v921
    %v1123 = vld [vmem:[#allocation1] sm:$0xff]
    %1124 = vst [vmem:[#allocation1] ss:$9 sm:$0xff] %v922
    %1125 = vst [vmem:[%s1094] ss:$9 sm:$0xff] %v923
    %1126 = vst [vmem:[%s1096] ss:$9 sm:$0xff] %v924
    %1127 = vst [vmem:[%s1098] ss:$9 sm:$0xff] %v898
    %1128 = vst [vmem:[%s1100] ss:$9 sm:$0xff] %v925
    %v1129 = vld [vmem:[#allocation1] sm:$0xff]
    %v1134 = vpack.c.bf16 %v1108, %v1108
    %v1135 = vpack.c.bf16 %v1114, %v1114
    %v1136 = vpack.c.bf16 %v1123, %v1123
    %v1137 = vpack.c.bf16 %v1129, %v1129
    %v1140 = vunpack.c.l.b16 %v1089
    %v1141 = vunpack.c.l.b16 %v1090
    %v1142 = vpack.c.b16 %v1141, %v1140
    %v1145 = vunpack.c.l.b16 %v1134
    %v1146 = vunpack.c.l.b16 %v1135
    %v1147 = vpack.c.b16 %v1146, %v1145
    %v1149 = vsel %vm508, %v1142, 0
    %v1152 = vsel %vm508, %v1147, 0
    %1154 = vmatpush.bf16.xpose.msra.mxu0 0
    %1155 = vmatpush.bf16.xpose.msra.mxu0 0
    %1156 = vmatpush.bf16.xpose.msra.mxu0 0
    %1157 = vmatpush.bf16.xpose.msra.mxu0 0
    %1158 = vmatpush.bf16.xpose.msra.mxu0 0
    %1159 = vmatpush.bf16.xpose.msra.mxu0 0
    %1160 = vmatpush.bf16.xpose.msra.mxu0 0
    %1161 = vmatpush.bf16.xpose.msra.mxu0 %v1152
    %1162 = vmatmul.bf16.gmra.mxu0 %v1149
    %v1163 = vpop.f32.mrf.mxu0
    %v1164 = vadd.f32 0.0, %v1163
    %v1165 = vpop.f32.mrf.mxu0
    %v1166 = vadd.f32 0.0, %v1165
    %1167 = vdwg.mxu0
    %v1170 = vunpack.c.l.b16 %v1091
    %v1171 = vunpack.c.l.b16 %v1092
    %v1172 = vpack.c.b16 %v1171, %v1170
    %v1175 = vunpack.c.l.b16 %v1136
    %v1176 = vunpack.c.l.b16 %v1137
    %v1177 = vpack.c.b16 %v1176, %v1175
    %v1179 = vsel %vm508, %v1172, 0
    %v1182 = vsel %vm508, %v1177, 0
    %1184 = vmatpush.bf16.xpose.msra.mxu0 0
    %1185 = vmatpush.bf16.xpose.msra.mxu0 0
    %1186 = vmatpush.bf16.xpose.msra.mxu0 0
    %1187 = vmatpush.bf16.xpose.msra.mxu0 0
    %1188 = vmatpush.bf16.xpose.msra.mxu0 0
    %1189 = vmatpush.bf16.xpose.msra.mxu0 0
    %1190 = vmatpush.bf16.xpose.msra.mxu0 0
    %1191 = vmatpush.bf16.xpose.msra.mxu0 %v1182
    %1192 = vmatmul.bf16.gmra.mxu0 %v1179
    %v1193 = vpop.f32.mrf.mxu0
    %v1194 = vadd.f32 0.0, %v1193
    %v1195 = vpop.f32.mrf.mxu0
    %v1196 = vadd.f32 0.0, %v1195
    %1197 = vdwg.mxu0
    %v1198 = vmul.f32 %v1164, 0.25
    %v1199 = vmul.f32 %v1166, 0.25
    %v1200 = vmul.f32 %v1194, 0.25
    %v1201 = vmul.f32 %v1196, 0.25
    %v1202 = vsel %vm563, %v1198, -inf
    %1203 = vmax.xlane.f32.xlu0 %v1202
    %v1204 = vpop.xlane.xlu0 %1203
    %v1205 = vsel %vm567, %v1199, -inf
    %1206 = vmax.xlane.f32.xlu0 %v1205
    %v1207 = vpop.xlane.xlu0 %1206
    %v1208 = vsel %vm563, %v1200, -inf
    %1209 = vmax.xlane.f32.xlu0 %v1208
    %v1210 = vpop.xlane.xlu0 %1209
    %v1211 = vsel %vm567, %v1201, -inf
    %1212 = vmax.xlane.f32.xlu0 %v1211
    %v1213 = vpop.xlane.xlu0 %1212
    %v1214 = vsub.f32 %v1198, %v1204
    %v1215 = vsub.f32 %v1199, %v1207
    %v1216 = vsub.f32 %v1200, %v1210
    %v1217 = vsub.f32 %v1201, %v1213
    %v1218 = vmul.f32 %v1214, 1.442695
    %v1219 = vpow.pop %v1218
    %v1220 = vmul.f32 %v1215, 1.442695
    %v1221 = vpow.pop %v1220
    %v1222 = vmul.f32 %v1216, 1.442695
    %v1223 = vpow.pop %v1222
    %v1224 = vmul.f32 %v1217, 1.442695
    %v1225 = vpow.pop %v1224
    %v1226 = vsel %vm563, %v1219, 0.0
    %1227 = vadd.xlane.f32.xlu0 %v1226
    %v1228 = vpop.xlane.xlu0 %1227
    %v1229 = vsel %vm567, %v1221, 0.0
    %1230 = vadd.xlane.f32.xlu0 %v1229
    %v1231 = vpop.xlane.xlu0 %1230
    %v1232 = vsel %vm563, %v1223, 0.0
    %1233 = vadd.xlane.f32.xlu0 %v1232
    %v1234 = vpop.xlane.xlu0 %1233
    %v1235 = vsel %vm567, %v1225, 0.0
    %1236 = vadd.xlane.f32.xlu0 %v1235
    %v1237 = vpop.xlane.xlu0 %1236
    %v1238 = vrcp.pop %v1228
    %v1239 = vrcp.pop %v1231
    %v1240 = vrcp.pop %v1234
    %v1241 = vrcp.pop %v1237
    %v1242 = vmul.f32 %v1219, %v1238
    %v1243 = vmul.f32 %v1221, %v1239
    %v1244 = vmul.f32 %v1223, %v1240
    %v1245 = vmul.f32 %v1225, %v1241
    %v1246 = vpack.c.bf16 %v1242, %v1242
    %v1247 = vpack.c.bf16 %v1243, %v1243
    %v1248 = vpack.c.bf16 %v1244, %v1244
    %v1249 = vpack.c.bf16 %v1245, %v1245
    %v1252 = vunpack.c.l.b16 %v1246
    %v1253 = vunpack.c.l.b16 %v1247
    %v1254 = vpack.c.b16 %v1253, %v1252
    %v1255 = vpack.i.b16 %v1023, %v1022
    %v1256 = vpack.i.b16 %v1025, %v1024
    %v1257 = vpack.i.b16 %v1027, %v1026
    %v1258 = vpack.i.b16 %v1029, %v1028
    %v1259 = vpack.i.b16 %v1031, %v1030
    %v1260 = vpack.i.b16 %v1033, %v1032
    %1263 = vst [vmem:[#allocation1] ss:$9 sm:$0xff] %v1255
    %s1265 = scalar_lea.vmem [#allocation1], 1
    %1266 = vst [vmem:[%s1265] ss:$9 sm:$0xff] %v1256
    %s1268 = scalar_lea.vmem [#allocation1], 2
    %1269 = vst [vmem:[%s1268] ss:$9 sm:$0xff] %v1257
    %s1271 = scalar_lea.vmem [#allocation1], 3
    %1272 = vst [vmem:[%s1271] ss:$9 sm:$0xff] %v1258
    %s1274 = scalar_lea.vmem [#allocation1], 4
    %1275 = vst [vmem:[%s1274] ss:$9 sm:$0xff] %v1259
    %s1277 = scalar_lea.vmem [#allocation1], 5
    %1278 = vst [vmem:[%s1277] ss:$9 sm:$0xff] %v1260
    %s1280 = scalar_lea.vmem [#allocation1], 6
    %1281 = vst [vmem:[%s1280] ss:$9 sm:$0xff] %v1034
    %v1282 = vld [vmem:[#allocation1] sm:$0xff]
    %v1284 = vsel %vm563, %v1254, 0
    %v1286 = vand.u32 %v1282, %v652
    %1288 = vmatpush.bf16.msra.mxu0 0
    %1289 = vmatpush.bf16.msra.mxu0 0
    %1290 = vmatpush.bf16.msra.mxu0 0
    %1291 = vmatpush.bf16.msra.mxu0 0
    %1292 = vmatpush.bf16.msra.mxu0 0
    %1293 = vmatpush.bf16.msra.mxu0 0
    %1294 = vmatpush.bf16.msra.mxu0 0
    %1295 = vmatpush.bf16.msra.mxu0 %v1286
    %1296 = vmatmul.bf16.gmra.mxu0 %v1284
    %v1297 = vpop.f32.mrf.mxu0
    %v1298 = vadd.f32 0.0, %v1297
    %v1299 = vpop.f32.mrf.mxu0
    %v1300 = vadd.f32 0.0, %v1299
    %1301 = vdwg.mxu0
    %v1304 = vunpack.c.l.b16 %v1248
    %v1305 = vunpack.c.l.b16 %v1249
    %v1306 = vpack.c.b16 %v1305, %v1304
    %v1307 = vpack.i.b16 %v1036, %v1035
    %v1308 = vpack.i.b16 %v1038, %v1037
    %v1309 = vpack.i.b16 %v1040, %v1039
    %v1310 = vpack.i.b16 %v1042, %v1041
    %v1311 = vpack.i.b16 %v1044, %v1043
    %v1312 = vpack.i.b16 %v1046, %v1045
    %1315 = vst [vmem:[#allocation1] ss:$9 sm:$0xff] %v1307
    %s1317 = scalar_lea.vmem [#allocation1], 1
    %1318 = vst [vmem:[%s1317] ss:$9 sm:$0xff] %v1308
    %s1320 = scalar_lea.vmem [#allocation1], 2
    %1321 = vst [vmem:[%s1320] ss:$9 sm:$0xff] %v1309
    %s1323 = scalar_lea.vmem [#allocation1], 3
    %1324 = vst [vmem:[%s1323] ss:$9 sm:$0xff] %v1310
    %s1326 = scalar_lea.vmem [#allocation1], 4
    %1327 = vst [vmem:[%s1326] ss:$9 sm:$0xff] %v1311
    %s1329 = scalar_lea.vmem [#allocation1], 5
    %1330 = vst [vmem:[%s1329] ss:$9 sm:$0xff] %v1312
    %s1332 = scalar_lea.vmem [#allocation1], 6
    %1333 = vst [vmem:[%s1332] ss:$9 sm:$0xff] %v1047
    %v1334 = vld [vmem:[#allocation1] sm:$0xff]
    %v1336 = vsel %vm563, %v1306, 0
    %v1338 = vand.u32 %v1334, %v652
    %1340 = vmatpush.bf16.msra.mxu0 0
    %1341 = vmatpush.bf16.msra.mxu0 0
    %1342 = vmatpush.bf16.msra.mxu0 0
    %1343 = vmatpush.bf16.msra.mxu0 0
    %1344 = vmatpush.bf16.msra.mxu0 0
    %1345 = vmatpush.bf16.msra.mxu0 0
    %1346 = vmatpush.bf16.msra.mxu0 0
    %1347 = vmatpush.bf16.msra.mxu0 %v1338
    %1348 = vmatmul.bf16.gmra.mxu0 %v1336
    %v1349 = vpop.f32.mrf.mxu0
    %v1350 = vadd.f32 0.0, %v1349
    %v1351 = vpop.f32.mrf.mxu0
    %v1352 = vadd.f32 0.0, %v1351
    %1353 = vdwg.mxu0
    %v1358 = vrot.slane %v1298, 1
    %v1359 = vrot.slane %v1298, 2
    %v1360 = vrot.slane %v1298, 3
    %v1361 = vrot.slane %v1298, 4
    %v1362 = vrot.slane %v1298, 5
    %v1363 = vrot.slane %v1298, 6
    %v1364 = vrot.slane %v1298, 7
    %v1365 = vrot.slane %v1300, 1
    %v1366 = vrot.slane %v1300, 2
    %v1367 = vrot.slane %v1300, 3
    %v1368 = vrot.slane %v1300, 4
    %v1369 = vrot.slane %v1350, 1
    %v1370 = vrot.slane %v1350, 2
    %v1371 = vrot.slane %v1350, 3
    %v1372 = vrot.slane %v1350, 4
    %v1373 = vrot.slane %v1350, 5
    %v1374 = vrot.slane %v1350, 6
    %v1375 = vrot.slane %v1350, 7
    %v1376 = vrot.slane %v1352, 1
    %v1377 = vrot.slane %v1352, 2
    %v1378 = vrot.slane %v1352, 3
    %v1379 = vrot.slane %v1352, 4
    %1380 = vst [vmem:[#allocation1] ss:$9 sm:$0xff] %v1298
    %s1381 = scalar_lea.vmem [#allocation1], 1
    %1382 = vst [vmem:[%s1381] ss:$9 sm:$0xff] %v1358
    %s1383 = scalar_lea.vmem [#allocation1], 2
    %1384 = vst [vmem:[%s1383] ss:$9 sm:$0xff] %v1359
    %s1385 = scalar_lea.vmem [#allocation1], 3
    %1386 = vst [vmem:[%s1385] ss:$9 sm:$0xff] %v1360
    %s1387 = scalar_lea.vmem [#allocation1], 4
    %1388 = vst [vmem:[%s1387] ss:$9 sm:$0xff] %v1361
    %s1389 = scalar_lea.vmem [#allocation1], 5
    %1390 = vst [vmem:[%s1389] ss:$9 sm:$0xff] %v1362
    %s1391 = scalar_lea.vmem [#allocation1], 6
    %1392 = vst [vmem:[%s1391] ss:$9 sm:$0xff] %v1363
    %s1393 = scalar_lea.vmem [#allocation1], 7
    %1394 = vst [vmem:[%s1393] ss:$9 sm:$0xff] %v1364
    %v1395 = vld [vmem:[#allocation1] sm:$0xff]
    %1396 = vst [vmem:[#allocation1] ss:$9 sm:$0xff] %v1300
    %1397 = vst [vmem:[%s1381] ss:$9 sm:$0xff] %v1365
    %1398 = vst [vmem:[%s1383] ss:$9 sm:$0xff] %v1366
    %1399 = vst [vmem:[%s1385] ss:$9 sm:$0xff] %v1367
    %1400 = vst [vmem:[%s1387] ss:$9 sm:$0xff] %v1368
    %1401 = vst [vmem:[%s1389] ss:$9 sm:$0xff] %v1350
    %1402 = vst [vmem:[%s1391] ss:$9 sm:$0xff] %v1369
    %1403 = vst [vmem:[%s1393] ss:$9 sm:$0xff] %v1370
    %v1404 = vld [vmem:[#allocation1] sm:$0xff]
    %1405 = vst [vmem:[#allocation1] ss:$9 sm:$0xff] %v1371
    %1406 = vst [vmem:[%s1381] ss:$9 sm:$0xff] %v1372
    %1407 = vst [vmem:[%s1383] ss:$9 sm:$0xff] %v1373
    %1408 = vst [vmem:[%s1385] ss:$9 sm:$0xff] %v1374
    %1409 = vst [vmem:[%s1387] ss:$9 sm:$0xff] %v1375
    %1410 = vst [vmem:[%s1389] ss:$9 sm:$0xff] %v1352
    %1411 = vst [vmem:[%s1391] ss:$9 sm:$0xff] %v1376
    %1412 = vst [vmem:[%s1393] ss:$9 sm:$0xff] %v1377
    %v1413 = vld [vmem:[#allocation1] sm:$0xff]
    %1414 = vst [vmem:[#allocation1] ss:$9 sm:$0xff] %v1378
    %1415 = vst [vmem:[%s1381] ss:$9 sm:$0xff] %v1379
    %v1416 = vld [vmem:[#allocation1] sm:$0xff]
    %v1421 = vpack.c.bf16 %v1404, %v1395
    %v1422 = vpack.c.bf16 %v1416, %v1413
    %s1423 = scalar_lea.vmem %s11, 8
    %v1424 = vld [vmem:[%s1423] sm:$0xf]
    %v1425 = vld [vmem:[%s1423 + $0x4] sm:$0xf]
    %v1428 = vunpack.c.l.b16 %v1424
    %v1429 = vunpack.c.l.b16 %v1425
    %v1430 = vpack.c.b16 %v1429, %v1428
    %v1433 = vsel %vm508, %v1421, 0
    %v1436 = vsel %vm508, %v1422, 0
    %1438 = vmatpush.bf16.msra.mxu0 0
    %1439 = vmatpush.bf16.msra.mxu0 0
    %1440 = vmatpush.bf16.msra.mxu0 0
    %1441 = vmatpush.bf16.msra.mxu0 0
    %1442 = vmatpush.bf16.msra.mxu0 0
    %1443 = vmatpush.bf16.msra.mxu0 0
    %1444 = vmatpush.bf16.msra.mxu0 0
    %1445 = vmatpush.bf16.msra.mxu0 %v1430
    %1446 = vmatmul.bf16.gmra.mxu0 %v1433
    %v1447 = vpop.f32.mrf.mxu0
    %v1448 = vadd.f32 0.0, %v1447
    %v1449 = vpop.f32.mrf.mxu0
    %v1450 = vadd.f32 0.0, %v1449
    %1451 = vmatmul.bf16.gmra.mxu0 %v1436
    %v1452 = vpop.f32.mrf.mxu0
    %v1453 = vadd.f32 0.0, %v1452
    %v1454 = vpop.f32.mrf.mxu0
    %v1455 = vadd.f32 0.0, %v1454
    %1456 = vdwg.mxu0
    %v1459 = vunpack.c.l.b16 %v790
    %v1460 = vunpack.c.l.b16 %v791
    %v1461 = vpack.c.b16 %v1460, %v1459
    %v1464 = vsel %vm508, %v788, 0
    %v1467 = vsel %vm508, %v789, 0
    %1469 = vmatpush.bf16.msra.mxu0 0
    %1470 = vmatpush.bf16.msra.mxu0 0
    %1471 = vmatpush.bf16.msra.mxu0 0
    %1472 = vmatpush.bf16.msra.mxu0 0
    %1473 = vmatpush.bf16.msra.mxu0 0
    %1474 = vmatpush.bf16.msra.mxu0 0
    %1475 = vmatpush.bf16.msra.mxu0 0
    %1476 = vmatpush.bf16.msra.mxu0 %v1461
    %1477 = vmatmul.bf16.gmra.mxu0 %v1464
    %v1478 = vpop.f32.mrf.mxu0
    %v1479 = vadd.f32 %v1448, %v1478
    %v1480 = vpop.f32.mrf.mxu0
    %v1481 = vadd.f32 %v1450, %v1480
    %1482 = vmatmul.bf16.gmra.mxu0 %v1467
    %v1483 = vpop.f32.mrf.mxu0
    %v1484 = vadd.f32 %v1453, %v1483
    %v1485 = vpop.f32.mrf.mxu0
    %v1486 = vadd.f32 %v1455, %v1485
    %1487 = vdwg.mxu0
    %v1488 = vld [vmem:[%s12] sm:$0x1]
    %v1490 = vperm.slane %v1488, 0
    %v1492 = vadd.f32 %v1479, %v1490
    %v1493 = vadd.f32 %v1481, %v1490
    %v1494 = vadd.f32 %v1484, %v1490
    %v1495 = vadd.f32 %v1486, %v1490
    %v1496 = vadd.f32 %v142, %v1492
    %v1497 = vadd.f32 %v143, %v1493
    %v1498 = vadd.f32 %v144, %v1494
    %v1499 = vadd.f32 %v145, %v1495
    %v1500 = vld [vmem:[%s17] sm:$0x1]
    %v1501 = vld [vmem:[%s18] sm:$0x1]
    %v1502 = vsel %vm108, %v1496, 0.0
    %1503 = vadd.xlane.f32.xlu0 %v1502
    %v1504 = vpop.xlane.xlu0 %1503
    %v1505 = vsel %vm108, %v1497, 0.0
    %1506 = vadd.xlane.f32.xlu0 %v1505
    %v1507 = vpop.xlane.xlu0 %1506
    %v1508 = vsel %vm108, %v1498, 0.0
    %1509 = vadd.xlane.f32.xlu0 %v1508
    %v1510 = vpop.xlane.xlu0 %1509
    %vm1511 = vcmask 254976
    %v1512 = vsel %vm1511, %v1499, 0.0
    %1513 = vadd.xlane.f32.xlu0 %v1512
    %v1514 = vpop.xlane.xlu0 %1513
    %v1515 = vrcp.pop 32.0
    %v1516 = vmul.f32 32.0, %v1515
    %v1517 = vsub.f32 1.0, %v1516
    %v1518 = vmul.f32 %v1515, %v1517
    %v1519 = vadd.f32 %v1515, %v1518
    %vm1520 = vweird.f32 %v1515
    %v1521 = vsel %vm1520, %v1515, %v1519
    %v1522 = vmul.f32 %v1504, %v1521
    %v1523 = vmul.f32 %v1507, %v1521
    %v1524 = vmul.f32 %v1510, %v1521
    %v1525 = vmul.f32 %v1514, %v1521
    %v1526 = vsub.f32 %v1496, %v1522
    %v1527 = vsub.f32 %v1497, %v1523
    %v1528 = vsub.f32 %v1498, %v1524
    %v1529 = vsub.f32 %v1499, %v1525
    %v1530 = vmul.f32 %v1526, %v1526
    %v1531 = vmul.f32 %v1527, %v1527
    %v1532 = vmul.f32 %v1528, %v1528
    %v1533 = vmul.f32 %v1529, %v1529
    %v1534 = vsel %vm108, %v1530, 0.0
    %1535 = vadd.xlane.f32.xlu0 %v1534
    %v1536 = vpop.xlane.xlu0 %1535
    %v1537 = vsel %vm108, %v1531, 0.0
    %1538 = vadd.xlane.f32.xlu0 %v1537
    %v1539 = vpop.xlane.xlu0 %1538
    %v1540 = vsel %vm108, %v1532, 0.0
    %1541 = vadd.xlane.f32.xlu0 %v1540
    %v1542 = vpop.xlane.xlu0 %1541
    %v1543 = vsel %vm1511, %v1533, 0.0
    %1544 = vadd.xlane.f32.xlu0 %v1543
    %v1545 = vpop.xlane.xlu0 %1544
    %v1546 = vmul.f32 %v1536, %v1521
    %v1547 = vmul.f32 %v1539, %v1521
    %v1548 = vmul.f32 %v1542, %v1521
    %v1549 = vmul.f32 %v1545, %v1521
    %v1550 = vadd.f32 %v1546, 1e-05
    %v1551 = vadd.f32 %v1547, 1e-05
    %v1552 = vadd.f32 %v1548, 1e-05
    %v1553 = vadd.f32 %v1549, 1e-05
    %v1554 = vrsqrt.pop %v1550
    %v1555 = vmul.f32 %v1554, %v1550
    %v1556 = vmul.f32 %v1555, %v1554
    %v1557 = vmul.f32 0.5, %v1556
    %v1558 = vsub.f32 1.5, %v1557
    %v1559 = vmul.f32 %v1554, %v1558
    %vm1560 = vweird.f32 %v1550
    %vm1561 = vweird.f32 %v1554
    %vm1562 = vmor %vm1560, %vm1561
    %v1563 = vsel %vm1562, %v1554, %v1559
    %v1564 = vrsqrt.pop %v1551
    %v1565 = vmul.f32 %v1564, %v1551
    %v1566 = vmul.f32 %v1565, %v1564
    %v1567 = vmul.f32 0.5, %v1566
    %v1568 = vsub.f32 1.5, %v1567
    %v1569 = vmul.f32 %v1564, %v1568
    %vm1570 = vweird.f32 %v1551
    %vm1571 = vweird.f32 %v1564
    %vm1572 = vmor %vm1570, %vm1571
    %v1573 = vsel %vm1572, %v1564, %v1569
    %v1574 = vrsqrt.pop %v1552
    %v1575 = vmul.f32 %v1574, %v1552
    %v1576 = vmul.f32 %v1575, %v1574
    %v1577 = vmul.f32 0.5, %v1576
    %v1578 = vsub.f32 1.5, %v1577
    %v1579 = vmul.f32 %v1574, %v1578
    %vm1580 = vweird.f32 %v1552
    %vm1581 = vweird.f32 %v1574
    %vm1582 = vmor %vm1580, %vm1581
    %v1583 = vsel %vm1582, %v1574, %v1579
    %v1584 = vrsqrt.pop %v1553
    %v1585 = vmul.f32 %v1584, %v1553
    %v1586 = vmul.f32 %v1585, %v1584
    %v1587 = vmul.f32 0.5, %v1586
    %v1588 = vsub.f32 1.5, %v1587
    %v1589 = vmul.f32 %v1584, %v1588
    %vm1590 = vweird.f32 %v1553
    %vm1591 = vweird.f32 %v1584
    %vm1592 = vmor %vm1590, %vm1591
    %v1593 = vsel %vm1592, %v1584, %v1589
    %v1594 = vmul.f32 %v1526, %v1563
    %v1595 = vmul.f32 %v1527, %v1573
    %v1596 = vmul.f32 %v1528, %v1583
    %v1597 = vmul.f32 %v1529, %v1593
    %v1599 = vperm.slane %v1500, 0
    %v1601 = vmul.f32 %v1594, %v1599
    %v1602 = vmul.f32 %v1595, %v1599
    %v1603 = vmul.f32 %v1596, %v1599
    %v1604 = vmul.f32 %v1597, %v1599
    %v1606 = vperm.slane %v1501, 0
    %v1608 = vadd.f32 %v1601, %v1606
    %v1609 = vadd.f32 %v1602, %v1606
    %v1610 = vadd.f32 %v1603, %v1606
    %v1611 = vadd.f32 %v1604, %v1606
    %v1612 = vld [vmem:[%s13] sm:$0xf]
    %v1613 = vld [vmem:[%s13 + $0x4] sm:$0xf]
    %v1614 = vld [vmem:[%s13 + $0x8] sm:$0xf]
    %v1615 = vld [vmem:[%s13 + $0xc] sm:$0xf]
    %v1616 = vpack.c.bf16 %v1609, %v1608
    %v1617 = vpack.c.bf16 %v1611, %v1610
    %v1618 = vld [vmem:[%s14] sm:$0x1]
    %v1620 = vperm.slane %v1618, 0
    %v1626 = vunpack.c.l.b16 %v1612
    %v1627 = vunpack.c.l.b16 %v1613
    %v1628 = vunpack.c.l.b16 %v1614
    %v1629 = vunpack.c.l.b16 %v1615
    %v1630 = vpack.c.b16 %v1627, %v1626
    %v1631 = vpack.c.b16 %v1629, %v1628
    %v1635 = vsel %vm108, %v1616, 0
    %v1638 = vsel %vm108, %v1617, 0
    %1640 = vmatpush.bf16.msra.mxu0 0
    %1641 = vmatpush.bf16.msra.mxu0 0
    %1642 = vmatpush.bf16.msra.mxu0 0
    %1643 = vmatpush.bf16.msra.mxu0 0
    %1644 = vmatpush.bf16.msra.mxu0 0
    %1645 = vmatpush.bf16.msra.mxu0 0
    %1646 = vmatpush.bf16.msra.mxu0 %v1631
    %1647 = vmatpush.bf16.msra.mxu0 %v1630
    %1648 = vmatmul.bf16.gmra.mxu0 %v1635
    %v1649 = vpop.f32.mrf.mxu0
    %v1650 = vadd.f32 %v1620, %v1649
    %v1651 = vpop.f32.mrf.mxu0
    %v1652 = vadd.f32 %v1620, %v1651
    %1653 = vmatmul.bf16.gmra.mxu0 %v1638
    %v1654 = vpop.f32.mrf.mxu0
    %v1655 = vadd.f32 %v1620, %v1654
    %v1656 = vpop.f32.mrf.mxu0
    %v1657 = vadd.f32 %v1620, %v1656
    %1658 = vdwg.mxu0
    %v1659 = vmax.f32 %v1650, 0.0
    %v1660 = vmax.f32 %v1652, 0.0
    %v1661 = vmax.f32 %v1655, 0.0
    %v1662 = vmax.f32 %v1657, 0.0
    %v1663 = vld [vmem:[%s15] sm:$0xf]
    %v1664 = vld [vmem:[%s15 + $0x4] sm:$0xf]
    %v1665 = vld [vmem:[%s15 + $0x8] sm:$0xf]
    %v1666 = vld [vmem:[%s15 + $0xc] sm:$0xf]
    %v1667 = vld [vmem:[%s15 + $0x10] sm:$0xf]
    %v1668 = vld [vmem:[%s15 + $0x14] sm:$0xf]
    %v1669 = vld [vmem:[%s15 + $0x18] sm:$0xf]
    %v1670 = vld [vmem:[%s15 + $0x1c] sm:$0xf]
    %v1671 = vpack.c.bf16 %v1660, %v1659
    %v1672 = vpack.c.bf16 %v1662, %v1661
    %v1673 = vld [vmem:[%s16] sm:$0x1]
    %v1675 = vperm.slane %v1673, 0
    %v1685 = vunpack.c.l.b16 %v1663
    %v1686 = vunpack.c.l.b16 %v1664
    %v1687 = vunpack.c.l.b16 %v1665
    %v1688 = vunpack.c.l.b16 %v1666
    %v1689 = vunpack.c.l.b16 %v1667
    %v1690 = vunpack.c.l.b16 %v1668
    %v1691 = vunpack.c.l.b16 %v1669
    %v1692 = vunpack.c.l.b16 %v1670
    %v1693 = vpack.c.b16 %v1686, %v1685
    %v1694 = vpack.c.b16 %v1688, %v1687
    %v1695 = vpack.c.b16 %v1690, %v1689
    %v1696 = vpack.c.b16 %v1692, %v1691
    %vm1701 = vcmask 523264
    %v1703 = vsel %vm1701, %v1671, 0
    %v1706 = vsel %vm1701, %v1672, 0
    %1708 = vmatpush.bf16.msra.mxu0 0
    %1709 = vmatpush.bf16.msra.mxu0 0
    %1710 = vmatpush.bf16.msra.mxu0 0
    %1711 = vmatpush.bf16.msra.mxu0 0
    %1712 = vmatpush.bf16.msra.mxu0 %v1696
    %1713 = vmatpush.bf16.msra.mxu0 %v1695
    %1714 = vmatpush.bf16.msra.mxu0 %v1694
    %1715 = vmatpush.bf16.msra.mxu0 %v1693
    %1716 = vmatmul.bf16.gmra.mxu0 %v1703
    %v1717 = vpop.f32.mrf.mxu0
    %v1718 = vadd.f32 %v1675, %v1717
    %v1719 = vpop.f32.mrf.mxu0
    %v1720 = vadd.f32 %v1675, %v1719
    %1721 = vmatmul.bf16.gmra.mxu0 %v1706
    %v1722 = vpop.f32.mrf.mxu0
    %v1723 = vadd.f32 %v1675, %v1722
    %v1724 = vpop.f32.mrf.mxu0
    %v1725 = vadd.f32 %v1675, %v1724
    %1726 = vdwg.mxu0
    %v1727 = vadd.f32 %v1608, %v1718
    %v1728 = vadd.f32 %v1609, %v1720
    %v1729 = vadd.f32 %v1610, %v1723
    %v1730 = vadd.f32 %v1611, %v1725
    %v1731 = vld [vmem:[%s19] sm:$0x1]
    %v1732 = vld [vmem:[%s20] sm:$0x1]
    %v1733 = vsel %vm108, %v1727, 0.0
    %1734 = vadd.xlane.f32.xlu0 %v1733
    %v1735 = vpop.xlane.xlu0 %1734
    %v1736 = vsel %vm108, %v1728, 0.0
    %1737 = vadd.xlane.f32.xlu0 %v1736
    %v1738 = vpop.xlane.xlu0 %1737
    %v1739 = vsel %vm108, %v1729, 0.0
    %1740 = vadd.xlane.f32.xlu0 %v1739
    %v1741 = vpop.xlane.xlu0 %1740
    %v1742 = vsel %vm1511, %v1730, 0.0
    %1743 = vadd.xlane.f32.xlu0 %v1742
    %v1744 = vpop.xlane.xlu0 %1743
    %v1745 = vmul.f32 %v1735, %v1521
    %v1746 = vmul.f32 %v1738, %v1521
    %v1747 = vmul.f32 %v1741, %v1521
    %v1748 = vmul.f32 %v1744, %v1521
    %v1749 = vsub.f32 %v1727, %v1745
    %v1750 = vsub.f32 %v1728, %v1746
    %v1751 = vsub.f32 %v1729, %v1747
    %v1752 = vsub.f32 %v1730, %v1748
    %v1753 = vmul.f32 %v1749, %v1749
    %v1754 = vmul.f32 %v1750, %v1750
    %v1755 = vmul.f32 %v1751, %v1751
    %v1756 = vmul.f32 %v1752, %v1752
    %v1757 = vsel %vm108, %v1753, 0.0
    %1758 = vadd.xlane.f32.xlu0 %v1757
    %v1759 = vpop.xlane.xlu0 %1758
    %v1760 = vsel %vm108, %v1754, 0.0
    %1761 = vadd.xlane.f32.xlu0 %v1760
    %v1762 = vpop.xlane.xlu0 %1761
    %v1763 = vsel %vm108, %v1755, 0.0
    %1764 = vadd.xlane.f32.xlu0 %v1763
    %v1765 = vpop.xlane.xlu0 %1764
    %v1766 = vsel %vm1511, %v1756, 0.0
    %1767 = vadd.xlane.f32.xlu0 %v1766
    %v1768 = vpop.xlane.xlu0 %1767
    %v1769 = vmul.f32 %v1759, %v1521
    %v1770 = vmul.f32 %v1762, %v1521
    %v1771 = vmul.f32 %v1765, %v1521
    %v1772 = vmul.f32 %v1768, %v1521
    %v1773 = vadd.f32 %v1769, 1e-05
    %v1774 = vadd.f32 %v1770, 1e-05
    %v1775 = vadd.f32 %v1771, 1e-05
    %v1776 = vadd.f32 %v1772, 1e-05
    %v1777 = vrsqrt.pop %v1773
    %v1778 = vmul.f32 %v1777, %v1773
    %v1779 = vmul.f32 %v1778, %v1777
    %v1780 = vmul.f32 0.5, %v1779
    %v1781 = vsub.f32 1.5, %v1780
    %v1782 = vmul.f32 %v1777, %v1781
    %vm1783 = vweird.f32 %v1773
    %vm1784 = vweird.f32 %v1777
    %vm1785 = vmor %vm1783, %vm1784
    %v1786 = vsel %vm1785, %v1777, %v1782
    %v1787 = vrsqrt.pop %v1774
    %v1788 = vmul.f32 %v1787, %v1774
    %v1789 = vmul.f32 %v1788, %v1787
    %v1790 = vmul.f32 0.5, %v1789
    %v1791 = vsub.f32 1.5, %v1790
    %v1792 = vmul.f32 %v1787, %v1791
    %vm1793 = vweird.f32 %v1774
    %vm1794 = vweird.f32 %v1787
    %vm1795 = vmor %vm1793, %vm1794
    %v1796 = vsel %vm1795, %v1787, %v1792
    %v1797 = vrsqrt.pop %v1775
    %v1798 = vmul.f32 %v1797, %v1775
    %v1799 = vmul.f32 %v1798, %v1797
    %v1800 = vmul.f32 0.5, %v1799
    %v1801 = vsub.f32 1.5, %v1800
    %v1802 = vmul.f32 %v1797, %v1801
    %vm1803 = vweird.f32 %v1775
    %vm1804 = vweird.f32 %v1797
    %vm1805 = vmor %vm1803, %vm1804
    %v1806 = vsel %vm1805, %v1797, %v1802
    %v1807 = vrsqrt.pop %v1776
    %v1808 = vmul.f32 %v1807, %v1776
    %v1809 = vmul.f32 %v1808, %v1807
    %v1810 = vmul.f32 0.5, %v1809
    %v1811 = vsub.f32 1.5, %v1810
    %v1812 = vmul.f32 %v1807, %v1811
    %vm1813 = vweird.f32 %v1776
    %vm1814 = vweird.f32 %v1807
    %vm1815 = vmor %vm1813, %vm1814
    %v1816 = vsel %vm1815, %v1807, %v1812
    %v1817 = vmul.f32 %v1749, %v1786
    %v1818 = vmul.f32 %v1750, %v1796
    %v1819 = vmul.f32 %v1751, %v1806
    %v1820 = vmul.f32 %v1752, %v1816
    %v1822 = vperm.slane %v1731, 0
    %v1824 = vmul.f32 %v1817, %v1822
    %v1825 = vmul.f32 %v1818, %v1822
    %v1826 = vmul.f32 %v1819, %v1822
    %v1827 = vmul.f32 %v1820, %v1822
    %v1829 = vperm.slane %v1732, 0
    %v1831 = vadd.f32 %v1824, %v1829
    %v1832 = vadd.f32 %v1825, %v1829
    %v1833 = vadd.f32 %v1826, %v1829
    %v1834 = vadd.f32 %v1827, %v1829
    %v1835 = vpack.c.bf16 %v1832, %v1831
    %v1836 = vpack.c.bf16 %v1834, %v1833
    %s1837 = scalar_lea.vmem %s5, 32
    %v1838 = vld [vmem:[%s1837] sm:$0xf]
    %v1839 = vld [vmem:[%s1837 + $0x4] sm:$0xf]
    %v1840 = vld [vmem:[%s1837 + $0x8] sm:$0xf]
    %v1841 = vld [vmem:[%s1837 + $0xc] sm:$0xf]
    %s1842 = scalar_lea.vmem %s6, 2
    %v1843 = vld [vmem:[%s1842] sm:$0x1]
    %v1845 = vperm.slane %v1843, 0
    %v1851 = vunpack.c.l.b16 %v1838
    %v1852 = vunpack.c.l.b16 %v1839
    %v1853 = vunpack.c.l.b16 %v1840
    %v1854 = vunpack.c.l.b16 %v1841
    %v1855 = vpack.c.b16 %v1852, %v1851
    %v1856 = vpack.c.b16 %v1854, %v1853
    %v1860 = vsel %vm108, %v1835, 0
    %v1863 = vsel %vm108, %v1836, 0
    %1865 = vmatpush.bf16.msra.mxu0 0
    %1866 = vmatpush.bf16.msra.mxu0 0
    %1867 = vmatpush.bf16.msra.mxu0 0
    %1868 = vmatpush.bf16.msra.mxu0 0
    %1869 = vmatpush.bf16.msra.mxu0 0
    %1870 = vmatpush.bf16.msra.mxu0 0
    %1871 = vmatpush.bf16.msra.mxu0 %v1856
    %1872 = vmatpush.bf16.msra.mxu0 %v1855
    %1873 = vmatmul.bf16.gmra.mxu0 %v1860
    %v1874 = vpop.f32.mrf.mxu0
    %v1875 = vadd.f32 %v1845, %v1874
    %v1876 = vpop.f32.mrf.mxu0
    %v1877 = vadd.f32 %v1845, %v1876
    %1878 = vmatmul.bf16.gmra.mxu0 %v1863
    %v1879 = vpop.f32.mrf.mxu0
    %v1880 = vadd.f32 %v1845, %v1879
    %v1881 = vpop.f32.mrf.mxu0
    %v1882 = vadd.f32 %v1845, %v1881
    %1883 = vdwg.mxu0
    %v1888 = vrot.slane %v1875, 1
    %v1889 = vrot.slane %v1875, 2
    %v1890 = vrot.slane %v1875, 3
    %v1891 = vrot.slane %v1875, 4
    %v1892 = vrot.slane %v1875, 5
    %v1893 = vrot.slane %v1875, 6
    %v1894 = vrot.slane %v1875, 7
    %v1895 = vrot.slane %v1877, 1
    %v1896 = vrot.slane %v1877, 2
    %v1897 = vrot.slane %v1877, 3
    %v1898 = vrot.slane %v1877, 4
    %v1899 = vrot.slane %v1877, 5
    %v1900 = vrot.slane %v1877, 6
    %v1901 = vrot.slane %v1877, 7
    %v1902 = vrot.slane %v1880, 1
    %v1903 = vrot.slane %v1880, 2
    %v1904 = vrot.slane %v1880, 3
    %v1905 = vrot.slane %v1880, 4
    %v1906 = vrot.slane %v1880, 5
    %v1907 = vrot.slane %v1880, 6
    %v1908 = vrot.slane %v1880, 7
    %v1909 = vrot.slane %v1882, 1
    %s1910 = scalar_lea.vmem %s7, 32
    %v1911 = vld [vmem:[%s1910] sm:$0xf]
    %v1912 = vld [vmem:[%s1910 + $0x4] sm:$0xf]
    %v1913 = vld [vmem:[%s1910 + $0x8] sm:$0xf]
    %v1914 = vld [vmem:[%s1910 + $0xc] sm:$0xf]
    %s1915 = scalar_lea.vmem %s8, 2
    %v1916 = vld [vmem:[%s1915] sm:$0x1]
    %v1918 = vperm.slane %v1916, 0
    %v1924 = vunpack.c.l.b16 %v1911
    %v1925 = vunpack.c.l.b16 %v1912
    %v1926 = vunpack.c.l.b16 %v1913
    %v1927 = vunpack.c.l.b16 %v1914
    %v1928 = vpack.c.b16 %v1925, %v1924
    %v1929 = vpack.c.b16 %v1927, %v1926
    %1932 = vmatpush.bf16.msra.mxu0 0
    %1933 = vmatpush.bf16.msra.mxu0 0
    %1934 = vmatpush.bf16.msra.mxu0 0
    %1935 = vmatpush.bf16.msra.mxu0 0
    %1936 = vmatpush.bf16.msra.mxu0 0
    %1937 = vmatpush.bf16.msra.mxu0 0
    %1938 = vmatpush.bf16.msra.mxu0 %v1929
    %1939 = vmatpush.bf16.msra.mxu0 %v1928
    %1940 = vmatmul.bf16.gmra.mxu0 %v1860
    %v1941 = vpop.f32.mrf.mxu0
    %v1942 = vadd.f32 %v1918, %v1941
    %v1943 = vpop.f32.mrf.mxu0
    %v1944 = vadd.f32 %v1918, %v1943
    %1945 = vmatmul.bf16.gmra.mxu0 %v1863
    %v1946 = vpop.f32.mrf.mxu0
    %v1947 = vadd.f32 %v1918, %v1946
    %v1948 = vpop.f32.mrf.mxu0
    %v1949 = vadd.f32 %v1918, %v1948
    %1950 = vdwg.mxu0
    %v1955 = vrot.slane %v1942, 1
    %v1956 = vrot.slane %v1942, 2
    %v1957 = vrot.slane %v1942, 3
    %v1958 = vrot.slane %v1942, 4
    %v1959 = vrot.slane %v1942, 5
    %v1960 = vrot.slane %v1942, 6
    %v1961 = vrot.slane %v1942, 7
    %v1962 = vrot.slane %v1944, 1
    %v1963 = vrot.slane %v1944, 2
    %v1964 = vrot.slane %v1944, 3
    %v1965 = vrot.slane %v1944, 4
    %v1966 = vrot.slane %v1944, 5
    %v1967 = vrot.slane %v1944, 6
    %v1968 = vrot.slane %v1944, 7
    %v1969 = vrot.slane %v1947, 1
    %v1970 = vrot.slane %v1947, 2
    %v1971 = vrot.slane %v1947, 3
    %v1972 = vrot.slane %v1947, 4
    %v1973 = vrot.slane %v1947, 5
    %v1974 = vrot.slane %v1947, 6
    %v1975 = vrot.slane %v1947, 7
    %v1976 = vrot.slane %v1949, 1
    %s1977 = scalar_lea.vmem %s9, 32
    %v1978 = vld [vmem:[%s1977] sm:$0xf]
    %v1979 = vld [vmem:[%s1977 + $0x4] sm:$0xf]
    %v1980 = vld [vmem:[%s1977 + $0x8] sm:$0xf]
    %v1981 = vld [vmem:[%s1977 + $0xc] sm:$0xf]
    %s1982 = scalar_lea.vmem %s10, 2
    %v1983 = vld [vmem:[%s1982] sm:$0x1]
    %v1985 = vperm.slane %v1983, 0
    %v1991 = vunpack.c.l.b16 %v1978
    %v1992 = vunpack.c.l.b16 %v1979
    %v1993 = vunpack.c.l.b16 %v1980
    %v1994 = vunpack.c.l.b16 %v1981
    %v1995 = vpack.c.b16 %v1992, %v1991
    %v1996 = vpack.c.b16 %v1994, %v1993
    %1999 = vmatpush.bf16.msra.mxu0 0
    %2000 = vmatpush.bf16.msra.mxu0 0
    %2001 = vmatpush.bf16.msra.mxu0 0
    %2002 = vmatpush.bf16.msra.mxu0 0
    %2003 = vmatpush.bf16.msra.mxu0 0
    %2004 = vmatpush.bf16.msra.mxu0 0
    %2005 = vmatpush.bf16.msra.mxu0 %v1996
    %2006 = vmatpush.bf16.msra.mxu0 %v1995
    %2007 = vmatmul.bf16.gmra.mxu0 %v1860
    %v2008 = vpop.f32.mrf.mxu0
    %v2009 = vadd.f32 %v1985, %v2008
    %v2010 = vpop.f32.mrf.mxu0
    %v2011 = vadd.f32 %v1985, %v2010
    %2012 = vmatmul.bf16.gmra.mxu0 %v1863
    %v2013 = vpop.f32.mrf.mxu0
    %v2014 = vadd.f32 %v1985, %v2013
    %v2015 = vpop.f32.mrf.mxu0
    %v2016 = vadd.f32 %v1985, %v2015
    %2017 = vdwg.mxu0
    %v2018 = vpack.c.bf16 %v2009, %v2009
    %v2019 = vpack.c.bf16 %v2011, %v2011
    %v2020 = vpack.c.bf16 %v2014, %v2014
    %v2021 = vpack.c.bf16 %v2016, %v2016
    %v2026 = vrot.slane %v2018, 3
    %v2027 = vrot.slane %v2019, 3
    %v2028 = vrot.slane %v2020, 3
    %v2029 = vrot.slane %v2021, 3
    %v2032 = vsel %vm335, %v2018, %v2026
    %v2034 = vsel %vm340, %v2018, %v2026
    %v2036 = vrot.slane %v2034, 1
    %v2037 = vsel %vm344, %v2018, %v2026
    %v2039 = vrot.slane %v2037, 2
    %v2040 = vsel %vm348, %v2018, %v2026
    %v2042 = vrot.slane %v2040, 3
    %v2045 = vsel %vm335, %v2019, %v2027
    %v2047 = vsel %vm340, %v2019, %v2027
    %v2049 = vrot.slane %v2047, 1
    %v2050 = vsel %vm344, %v2019, %v2027
    %v2052 = vrot.slane %v2050, 2
    %v2053 = vsel %vm348, %v2019, %v2027
    %v2055 = vrot.slane %v2053, 3
    %v2058 = vsel %vm335, %v2020, %v2028
    %v2060 = vsel %vm340, %v2020, %v2028
    %v2062 = vrot.slane %v2060, 1
    %v2063 = vsel %vm344, %v2020, %v2028
    %v2065 = vrot.slane %v2063, 2
    %v2066 = vsel %vm348, %v2020, %v2028
    %v2068 = vrot.slane %v2066, 3
    %v2071 = vsel %vm335, %v2021, %v2029
    %v2073 = vunpack.i.l.s16 %v2032
    %v2074 = vunpack.i.h.s16 %v2032
    %v2075 = vunpack.i.l.s16 %v2036
    %v2076 = vunpack.i.h.s16 %v2036
    %v2077 = vunpack.i.l.s16 %v2039
    %v2078 = vunpack.i.h.s16 %v2039
    %v2079 = vunpack.i.l.s16 %v2042
    %v2080 = vunpack.i.h.s16 %v2042
    %v2081 = vunpack.i.l.s16 %v2045
    %v2082 = vunpack.i.h.s16 %v2045
    %v2083 = vunpack.i.l.s16 %v2049
    %v2084 = vunpack.i.h.s16 %v2049
    %v2085 = vunpack.i.l.s16 %v2052
    %v2086 = vunpack.i.h.s16 %v2052
    %v2087 = vunpack.i.l.s16 %v2055
    %v2088 = vunpack.i.h.s16 %v2055
    %v2089 = vunpack.i.l.s16 %v2058
    %v2090 = vunpack.i.h.s16 %v2058
    %v2091 = vunpack.i.l.s16 %v2062
    %v2092 = vunpack.i.h.s16 %v2062
    %v2093 = vunpack.i.l.s16 %v2065
    %v2094 = vunpack.i.h.s16 %v2065
    %v2095 = vunpack.i.l.s16 %v2068
    %v2096 = vunpack.i.h.s16 %v2068
    %v2097 = vunpack.i.l.s16 %v2071
    %v2098 = vunpack.i.h.s16 %v2071
    %2099 = vst [vmem:[#allocation1] ss:$9 sm:$0xff] %v1875
    %s2100 = scalar_lea.vmem [#allocation1], 1
    %2101 = vst [vmem:[%s2100] ss:$9 sm:$0xff] %v1888
    %s2102 = scalar_lea.vmem [#allocation1], 2
    %2103 = vst [vmem:[%s2102] ss:$9 sm:$0xff] %v1889
    %s2104 = scalar_lea.vmem [#allocation1], 3
    %2105 = vst [vmem:[%s2104] ss:$9 sm:$0xff] %v1890
    %s2106 = scalar_lea.vmem [#allocation1], 4
    %2107 = vst [vmem:[%s2106] ss:$9 sm:$0xff] %v1891
    %s2108 = scalar_lea.vmem [#allocation1], 5
    %2109 = vst [vmem:[%s2108] ss:$9 sm:$0xff] %v1892
    %s2110 = scalar_lea.vmem [#allocation1], 6
    %2111 = vst [vmem:[%s2110] ss:$9 sm:$0xff] %v1893
    %s2112 = scalar_lea.vmem [#allocation1], 7
    %2113 = vst [vmem:[%s2112] ss:$9 sm:$0xff] %v1894
    %v2114 = vld [vmem:[#allocation1] sm:$0xff]
    %2115 = vst [vmem:[#allocation1] ss:$9 sm:$0xff] %v1877
    %2116 = vst [vmem:[%s2100] ss:$9 sm:$0xff] %v1895
    %2117 = vst [vmem:[%s2102] ss:$9 sm:$0xff] %v1896
    %2118 = vst [vmem:[%s2104] ss:$9 sm:$0xff] %v1897
    %2119 = vst [vmem:[%s2106] ss:$9 sm:$0xff] %v1898
    %v2120 = vld [vmem:[#allocation1] sm:$0xff]
    %2121 = vst [vmem:[#allocation1] ss:$9 sm:$0xff] %v1899
    %2122 = vst [vmem:[%s2100] ss:$9 sm:$0xff] %v1900
    %2123 = vst [vmem:[%s2102] ss:$9 sm:$0xff] %v1901
    %2124 = vst [vmem:[%s2104] ss:$9 sm:$0xff] %v1880
    %2125 = vst [vmem:[%s2106] ss:$9 sm:$0xff] %v1902
    %2126 = vst [vmem:[%s2108] ss:$9 sm:$0xff] %v1903
    %2127 = vst [vmem:[%s2110] ss:$9 sm:$0xff] %v1904
    %2128 = vst [vmem:[%s2112] ss:$9 sm:$0xff] %v1905
    %v2129 = vld [vmem:[#allocation1] sm:$0xff]
    %2130 = vst [vmem:[#allocation1] ss:$9 sm:$0xff] %v1906
    %2131 = vst [vmem:[%s2100] ss:$9 sm:$0xff] %v1907
    %2132 = vst [vmem:[%s2102] ss:$9 sm:$0xff] %v1908
    %2133 = vst [vmem:[%s2104] ss:$9 sm:$0xff] %v1882
    %2134 = vst [vmem:[%s2106] ss:$9 sm:$0xff] %v1909
    %v2135 = vld [vmem:[#allocation1] sm:$0xff]
    %v2140 = vpack.c.bf16 %v2114, %v2114
    %v2141 = vpack.c.bf16 %v2120, %v2120
    %v2142 = vpack.c.bf16 %v2129, %v2129
    %v2143 = vpack.c.bf16 %v2135, %v2135
    %2144 = vst [vmem:[#allocation1] ss:$9 sm:$0xff] %v1942
    %s2145 = scalar_lea.vmem [#allocation1], 1
    %2146 = vst [vmem:[%s2145] ss:$9 sm:$0xff] %v1955
    %s2147 = scalar_lea.vmem [#allocation1], 2
    %2148 = vst [vmem:[%s2147] ss:$9 sm:$0xff] %v1956
    %s2149 = scalar_lea.vmem [#allocation1], 3
    %2150 = vst [vmem:[%s2149] ss:$9 sm:$0xff] %v1957
    %s2151 = scalar_lea.vmem [#allocation1], 4
    %2152 = vst [vmem:[%s2151] ss:$9 sm:$0xff] %v1958
    %s2153 = scalar_lea.vmem [#allocation1], 5
    %2154 = vst [vmem:[%s2153] ss:$9 sm:$0xff] %v1959
    %s2155 = scalar_lea.vmem [#allocation1], 6
    %2156 = vst [vmem:[%s2155] ss:$9 sm:$0xff] %v1960
    %s2157 = scalar_lea.vmem [#allocation1], 7
    %2158 = vst [vmem:[%s2157] ss:$9 sm:$0xff] %v1961
    %v2159 = vld [vmem:[#allocation1] sm:$0xff]
    %2160 = vst [vmem:[#allocation1] ss:$9 sm:$0xff] %v1944
    %2161 = vst [vmem:[%s2145] ss:$9 sm:$0xff] %v1962
    %2162 = vst [vmem:[%s2147] ss:$9 sm:$0xff] %v1963
    %2163 = vst [vmem:[%s2149] ss:$9 sm:$0xff] %v1964
    %2164 = vst [vmem:[%s2151] ss:$9 sm:$0xff] %v1965
    %v2165 = vld [vmem:[#allocation1] sm:$0xff]
    %2166 = vst [vmem:[#allocation1] ss:$9 sm:$0xff] %v1966
    %2167 = vst [vmem:[%s2145] ss:$9 sm:$0xff] %v1967
    %2168 = vst [vmem:[%s2147] ss:$9 sm:$0xff] %v1968
    %2169 = vst [vmem:[%s2149] ss:$9 sm:$0xff] %v1947
    %2170 = vst [vmem:[%s2151] ss:$9 sm:$0xff] %v1969
    %2171 = vst [vmem:[%s2153] ss:$9 sm:$0xff] %v1970
    %2172 = vst [vmem:[%s2155] ss:$9 sm:$0xff] %v1971
    %2173 = vst [vmem:[%s2157] ss:$9 sm:$0xff] %v1972
    %v2174 = vld [vmem:[#allocation1] sm:$0xff]
    %2175 = vst [vmem:[#allocation1] ss:$9 sm:$0xff] %v1973
    %2176 = vst [vmem:[%s2145] ss:$9 sm:$0xff] %v1974
    %2177 = vst [vmem:[%s2147] ss:$9 sm:$0xff] %v1975
    %2178 = vst [vmem:[%s2149] ss:$9 sm:$0xff] %v1949
    %2179 = vst [vmem:[%s2151] ss:$9 sm:$0xff] %v1976
    %v2180 = vld [vmem:[#allocation1] sm:$0xff]
    %v2185 = vpack.c.bf16 %v2159, %v2159
    %v2186 = vpack.c.bf16 %v2165, %v2165
    %v2187 = vpack.c.bf16 %v2174, %v2174
    %v2188 = vpack.c.bf16 %v2180, %v2180
    %v2191 = vunpack.c.l.b16 %v2140
    %v2192 = vunpack.c.l.b16 %v2141
    %v2193 = vpack.c.b16 %v2192, %v2191
    %v2196 = vunpack.c.l.b16 %v2185
    %v2197 = vunpack.c.l.b16 %v2186
    %v2198 = vpack.c.b16 %v2197, %v2196
    %v2200 = vsel %vm508, %v2193, 0
    %v2203 = vsel %vm508, %v2198, 0
    %2205 = vmatpush.bf16.xpose.msra.mxu0 0
    %2206 = vmatpush.bf16.xpose.msra.mxu0 0
    %2207 = vmatpush.bf16.xpose.msra.mxu0 0
    %2208 = vmatpush.bf16.xpose.msra.mxu0 0
    %2209 = vmatpush.bf16.xpose.msra.mxu0 0
    %2210 = vmatpush.bf16.xpose.msra.mxu0 0
    %2211 = vmatpush.bf16.xpose.msra.mxu0 0
    %2212 = vmatpush.bf16.xpose.msra.mxu0 %v2203
    %2213 = vmatmul.bf16.gmra.mxu0 %v2200
    %v2214 = vpop.f32.mrf.mxu0
    %v2215 = vadd.f32 0.0, %v2214
    %v2216 = vpop.f32.mrf.mxu0
    %v2217 = vadd.f32 0.0, %v2216
    %2218 = vdwg.mxu0
    %v2221 = vunpack.c.l.b16 %v2142
    %v2222 = vunpack.c.l.b16 %v2143
    %v2223 = vpack.c.b16 %v2222, %v2221
    %v2226 = vunpack.c.l.b16 %v2187
    %v2227 = vunpack.c.l.b16 %v2188
    %v2228 = vpack.c.b16 %v2227, %v2226
    %v2230 = vsel %vm508, %v2223, 0
    %v2233 = vsel %vm508, %v2228, 0
    %2235 = vmatpush.bf16.xpose.msra.mxu0 0
    %2236 = vmatpush.bf16.xpose.msra.mxu0 0
    %2237 = vmatpush.bf16.xpose.msra.mxu0 0
    %2238 = vmatpush.bf16.xpose.msra.mxu0 0
    %2239 = vmatpush.bf16.xpose.msra.mxu0 0
    %2240 = vmatpush.bf16.xpose.msra.mxu0 0
    %2241 = vmatpush.bf16.xpose.msra.mxu0 0
    %2242 = vmatpush.bf16.xpose.msra.mxu0 %v2233
    %2243 = vmatmul.bf16.gmra.mxu0 %v2230
    %v2244 = vpop.f32.mrf.mxu0
    %v2245 = vadd.f32 0.0, %v2244
    %v2246 = vpop.f32.mrf.mxu0
    %v2247 = vadd.f32 0.0, %v2246
    %2248 = vdwg.mxu0
    %v2249 = vmul.f32 %v2215, 0.25
    %v2250 = vmul.f32 %v2217, 0.25
    %v2251 = vmul.f32 %v2245, 0.25
    %v2252 = vmul.f32 %v2247, 0.25
    %v2253 = vsel %vm563, %v2249, -inf
    %2254 = vmax.xlane.f32.xlu0 %v2253
    %v2255 = vpop.xlane.xlu0 %2254
    %v2256 = vsel %vm567, %v2250, -inf
    %2257 = vmax.xlane.f32.xlu0 %v2256
    %v2258 = vpop.xlane.xlu0 %2257
    %v2259 = vsel %vm563, %v2251, -inf
    %2260 = vmax.xlane.f32.xlu0 %v2259
    %v2261 = vpop.xlane.xlu0 %2260
    %v2262 = vsel %vm567, %v2252, -inf
    %2263 = vmax.xlane.f32.xlu0 %v2262
    %v2264 = vpop.xlane.xlu0 %2263
    %v2265 = vsub.f32 %v2249, %v2255
    %v2266 = vsub.f32 %v2250, %v2258
    %v2267 = vsub.f32 %v2251, %v2261
    %v2268 = vsub.f32 %v2252, %v2264
    %v2269 = vmul.f32 %v2265, 1.442695
    %v2270 = vpow.pop %v2269
    %v2271 = vmul.f32 %v2266, 1.442695
    %v2272 = vpow.pop %v2271
    %v2273 = vmul.f32 %v2267, 1.442695
    %v2274 = vpow.pop %v2273
    %v2275 = vmul.f32 %v2268, 1.442695
    %v2276 = vpow.pop %v2275
    %v2277 = vsel %vm563, %v2270, 0.0
    %2278 = vadd.xlane.f32.xlu0 %v2277
    %v2279 = vpop.xlane.xlu0 %2278
    %v2280 = vsel %vm567, %v2272, 0.0
    %2281 = vadd.xlane.f32.xlu0 %v2280
    %v2282 = vpop.xlane.xlu0 %2281
    %v2283 = vsel %vm563, %v2274, 0.0
    %2284 = vadd.xlane.f32.xlu0 %v2283
    %v2285 = vpop.xlane.xlu0 %2284
    %v2286 = vsel %vm567, %v2276, 0.0
    %2287 = vadd.xlane.f32.xlu0 %v2286
    %v2288 = vpop.xlane.xlu0 %2287
    %v2289 = vrcp.pop %v2279
    %v2290 = vrcp.pop %v2282
    %v2291 = vrcp.pop %v2285
    %v2292 = vrcp.pop %v2288
    %v2293 = vmul.f32 %v2270, %v2289
    %v2294 = vmul.f32 %v2272, %v2290
    %v2295 = vmul.f32 %v2274, %v2291
    %v2296 = vmul.f32 %v2276, %v2292
    %v2297 = vpack.c.bf16 %v2293, %v2293
    %v2298 = vpack.c.bf16 %v2294, %v2294
    %v2299 = vpack.c.bf16 %v2295, %v2295
    %v2300 = vpack.c.bf16 %v2296, %v2296
    %v2303 = vunpack.c.l.b16 %v2297
    %v2304 = vunpack.c.l.b16 %v2298
    %v2305 = vpack.c.b16 %v2304, %v2303
    %v2306 = vpack.i.b16 %v2074, %v2073
    %v2307 = vpack.i.b16 %v2076, %v2075
    %v2308 = vpack.i.b16 %v2078, %v2077
    %v2309 = vpack.i.b16 %v2080, %v2079
    %v2310 = vpack.i.b16 %v2082, %v2081
    %v2311 = vpack.i.b16 %v2084, %v2083
    %2314 = vst [vmem:[#allocation1] ss:$9 sm:$0xff] %v2306
    %s2316 = scalar_lea.vmem [#allocation1], 1
    %2317 = vst [vmem:[%s2316] ss:$9 sm:$0xff] %v2307
    %s2319 = scalar_lea.vmem [#allocation1], 2
    %2320 = vst [vmem:[%s2319] ss:$9 sm:$0xff] %v2308
    %s2322 = scalar_lea.vmem [#allocation1], 3
    %2323 = vst [vmem:[%s2322] ss:$9 sm:$0xff] %v2309
    %s2325 = scalar_lea.vmem [#allocation1], 4
    %2326 = vst [vmem:[%s2325] ss:$9 sm:$0xff] %v2310
    %s2328 = scalar_lea.vmem [#allocation1], 5
    %2329 = vst [vmem:[%s2328] ss:$9 sm:$0xff] %v2311
    %s2331 = scalar_lea.vmem [#allocation1], 6
    %2332 = vst [vmem:[%s2331] ss:$9 sm:$0xff] %v2085
    %v2333 = vld [vmem:[#allocation1] sm:$0xff]
    %v2335 = vsel %vm563, %v2305, 0
    %v2337 = vand.u32 %v2333, %v652
    %2339 = vmatpush.bf16.msra.mxu0 0
    %2340 = vmatpush.bf16.msra.mxu0 0
    %2341 = vmatpush.bf16.msra.mxu0 0
    %2342 = vmatpush.bf16.msra.mxu0 0
    %2343 = vmatpush.bf16.msra.mxu0 0
    %2344 = vmatpush.bf16.msra.mxu0 0
    %2345 = vmatpush.bf16.msra.mxu0 0
    %2346 = vmatpush.bf16.msra.mxu0 %v2337
    %2347 = vmatmul.bf16.gmra.mxu0 %v2335
    %v2348 = vpop.f32.mrf.mxu0
    %v2349 = vadd.f32 0.0, %v2348
    %v2350 = vpop.f32.mrf.mxu0
    %v2351 = vadd.f32 0.0, %v2350
    %2352 = vdwg.mxu0
    %v2355 = vunpack.c.l.b16 %v2299
    %v2356 = vunpack.c.l.b16 %v2300
    %v2357 = vpack.c.b16 %v2356, %v2355
    %v2358 = vpack.i.b16 %v2087, %v2086
    %v2359 = vpack.i.b16 %v2089, %v2088
    %v2360 = vpack.i.b16 %v2091, %v2090
    %v2361 = vpack.i.b16 %v2093, %v2092
    %v2362 = vpack.i.b16 %v2095, %v2094
    %v2363 = vpack.i.b16 %v2097, %v2096
    %2366 = vst [vmem:[#allocation1] ss:$9 sm:$0xff] %v2358
    %s2368 = scalar_lea.vmem [#allocation1], 1
    %2369 = vst [vmem:[%s2368] ss:$9 sm:$0xff] %v2359
    %s2371 = scalar_lea.vmem [#allocation1], 2
    %2372 = vst [vmem:[%s2371] ss:$9 sm:$0xff] %v2360
    %s2374 = scalar_lea.vmem [#allocation1], 3
    %2375 = vst [vmem:[%s2374] ss:$9 sm:$0xff] %v2361
    %s2377 = scalar_lea.vmem [#allocation1], 4
    %2378 = vst [vmem:[%s2377] ss:$9 sm:$0xff] %v2362
    %s2380 = scalar_lea.vmem [#allocation1], 5
    %2381 = vst [vmem:[%s2380] ss:$9 sm:$0xff] %v2363
    %s2383 = scalar_lea.vmem [#allocation1], 6
    %2384 = vst [vmem:[%s2383] ss:$9 sm:$0xff] %v2098
    %v2385 = vld [vmem:[#allocation1] sm:$0xff]
    %v2387 = vsel %vm563, %v2357, 0
    %v2389 = vand.u32 %v2385, %v652
    %2391 = vmatpush.bf16.msra.mxu0 0
    %2392 = vmatpush.bf16.msra.mxu0 0
    %2393 = vmatpush.bf16.msra.mxu0 0
    %2394 = vmatpush.bf16.msra.mxu0 0
    %2395 = vmatpush.bf16.msra.mxu0 0
    %2396 = vmatpush.bf16.msra.mxu0 0
    %2397 = vmatpush.bf16.msra.mxu0 0
    %2398 = vmatpush.bf16.msra.mxu0 %v2389
    %2399 = vmatmul.bf16.gmra.mxu0 %v2387
    %v2400 = vpop.f32.mrf.mxu0
    %v2401 = vadd.f32 0.0, %v2400
    %v2402 = vpop.f32.mrf.mxu0
    %v2403 = vadd.f32 0.0, %v2402
    %2404 = vdwg.mxu0
    %v2409 = vrot.slane %v2349, 1
    %v2410 = vrot.slane %v2349, 2
    %v2411 = vrot.slane %v2349, 3
    %v2412 = vrot.slane %v2349, 4
    %v2413 = vrot.slane %v2349, 5
    %v2414 = vrot.slane %v2349, 6
    %v2415 = vrot.slane %v2349, 7
    %v2416 = vrot.slane %v2351, 1
    %v2417 = vrot.slane %v2351, 2
    %v2418 = vrot.slane %v2351, 3
    %v2419 = vrot.slane %v2351, 4
    %v2420 = vrot.slane %v2401, 1
    %v2421 = vrot.slane %v2401, 2
    %v2422 = vrot.slane %v2401, 3
    %v2423 = vrot.slane %v2401, 4
    %v2424 = vrot.slane %v2401, 5
    %v2425 = vrot.slane %v2401, 6
    %v2426 = vrot.slane %v2401, 7
    %v2427 = vrot.slane %v2403, 1
    %v2428 = vrot.slane %v2403, 2
    %v2429 = vrot.slane %v2403, 3
    %v2430 = vrot.slane %v2403, 4
    %2431 = vst [vmem:[#allocation1] ss:$9 sm:$0xff] %v2349
    %s2432 = scalar_lea.vmem [#allocation1], 1
    %2433 = vst [vmem:[%s2432] ss:$9 sm:$0xff] %v2409
    %s2434 = scalar_lea.vmem [#allocation1], 2
    %2435 = vst [vmem:[%s2434] ss:$9 sm:$0xff] %v2410
    %s2436 = scalar_lea.vmem [#allocation1], 3
    %2437 = vst [vmem:[%s2436] ss:$9 sm:$0xff] %v2411
    %s2438 = scalar_lea.vmem [#allocation1], 4
    %2439 = vst [vmem:[%s2438] ss:$9 sm:$0xff] %v2412
    %s2440 = scalar_lea.vmem [#allocation1], 5
    %2441 = vst [vmem:[%s2440] ss:$9 sm:$0xff] %v2413
    %s2442 = scalar_lea.vmem [#allocation1], 6
    %2443 = vst [vmem:[%s2442] ss:$9 sm:$0xff] %v2414
    %s2444 = scalar_lea.vmem [#allocation1], 7
    %2445 = vst [vmem:[%s2444] ss:$9 sm:$0xff] %v2415
    %v2446 = vld [vmem:[#allocation1] sm:$0xff]
    %2447 = vst [vmem:[#allocation1] ss:$9 sm:$0xff] %v2351
    %2448 = vst [vmem:[%s2432] ss:$9 sm:$0xff] %v2416
    %2449 = vst [vmem:[%s2434] ss:$9 sm:$0xff] %v2417
    %2450 = vst [vmem:[%s2436] ss:$9 sm:$0xff] %v2418
    %2451 = vst [vmem:[%s2438] ss:$9 sm:$0xff] %v2419
    %2452 = vst [vmem:[%s2440] ss:$9 sm:$0xff] %v2401
    %2453 = vst [vmem:[%s2442] ss:$9 sm:$0xff] %v2420
    %2454 = vst [vmem:[%s2444] ss:$9 sm:$0xff] %v2421
    %v2455 = vld [vmem:[#allocation1] sm:$0xff]
    %2456 = vst [vmem:[#allocation1] ss:$9 sm:$0xff] %v2422
    %2457 = vst [vmem:[%s2432] ss:$9 sm:$0xff] %v2423
    %2458 = vst [vmem:[%s2434] ss:$9 sm:$0xff] %v2424
    %2459 = vst [vmem:[%s2436] ss:$9 sm:$0xff] %v2425
    %2460 = vst [vmem:[%s2438] ss:$9 sm:$0xff] %v2426
    %2461 = vst [vmem:[%s2440] ss:$9 sm:$0xff] %v2403
    %2462 = vst [vmem:[%s2442] ss:$9 sm:$0xff] %v2427
    %2463 = vst [vmem:[%s2444] ss:$9 sm:$0xff] %v2428
    %v2464 = vld [vmem:[#allocation1] sm:$0xff]
    %2465 = vst [vmem:[#allocation1] ss:$9 sm:$0xff] %v2429
    %2466 = vst [vmem:[%s2432] ss:$9 sm:$0xff] %v2430
    %v2467 = vld [vmem:[#allocation1] sm:$0xff]
    %v2472 = vpack.c.bf16 %v2455, %v2446
    %v2473 = vpack.c.bf16 %v2467, %v2464
    %s2474 = scalar_lea.vmem %s11, 16
    %v2475 = vld [vmem:[%s2474] sm:$0xf]
    %v2476 = vld [vmem:[%s2474 + $0x4] sm:$0xf]
    %s2477 = scalar_lea.vmem %s5, 48
    %v2478 = vld [vmem:[%s2477] sm:$0xf]
    %v2479 = vld [vmem:[%s2477 + $0x4] sm:$0xf]
    %v2480 = vld [vmem:[%s2477 + $0x8] sm:$0xf]
    %v2481 = vld [vmem:[%s2477 + $0xc] sm:$0xf]
    %s2482 = scalar_lea.vmem %s6, 3
    %v2483 = vld [vmem:[%s2482] sm:$0x1]
    %v2485 = vperm.slane %v2483, 0
    %v2491 = vunpack.c.l.b16 %v2478
    %v2492 = vunpack.c.l.b16 %v2479
    %v2493 = vunpack.c.l.b16 %v2480
    %v2494 = vunpack.c.l.b16 %v2481
    %v2495 = vpack.c.b16 %v2492, %v2491
    %v2496 = vpack.c.b16 %v2494, %v2493
    %2499 = vmatpush.bf16.msra.mxu0 0
    %2500 = vmatpush.bf16.msra.mxu0 0
    %2501 = vmatpush.bf16.msra.mxu0 0
    %2502 = vmatpush.bf16.msra.mxu0 0
    %2503 = vmatpush.bf16.msra.mxu0 0
    %2504 = vmatpush.bf16.msra.mxu0 0
    %2505 = vmatpush.bf16.msra.mxu0 %v2496
    %2506 = vmatpush.bf16.msra.mxu0 %v2495
    %2507 = vmatmul.bf16.gmra.mxu0 %v1860
    %v2508 = vpop.f32.mrf.mxu0
    %v2509 = vadd.f32 %v2485, %v2508
    %v2510 = vpop.f32.mrf.mxu0
    %v2511 = vadd.f32 %v2485, %v2510
    %2512 = vmatmul.bf16.gmra.mxu0 %v1863
    %v2513 = vpop.f32.mrf.mxu0
    %v2514 = vadd.f32 %v2485, %v2513
    %v2515 = vpop.f32.mrf.mxu0
    %v2516 = vadd.f32 %v2485, %v2515
    %2517 = vdwg.mxu0
    %v2522 = vrot.slane %v2509, 1
    %v2523 = vrot.slane %v2509, 2
    %v2524 = vrot.slane %v2509, 3
    %v2525 = vrot.slane %v2509, 4
    %v2526 = vrot.slane %v2509, 5
    %v2527 = vrot.slane %v2509, 6
    %v2528 = vrot.slane %v2509, 7
    %v2529 = vrot.slane %v2511, 1
    %v2530 = vrot.slane %v2511, 2
    %v2531 = vrot.slane %v2511, 3
    %v2532 = vrot.slane %v2511, 4
    %v2533 = vrot.slane %v2511, 5
    %v2534 = vrot.slane %v2511, 6
    %v2535 = vrot.slane %v2511, 7
    %v2536 = vrot.slane %v2514, 1
    %v2537 = vrot.slane %v2514, 2
    %v2538 = vrot.slane %v2514, 3
    %v2539 = vrot.slane %v2514, 4
    %v2540 = vrot.slane %v2514, 5
    %v2541 = vrot.slane %v2514, 6
    %v2542 = vrot.slane %v2514, 7
    %v2543 = vrot.slane %v2516, 1
    %s2544 = scalar_lea.vmem %s7, 48
    %v2545 = vld [vmem:[%s2544] sm:$0xf]
    %v2546 = vld [vmem:[%s2544 + $0x4] sm:$0xf]
    %v2547 = vld [vmem:[%s2544 + $0x8] sm:$0xf]
    %v2548 = vld [vmem:[%s2544 + $0xc] sm:$0xf]
    %s2549 = scalar_lea.vmem %s8, 3
    %v2550 = vld [vmem:[%s2549] sm:$0x1]
    %v2552 = vperm.slane %v2550, 0
    %v2558 = vunpack.c.l.b16 %v2545
    %v2559 = vunpack.c.l.b16 %v2546
    %v2560 = vunpack.c.l.b16 %v2547
    %v2561 = vunpack.c.l.b16 %v2548
    %v2562 = vpack.c.b16 %v2559, %v2558
    %v2563 = vpack.c.b16 %v2561, %v2560
    %2566 = vmatpush.bf16.msra.mxu0 0
    %2567 = vmatpush.bf16.msra.mxu0 0
    %2568 = vmatpush.bf16.msra.mxu0 0
    %2569 = vmatpush.bf16.msra.mxu0 0
    %2570 = vmatpush.bf16.msra.mxu0 0
    %2571 = vmatpush.bf16.msra.mxu0 0
    %2572 = vmatpush.bf16.msra.mxu0 %v2563
    %2573 = vmatpush.bf16.msra.mxu0 %v2562
    %2574 = vmatmul.bf16.gmra.mxu0 %v1860
    %v2575 = vpop.f32.mrf.mxu0
    %v2576 = vadd.f32 %v2552, %v2575
    %v2577 = vpop.f32.mrf.mxu0
    %v2578 = vadd.f32 %v2552, %v2577
    %2579 = vmatmul.bf16.gmra.mxu0 %v1863
    %v2580 = vpop.f32.mrf.mxu0
    %v2581 = vadd.f32 %v2552, %v2580
    %v2582 = vpop.f32.mrf.mxu0
    %v2583 = vadd.f32 %v2552, %v2582
    %2584 = vdwg.mxu0
    %v2589 = vrot.slane %v2576, 1
    %v2590 = vrot.slane %v2576, 2
    %v2591 = vrot.slane %v2576, 3
    %v2592 = vrot.slane %v2576, 4
    %v2593 = vrot.slane %v2576, 5
    %v2594 = vrot.slane %v2576, 6
    %v2595 = vrot.slane %v2576, 7
    %v2596 = vrot.slane %v2578, 1
    %v2597 = vrot.slane %v2578, 2
    %v2598 = vrot.slane %v2578, 3
    %v2599 = vrot.slane %v2578, 4
    %v2600 = vrot.slane %v2578, 5
    %v2601 = vrot.slane %v2578, 6
    %v2602 = vrot.slane %v2578, 7
    %v2603 = vrot.slane %v2581, 1
    %v2604 = vrot.slane %v2581, 2
    %v2605 = vrot.slane %v2581, 3
    %v2606 = vrot.slane %v2581, 4
    %v2607 = vrot.slane %v2581, 5
    %v2608 = vrot.slane %v2581, 6
    %v2609 = vrot.slane %v2581, 7
    %v2610 = vrot.slane %v2583, 1
    %s2611 = scalar_lea.vmem %s9, 48
    %v2612 = vld [vmem:[%s2611] sm:$0xf]
    %v2613 = vld [vmem:[%s2611 + $0x4] sm:$0xf]
    %v2614 = vld [vmem:[%s2611 + $0x8] sm:$0xf]
    %v2615 = vld [vmem:[%s2611 + $0xc] sm:$0xf]
    %s2616 = scalar_lea.vmem %s10, 3
    %v2617 = vld [vmem:[%s2616] sm:$0x1]
    %v2619 = vperm.slane %v2617, 0
    %v2625 = vunpack.c.l.b16 %v2612
    %v2626 = vunpack.c.l.b16 %v2613
    %v2627 = vunpack.c.l.b16 %v2614
    %v2628 = vunpack.c.l.b16 %v2615
    %v2629 = vpack.c.b16 %v2626, %v2625
    %v2630 = vpack.c.b16 %v2628, %v2627
    %2633 = vmatpush.bf16.msra.mxu0 0
    %2634 = vmatpush.bf16.msra.mxu0 0
    %2635 = vmatpush.bf16.msra.mxu0 0
    %2636 = vmatpush.bf16.msra.mxu0 0
    %2637 = vmatpush.bf16.msra.mxu0 0
    %2638 = vmatpush.bf16.msra.mxu0 0
    %2639 = vmatpush.bf16.msra.mxu0 %v2630
    %2640 = vmatpush.bf16.msra.mxu0 %v2629
    %2641 = vmatmul.bf16.gmra.mxu0 %v1860
    %v2642 = vpop.f32.mrf.mxu0
    %v2643 = vadd.f32 %v2619, %v2642
    %v2644 = vpop.f32.mrf.mxu0
    %v2645 = vadd.f32 %v2619, %v2644
    %2646 = vmatmul.bf16.gmra.mxu0 %v1863
    %v2647 = vpop.f32.mrf.mxu0
    %v2648 = vadd.f32 %v2619, %v2647
    %v2649 = vpop.f32.mrf.mxu0
    %v2650 = vadd.f32 %v2619, %v2649
    %2651 = vdwg.mxu0
    %v2652 = vpack.c.bf16 %v2643, %v2643
    %v2653 = vpack.c.bf16 %v2645, %v2645
    %v2654 = vpack.c.bf16 %v2648, %v2648
    %v2655 = vpack.c.bf16 %v2650, %v2650
    %v2660 = vrot.slane %v2652, 3
    %v2661 = vrot.slane %v2653, 3
    %v2662 = vrot.slane %v2654, 3
    %v2663 = vrot.slane %v2655, 3
    %v2666 = vsel %vm335, %v2652, %v2660
    %v2668 = vsel %vm340, %v2652, %v2660
    %v2670 = vrot.slane %v2668, 1
    %v2671 = vsel %vm344, %v2652, %v2660
    %v2673 = vrot.slane %v2671, 2
    %v2674 = vsel %vm348, %v2652, %v2660
    %v2676 = vrot.slane %v2674, 3
    %v2679 = vsel %vm335, %v2653, %v2661
    %v2681 = vsel %vm340, %v2653, %v2661
    %v2683 = vrot.slane %v2681, 1
    %v2684 = vsel %vm344, %v2653, %v2661
    %v2686 = vrot.slane %v2684, 2
    %v2687 = vsel %vm348, %v2653, %v2661
    %v2689 = vrot.slane %v2687, 3
    %v2692 = vsel %vm335, %v2654, %v2662
    %v2694 = vsel %vm340, %v2654, %v2662
    %v2696 = vrot.slane %v2694, 1
    %v2697 = vsel %vm344, %v2654, %v2662
    %v2699 = vrot.slane %v2697, 2
    %v2700 = vsel %vm348, %v2654, %v2662
    %v2702 = vrot.slane %v2700, 3
    %v2705 = vsel %vm335, %v2655, %v2663
    %v2707 = vunpack.i.l.s16 %v2666
    %v2708 = vunpack.i.h.s16 %v2666
    %v2709 = vunpack.i.l.s16 %v2670
    %v2710 = vunpack.i.h.s16 %v2670
    %v2711 = vunpack.i.l.s16 %v2673
    %v2712 = vunpack.i.h.s16 %v2673
    %v2713 = vunpack.i.l.s16 %v2676
    %v2714 = vunpack.i.h.s16 %v2676
    %v2715 = vunpack.i.l.s16 %v2679
    %v2716 = vunpack.i.h.s16 %v2679
    %v2717 = vunpack.i.l.s16 %v2683
    %v2718 = vunpack.i.h.s16 %v2683
    %v2719 = vunpack.i.l.s16 %v2686
    %v2720 = vunpack.i.h.s16 %v2686
    %v2721 = vunpack.i.l.s16 %v2689
    %v2722 = vunpack.i.h.s16 %v2689
    %v2723 = vunpack.i.l.s16 %v2692
    %v2724 = vunpack.i.h.s16 %v2692
    %v2725 = vunpack.i.l.s16 %v2696
    %v2726 = vunpack.i.h.s16 %v2696
    %v2727 = vunpack.i.l.s16 %v2699
    %v2728 = vunpack.i.h.s16 %v2699
    %v2729 = vunpack.i.l.s16 %v2702
    %v2730 = vunpack.i.h.s16 %v2702
    %v2731 = vunpack.i.l.s16 %v2705
    %v2732 = vunpack.i.h.s16 %v2705
    %2733 = vst [vmem:[#allocation1] ss:$9 sm:$0xff] %v2509
    %s2734 = scalar_lea.vmem [#allocation1], 1
    %2735 = vst [vmem:[%s2734] ss:$9 sm:$0xff] %v2522
    %s2736 = scalar_lea.vmem [#allocation1], 2
    %2737 = vst [vmem:[%s2736] ss:$9 sm:$0xff] %v2523
    %s2738 = scalar_lea.vmem [#allocation1], 3
    %2739 = vst [vmem:[%s2738] ss:$9 sm:$0xff] %v2524
    %s2740 = scalar_lea.vmem [#allocation1], 4
    %2741 = vst [vmem:[%s2740] ss:$9 sm:$0xff] %v2525
    %s2742 = scalar_lea.vmem [#allocation1], 5
    %2743 = vst [vmem:[%s2742] ss:$9 sm:$0xff] %v2526
    %s2744 = scalar_lea.vmem [#allocation1], 6
    %2745 = vst [vmem:[%s2744] ss:$9 sm:$0xff] %v2527
    %s2746 = scalar_lea.vmem [#allocation1], 7
    %2747 = vst [vmem:[%s2746] ss:$9 sm:$0xff] %v2528
    %v2748 = vld [vmem:[#allocation1] sm:$0xff]
    %2749 = vst [vmem:[#allocation1] ss:$9 sm:$0xff] %v2511
    %2750 = vst [vmem:[%s2734] ss:$9 sm:$0xff] %v2529
    %2751 = vst [vmem:[%s2736] ss:$9 sm:$0xff] %v2530
    %2752 = vst [vmem:[%s2738] ss:$9 sm:$0xff] %v2531
    %2753 = vst [vmem:[%s2740] ss:$9 sm:$0xff] %v2532
    %v2754 = vld [vmem:[#allocation1] sm:$0xff]
    %2755 = vst [vmem:[#allocation1] ss:$9 sm:$0xff] %v2533
    %2756 = vst [vmem:[%s2734] ss:$9 sm:$0xff] %v2534
    %2757 = vst [vmem:[%s2736] ss:$9 sm:$0xff] %v2535
    %2758 = vst [vmem:[%s2738] ss:$9 sm:$0xff] %v2514
    %2759 = vst [vmem:[%s2740] ss:$9 sm:$0xff] %v2536
    %2760 = vst [vmem:[%s2742] ss:$9 sm:$0xff] %v2537
    %2761 = vst [vmem:[%s2744] ss:$9 sm:$0xff] %v2538
    %2762 = vst [vmem:[%s2746] ss:$9 sm:$0xff] %v2539
    %v2763 = vld [vmem:[#allocation1] sm:$0xff]
    %2764 = vst [vmem:[#allocation1] ss:$9 sm:$0xff] %v2540
    %2765 = vst [vmem:[%s2734] ss:$9 sm:$0xff] %v2541
    %2766 = vst [vmem:[%s2736] ss:$9 sm:$0xff] %v2542
    %2767 = vst [vmem:[%s2738] ss:$9 sm:$0xff] %v2516
    %2768 = vst [vmem:[%s2740] ss:$9 sm:$0xff] %v2543
    %v2769 = vld [vmem:[#allocation1] sm:$0xff]
    %v2774 = vpack.c.bf16 %v2748, %v2748
    %v2775 = vpack.c.bf16 %v2754, %v2754
    %v2776 = vpack.c.bf16 %v2763, %v2763
    %v2777 = vpack.c.bf16 %v2769, %v2769
    %2778 = vst [vmem:[#allocation1] ss:$9 sm:$0xff] %v2576
    %s2779 = scalar_lea.vmem [#allocation1], 1
    %2780 = vst [vmem:[%s2779] ss:$9 sm:$0xff] %v2589
    %s2781 = scalar_lea.vmem [#allocation1], 2
    %2782 = vst [vmem:[%s2781] ss:$9 sm:$0xff] %v2590
    %s2783 = scalar_lea.vmem [#allocation1], 3
    %2784 = vst [vmem:[%s2783] ss:$9 sm:$0xff] %v2591
    %s2785 = scalar_lea.vmem [#allocation1], 4
    %2786 = vst [vmem:[%s2785] ss:$9 sm:$0xff] %v2592
    %s2787 = scalar_lea.vmem [#allocation1], 5
    %2788 = vst [vmem:[%s2787] ss:$9 sm:$0xff] %v2593
    %s2789 = scalar_lea.vmem [#allocation1], 6
    %2790 = vst [vmem:[%s2789] ss:$9 sm:$0xff] %v2594
    %s2791 = scalar_lea.vmem [#allocation1], 7
    %2792 = vst [vmem:[%s2791] ss:$9 sm:$0xff] %v2595
    %v2793 = vld [vmem:[#allocation1] sm:$0xff]
    %2794 = vst [vmem:[#allocation1] ss:$9 sm:$0xff] %v2578
    %2795 = vst [vmem:[%s2779] ss:$9 sm:$0xff] %v2596
    %2796 = vst [vmem:[%s2781] ss:$9 sm:$0xff] %v2597
    %2797 = vst [vmem:[%s2783] ss:$9 sm:$0xff] %v2598
    %2798 = vst [vmem:[%s2785] ss:$9 sm:$0xff] %v2599
    %v2799 = vld [vmem:[#allocation1] sm:$0xff]
    %2800 = vst [vmem:[#allocation1] ss:$9 sm:$0xff] %v2600
    %2801 = vst [vmem:[%s2779] ss:$9 sm:$0xff] %v2601
    %2802 = vst [vmem:[%s2781] ss:$9 sm:$0xff] %v2602
    %2803 = vst [vmem:[%s2783] ss:$9 sm:$0xff] %v2581
    %2804 = vst [vmem:[%s2785] ss:$9 sm:$0xff] %v2603
    %2805 = vst [vmem:[%s2787] ss:$9 sm:$0xff] %v2604
    %2806 = vst [vmem:[%s2789] ss:$9 sm:$0xff] %v2605
    %2807 = vst [vmem:[%s2791] ss:$9 sm:$0xff] %v2606
    %v2808 = vld [vmem:[#allocation1] sm:$0xff]
    %2809 = vst [vmem:[#allocation1] ss:$9 sm:$0xff] %v2607
    %2810 = vst [vmem:[%s2779] ss:$9 sm:$0xff] %v2608
    %2811 = vst [vmem:[%s2781] ss:$9 sm:$0xff] %v2609
    %2812 = vst [vmem:[%s2783] ss:$9 sm:$0xff] %v2583
    %2813 = vst [vmem:[%s2785] ss:$9 sm:$0xff] %v2610
    %v2814 = vld [vmem:[#allocation1] sm:$0xff]
    %v2819 = vpack.c.bf16 %v2793, %v2793
    %v2820 = vpack.c.bf16 %v2799, %v2799
    %v2821 = vpack.c.bf16 %v2808, %v2808
    %v2822 = vpack.c.bf16 %v2814, %v2814
    %v2825 = vunpack.c.l.b16 %v2774
    %v2826 = vunpack.c.l.b16 %v2775
    %v2827 = vpack.c.b16 %v2826, %v2825
    %v2830 = vunpack.c.l.b16 %v2819
    %v2831 = vunpack.c.l.b16 %v2820
    %v2832 = vpack.c.b16 %v2831, %v2830
    %v2834 = vsel %vm508, %v2827, 0
    %v2837 = vsel %vm508, %v2832, 0
    %2839 = vmatpush.bf16.xpose.msra.mxu0 0
    %2840 = vmatpush.bf16.xpose.msra.mxu0 0
    %2841 = vmatpush.bf16.xpose.msra.mxu0 0
    %2842 = vmatpush.bf16.xpose.msra.mxu0 0
    %2843 = vmatpush.bf16.xpose.msra.mxu0 0
    %2844 = vmatpush.bf16.xpose.msra.mxu0 0
    %2845 = vmatpush.bf16.xpose.msra.mxu0 0
    %2846 = vmatpush.bf16.xpose.msra.mxu0 %v2837
    %2847 = vmatmul.bf16.gmra.mxu0 %v2834
    %v2848 = vpop.f32.mrf.mxu0
    %v2849 = vadd.f32 0.0, %v2848
    %v2850 = vpop.f32.mrf.mxu0
    %v2851 = vadd.f32 0.0, %v2850
    %2852 = vdwg.mxu0
    %v2855 = vunpack.c.l.b16 %v2776
    %v2856 = vunpack.c.l.b16 %v2777
    %v2857 = vpack.c.b16 %v2856, %v2855
    %v2860 = vunpack.c.l.b16 %v2821
    %v2861 = vunpack.c.l.b16 %v2822
    %v2862 = vpack.c.b16 %v2861, %v2860
    %v2864 = vsel %vm508, %v2857, 0
    %v2867 = vsel %vm508, %v2862, 0
    %2869 = vmatpush.bf16.xpose.msra.mxu0 0
    %2870 = vmatpush.bf16.xpose.msra.mxu0 0
    %2871 = vmatpush.bf16.xpose.msra.mxu0 0
    %2872 = vmatpush.bf16.xpose.msra.mxu0 0
    %2873 = vmatpush.bf16.xpose.msra.mxu0 0
    %2874 = vmatpush.bf16.xpose.msra.mxu0 0
    %2875 = vmatpush.bf16.xpose.msra.mxu0 0
    %2876 = vmatpush.bf16.xpose.msra.mxu0 %v2867
    %2877 = vmatmul.bf16.gmra.mxu0 %v2864
    %v2878 = vpop.f32.mrf.mxu0
    %v2879 = vadd.f32 0.0, %v2878
    %v2880 = vpop.f32.mrf.mxu0
    %v2881 = vadd.f32 0.0, %v2880
    %2882 = vdwg.mxu0
    %v2883 = vmul.f32 %v2849, 0.25
    %v2884 = vmul.f32 %v2851, 0.25
    %v2885 = vmul.f32 %v2879, 0.25
    %v2886 = vmul.f32 %v2881, 0.25
    %v2887 = vsel %vm563, %v2883, -inf
    %2888 = vmax.xlane.f32.xlu0 %v2887
    %v2889 = vpop.xlane.xlu0 %2888
    %v2890 = vsel %vm567, %v2884, -inf
    %2891 = vmax.xlane.f32.xlu0 %v2890
    %v2892 = vpop.xlane.xlu0 %2891
    %v2893 = vsel %vm563, %v2885, -inf
    %2894 = vmax.xlane.f32.xlu0 %v2893
    %v2895 = vpop.xlane.xlu0 %2894
    %v2896 = vsel %vm567, %v2886, -inf
    %2897 = vmax.xlane.f32.xlu0 %v2896
    %v2898 = vpop.xlane.xlu0 %2897
    %v2899 = vsub.f32 %v2883, %v2889
    %v2900 = vsub.f32 %v2884, %v2892
    %v2901 = vsub.f32 %v2885, %v2895
    %v2902 = vsub.f32 %v2886, %v2898
    %v2903 = vmul.f32 %v2899, 1.442695
    %v2904 = vpow.pop %v2903
    %v2905 = vmul.f32 %v2900, 1.442695
    %v2906 = vpow.pop %v2905
    %v2907 = vmul.f32 %v2901, 1.442695
    %v2908 = vpow.pop %v2907
    %v2909 = vmul.f32 %v2902, 1.442695
    %v2910 = vpow.pop %v2909
    %v2911 = vsel %vm563, %v2904, 0.0
    %2912 = vadd.xlane.f32.xlu0 %v2911
    %v2913 = vpop.xlane.xlu0 %2912
    %v2914 = vsel %vm567, %v2906, 0.0
    %2915 = vadd.xlane.f32.xlu0 %v2914
    %v2916 = vpop.xlane.xlu0 %2915
    %v2917 = vsel %vm563, %v2908, 0.0
    %2918 = vadd.xlane.f32.xlu0 %v2917
    %v2919 = vpop.xlane.xlu0 %2918
    %v2920 = vsel %vm567, %v2910, 0.0
    %2921 = vadd.xlane.f32.xlu0 %v2920
    %v2922 = vpop.xlane.xlu0 %2921
    %v2923 = vrcp.pop %v2913
    %v2924 = vrcp.pop %v2916
    %v2925 = vrcp.pop %v2919
    %v2926 = vrcp.pop %v2922
    %v2927 = vmul.f32 %v2904, %v2923
    %v2928 = vmul.f32 %v2906, %v2924
    %v2929 = vmul.f32 %v2908, %v2925
    %v2930 = vmul.f32 %v2910, %v2926
    %v2931 = vpack.c.bf16 %v2927, %v2927
    %v2932 = vpack.c.bf16 %v2928, %v2928
    %v2933 = vpack.c.bf16 %v2929, %v2929
    %v2934 = vpack.c.bf16 %v2930, %v2930
    %v2937 = vunpack.c.l.b16 %v2931
    %v2938 = vunpack.c.l.b16 %v2932
    %v2939 = vpack.c.b16 %v2938, %v2937
    %v2940 = vpack.i.b16 %v2708, %v2707
    %v2941 = vpack.i.b16 %v2710, %v2709
    %v2942 = vpack.i.b16 %v2712, %v2711
    %v2943 = vpack.i.b16 %v2714, %v2713
    %v2944 = vpack.i.b16 %v2716, %v2715
    %v2945 = vpack.i.b16 %v2718, %v2717
    %2948 = vst [vmem:[#allocation1] ss:$9 sm:$0xff] %v2940
    %s2950 = scalar_lea.vmem [#allocation1], 1
    %2951 = vst [vmem:[%s2950] ss:$9 sm:$0xff] %v2941
    %s2953 = scalar_lea.vmem [#allocation1], 2
    %2954 = vst [vmem:[%s2953] ss:$9 sm:$0xff] %v2942
    %s2956 = scalar_lea.vmem [#allocation1], 3
    %2957 = vst [vmem:[%s2956] ss:$9 sm:$0xff] %v2943
    %s2959 = scalar_lea.vmem [#allocation1], 4
    %2960 = vst [vmem:[%s2959] ss:$9 sm:$0xff] %v2944
    %s2962 = scalar_lea.vmem [#allocation1], 5
    %2963 = vst [vmem:[%s2962] ss:$9 sm:$0xff] %v2945
    %s2965 = scalar_lea.vmem [#allocation1], 6
    %2966 = vst [vmem:[%s2965] ss:$9 sm:$0xff] %v2719
    %v2967 = vld [vmem:[#allocation1] sm:$0xff]
    %v2969 = vsel %vm563, %v2939, 0
    %v2971 = vand.u32 %v2967, %v652
    %2973 = vmatpush.bf16.msra.mxu0 0
    %2974 = vmatpush.bf16.msra.mxu0 0
    %2975 = vmatpush.bf16.msra.mxu0 0
    %2976 = vmatpush.bf16.msra.mxu0 0
    %2977 = vmatpush.bf16.msra.mxu0 0
    %2978 = vmatpush.bf16.msra.mxu0 0
    %2979 = vmatpush.bf16.msra.mxu0 0
    %2980 = vmatpush.bf16.msra.mxu0 %v2971
    %2981 = vmatmul.bf16.gmra.mxu0 %v2969
    %v2982 = vpop.f32.mrf.mxu0
    %v2983 = vadd.f32 0.0, %v2982
    %v2984 = vpop.f32.mrf.mxu0
    %v2985 = vadd.f32 0.0, %v2984
    %2986 = vdwg.mxu0
    %v2989 = vunpack.c.l.b16 %v2933
    %v2990 = vunpack.c.l.b16 %v2934
    %v2991 = vpack.c.b16 %v2990, %v2989
    %v2992 = vpack.i.b16 %v2721, %v2720
    %v2993 = vpack.i.b16 %v2723, %v2722
    %v2994 = vpack.i.b16 %v2725, %v2724
    %v2995 = vpack.i.b16 %v2727, %v2726
    %v2996 = vpack.i.b16 %v2729, %v2728
    %v2997 = vpack.i.b16 %v2731, %v2730
    %3000 = vst [vmem:[#allocation1] ss:$9 sm:$0xff] %v2992
    %s3002 = scalar_lea.vmem [#allocation1], 1
    %3003 = vst [vmem:[%s3002] ss:$9 sm:$0xff] %v2993
    %s3005 = scalar_lea.vmem [#allocation1], 2
    %3006 = vst [vmem:[%s3005] ss:$9 sm:$0xff] %v2994
    %s3008 = scalar_lea.vmem [#allocation1], 3
    %3009 = vst [vmem:[%s3008] ss:$9 sm:$0xff] %v2995
    %s3011 = scalar_lea.vmem [#allocation1], 4
    %3012 = vst [vmem:[%s3011] ss:$9 sm:$0xff] %v2996
    %s3014 = scalar_lea.vmem [#allocation1], 5
    %3015 = vst [vmem:[%s3014] ss:$9 sm:$0xff] %v2997
    %s3017 = scalar_lea.vmem [#allocation1], 6
    %3018 = vst [vmem:[%s3017] ss:$9 sm:$0xff] %v2732
    %v3019 = vld [vmem:[#allocation1] sm:$0xff]
    %v3021 = vsel %vm563, %v2991, 0
    %v3023 = vand.u32 %v3019, %v652
    %3025 = vmatpush.bf16.msra.mxu0 0
    %3026 = vmatpush.bf16.msra.mxu0 0
    %3027 = vmatpush.bf16.msra.mxu0 0
    %3028 = vmatpush.bf16.msra.mxu0 0
    %3029 = vmatpush.bf16.msra.mxu0 0
    %3030 = vmatpush.bf16.msra.mxu0 0
    %3031 = vmatpush.bf16.msra.mxu0 0
    %3032 = vmatpush.bf16.msra.mxu0 %v3023
    %3033 = vmatmul.bf16.gmra.mxu0 %v3021
    %v3034 = vpop.f32.mrf.mxu0
    %v3035 = vadd.f32 0.0, %v3034
    %v3036 = vpop.f32.mrf.mxu0
    %v3037 = vadd.f32 0.0, %v3036
    %3038 = vdwg.mxu0
    %v3043 = vrot.slane %v2983, 1
    %v3044 = vrot.slane %v2983, 2
    %v3045 = vrot.slane %v2983, 3
    %v3046 = vrot.slane %v2983, 4
    %v3047 = vrot.slane %v2983, 5
    %v3048 = vrot.slane %v2983, 6
    %v3049 = vrot.slane %v2983, 7
    %v3050 = vrot.slane %v2985, 1
    %v3051 = vrot.slane %v2985, 2
    %v3052 = vrot.slane %v2985, 3
    %v3053 = vrot.slane %v2985, 4
    %v3054 = vrot.slane %v3035, 1
    %v3055 = vrot.slane %v3035, 2
    %v3056 = vrot.slane %v3035, 3
    %v3057 = vrot.slane %v3035, 4
    %v3058 = vrot.slane %v3035, 5
    %v3059 = vrot.slane %v3035, 6
    %v3060 = vrot.slane %v3035, 7
    %v3061 = vrot.slane %v3037, 1
    %v3062 = vrot.slane %v3037, 2
    %v3063 = vrot.slane %v3037, 3
    %v3064 = vrot.slane %v3037, 4
    %3065 = vst [vmem:[#allocation1] ss:$9 sm:$0xff] %v2983
    %s3066 = scalar_lea.vmem [#allocation1], 1
    %3067 = vst [vmem:[%s3066] ss:$9 sm:$0xff] %v3043
    %s3068 = scalar_lea.vmem [#allocation1], 2
    %3069 = vst [vmem:[%s3068] ss:$9 sm:$0xff] %v3044
    %s3070 = scalar_lea.vmem [#allocation1], 3
    %3071 = vst [vmem:[%s3070] ss:$9 sm:$0xff] %v3045
    %s3072 = scalar_lea.vmem [#allocation1], 4
    %3073 = vst [vmem:[%s3072] ss:$9 sm:$0xff] %v3046
    %s3074 = scalar_lea.vmem [#allocation1], 5
    %3075 = vst [vmem:[%s3074] ss:$9 sm:$0xff] %v3047
    %s3076 = scalar_lea.vmem [#allocation1], 6
    %3077 = vst [vmem:[%s3076] ss:$9 sm:$0xff] %v3048
    %s3078 = scalar_lea.vmem [#allocation1], 7
    %3079 = vst [vmem:[%s3078] ss:$9 sm:$0xff] %v3049
    %v3080 = vld [vmem:[#allocation1] sm:$0xff]
    %3081 = vst [vmem:[#allocation1] ss:$9 sm:$0xff] %v2985
    %3082 = vst [vmem:[%s3066] ss:$9 sm:$0xff] %v3050
    %3083 = vst [vmem:[%s3068] ss:$9 sm:$0xff] %v3051
    %3084 = vst [vmem:[%s3070] ss:$9 sm:$0xff] %v3052
    %3085 = vst [vmem:[%s3072] ss:$9 sm:$0xff] %v3053
    %3086 = vst [vmem:[%s3074] ss:$9 sm:$0xff] %v3035
    %3087 = vst [vmem:[%s3076] ss:$9 sm:$0xff] %v3054
    %3088 = vst [vmem:[%s3078] ss:$9 sm:$0xff] %v3055
    %v3089 = vld [vmem:[#allocation1] sm:$0xff]
    %3090 = vst [vmem:[#allocation1] ss:$9 sm:$0xff] %v3056
    %3091 = vst [vmem:[%s3066] ss:$9 sm:$0xff] %v3057
    %3092 = vst [vmem:[%s3068] ss:$9 sm:$0xff] %v3058
    %3093 = vst [vmem:[%s3070] ss:$9 sm:$0xff] %v3059
    %3094 = vst [vmem:[%s3072] ss:$9 sm:$0xff] %v3060
    %3095 = vst [vmem:[%s3074] ss:$9 sm:$0xff] %v3037
    %3096 = vst [vmem:[%s3076] ss:$9 sm:$0xff] %v3061
    %3097 = vst [vmem:[%s3078] ss:$9 sm:$0xff] %v3062
    %v3098 = vld [vmem:[#allocation1] sm:$0xff]
    %3099 = vst [vmem:[#allocation1] ss:$9 sm:$0xff] %v3063
    %3100 = vst [vmem:[%s3066] ss:$9 sm:$0xff] %v3064
    %v3101 = vld [vmem:[#allocation1] sm:$0xff]
    %v3106 = vpack.c.bf16 %v3089, %v3080
    %v3107 = vpack.c.bf16 %v3101, %v3098
    %s3108 = scalar_lea.vmem %s11, 24
    %v3109 = vld [vmem:[%s3108] sm:$0xf]
    %v3110 = vld [vmem:[%s3108 + $0x4] sm:$0xf]
    %v3113 = vunpack.c.l.b16 %v3109
    %v3114 = vunpack.c.l.b16 %v3110
    %v3115 = vpack.c.b16 %v3114, %v3113
    %v3118 = vsel %vm508, %v3106, 0
    %v3121 = vsel %vm508, %v3107, 0
    %3123 = vmatpush.bf16.msra.mxu0 0
    %3124 = vmatpush.bf16.msra.mxu0 0
    %3125 = vmatpush.bf16.msra.mxu0 0
    %3126 = vmatpush.bf16.msra.mxu0 0
    %3127 = vmatpush.bf16.msra.mxu0 0
    %3128 = vmatpush.bf16.msra.mxu0 0
    %3129 = vmatpush.bf16.msra.mxu0 0
    %3130 = vmatpush.bf16.msra.mxu0 %v3115
    %3131 = vmatmul.bf16.gmra.mxu0 %v3118
    %v3132 = vpop.f32.mrf.mxu0
    %v3133 = vadd.f32 0.0, %v3132
    %v3134 = vpop.f32.mrf.mxu0
    %v3135 = vadd.f32 0.0, %v3134
    %3136 = vmatmul.bf16.gmra.mxu0 %v3121
    %v3137 = vpop.f32.mrf.mxu0
    %v3138 = vadd.f32 0.0, %v3137
    %v3139 = vpop.f32.mrf.mxu0
    %v3140 = vadd.f32 0.0, %v3139
    %3141 = vdwg.mxu0
    %v3144 = vunpack.c.l.b16 %v2475
    %v3145 = vunpack.c.l.b16 %v2476
    %v3146 = vpack.c.b16 %v3145, %v3144
    %v3149 = vsel %vm508, %v2472, 0
    %v3152 = vsel %vm508, %v2473, 0
    %3154 = vmatpush.bf16.msra.mxu0 0
    %3155 = vmatpush.bf16.msra.mxu0 0
    %3156 = vmatpush.bf16.msra.mxu0 0
    %3157 = vmatpush.bf16.msra.mxu0 0
    %3158 = vmatpush.bf16.msra.mxu0 0
    %3159 = vmatpush.bf16.msra.mxu0 0
    %3160 = vmatpush.bf16.msra.mxu0 0
    %3161 = vmatpush.bf16.msra.mxu0 %v3146
    %3162 = vmatmul.bf16.gmra.mxu0 %v3149
    %v3163 = vpop.f32.mrf.mxu0
    %v3164 = vadd.f32 %v3133, %v3163
    %v3165 = vpop.f32.mrf.mxu0
    %v3166 = vadd.f32 %v3135, %v3165
    %3167 = vmatmul.bf16.gmra.mxu0 %v3152
    %v3168 = vpop.f32.mrf.mxu0
    %v3169 = vadd.f32 %v3138, %v3168
    %v3170 = vpop.f32.mrf.mxu0
    %v3171 = vadd.f32 %v3140, %v3170
    %3172 = vdwg.mxu0
    %s3173 = scalar_lea.vmem %s12, 1
    %v3174 = vld [vmem:[%s3173] sm:$0x1]
    %v3176 = vperm.slane %v3174, 0
    %v3178 = vadd.f32 %v3164, %v3176
    %v3179 = vadd.f32 %v3166, %v3176
    %v3180 = vadd.f32 %v3169, %v3176
    %v3181 = vadd.f32 %v3171, %v3176
    %v3182 = vadd.f32 %v1831, %v3178
    %v3183 = vadd.f32 %v1832, %v3179
    %v3184 = vadd.f32 %v1833, %v3180
    %v3185 = vadd.f32 %v1834, %v3181
    %s3186 = scalar_lea.vmem %s17, 1
    %v3187 = vld [vmem:[%s3186] sm:$0x1]
    %s3188 = scalar_lea.vmem %s18, 1
    %v3189 = vld [vmem:[%s3188] sm:$0x1]
    %v3190 = vsel %vm108, %v3182, 0.0
    %3191 = vadd.xlane.f32.xlu0 %v3190
    %v3192 = vpop.xlane.xlu0 %3191
    %v3193 = vsel %vm108, %v3183, 0.0
    %3194 = vadd.xlane.f32.xlu0 %v3193
    %v3195 = vpop.xlane.xlu0 %3194
    %v3196 = vsel %vm108, %v3184, 0.0
    %3197 = vadd.xlane.f32.xlu0 %v3196
    %v3198 = vpop.xlane.xlu0 %3197
    %v3199 = vsel %vm1511, %v3185, 0.0
    %3200 = vadd.xlane.f32.xlu0 %v3199
    %v3201 = vpop.xlane.xlu0 %3200
    %v3202 = vmul.f32 %v3192, %v1521
    %v3203 = vmul.f32 %v3195, %v1521
    %v3204 = vmul.f32 %v3198, %v1521
    %v3205 = vmul.f32 %v3201, %v1521
    %v3206 = vsub.f32 %v3182, %v3202
    %v3207 = vsub.f32 %v3183, %v3203
    %v3208 = vsub.f32 %v3184, %v3204
    %v3209 = vsub.f32 %v3185, %v3205
    %v3210 = vmul.f32 %v3206, %v3206
    %v3211 = vmul.f32 %v3207, %v3207
    %v3212 = vmul.f32 %v3208, %v3208
    %v3213 = vmul.f32 %v3209, %v3209
    %v3214 = vsel %vm108, %v3210, 0.0
    %3215 = vadd.xlane.f32.xlu0 %v3214
    %v3216 = vpop.xlane.xlu0 %3215
    %v3217 = vsel %vm108, %v3211, 0.0
    %3218 = vadd.xlane.f32.xlu0 %v3217
    %v3219 = vpop.xlane.xlu0 %3218
    %v3220 = vsel %vm108, %v3212, 0.0
    %3221 = vadd.xlane.f32.xlu0 %v3220
    %v3222 = vpop.xlane.xlu0 %3221
    %v3223 = vsel %vm1511, %v3213, 0.0
    %3224 = vadd.xlane.f32.xlu0 %v3223
    %v3225 = vpop.xlane.xlu0 %3224
    %v3226 = vmul.f32 %v3216, %v1521
    %v3227 = vmul.f32 %v3219, %v1521
    %v3228 = vmul.f32 %v3222, %v1521
    %v3229 = vmul.f32 %v3225, %v1521
    %v3230 = vadd.f32 %v3226, 1e-05
    %v3231 = vadd.f32 %v3227, 1e-05
    %v3232 = vadd.f32 %v3228, 1e-05
    %v3233 = vadd.f32 %v3229, 1e-05
    %v3234 = vrsqrt.pop %v3230
    %v3235 = vmul.f32 %v3234, %v3230
    %v3236 = vmul.f32 %v3235, %v3234
    %v3237 = vmul.f32 0.5, %v3236
    %v3238 = vsub.f32 1.5, %v3237
    %v3239 = vmul.f32 %v3234, %v3238
    %vm3240 = vweird.f32 %v3230
    %vm3241 = vweird.f32 %v3234
    %vm3242 = vmor %vm3240, %vm3241
    %v3243 = vsel %vm3242, %v3234, %v3239
    %v3244 = vrsqrt.pop %v3231
    %v3245 = vmul.f32 %v3244, %v3231
    %v3246 = vmul.f32 %v3245, %v3244
    %v3247 = vmul.f32 0.5, %v3246
    %v3248 = vsub.f32 1.5, %v3247
    %v3249 = vmul.f32 %v3244, %v3248
    %vm3250 = vweird.f32 %v3231
    %vm3251 = vweird.f32 %v3244
    %vm3252 = vmor %vm3250, %vm3251
    %v3253 = vsel %vm3252, %v3244, %v3249
    %v3254 = vrsqrt.pop %v3232
    %v3255 = vmul.f32 %v3254, %v3232
    %v3256 = vmul.f32 %v3255, %v3254
    %v3257 = vmul.f32 0.5, %v3256
    %v3258 = vsub.f32 1.5, %v3257
    %v3259 = vmul.f32 %v3254, %v3258
    %vm3260 = vweird.f32 %v3232
    %vm3261 = vweird.f32 %v3254
    %vm3262 = vmor %vm3260, %vm3261
    %v3263 = vsel %vm3262, %v3254, %v3259
    %v3264 = vrsqrt.pop %v3233
    %v3265 = vmul.f32 %v3264, %v3233
    %v3266 = vmul.f32 %v3265, %v3264
    %v3267 = vmul.f32 0.5, %v3266
    %v3268 = vsub.f32 1.5, %v3267
    %v3269 = vmul.f32 %v3264, %v3268
    %vm3270 = vweird.f32 %v3233
    %vm3271 = vweird.f32 %v3264
    %vm3272 = vmor %vm3270, %vm3271
    %v3273 = vsel %vm3272, %v3264, %v3269
    %v3274 = vmul.f32 %v3206, %v3243
    %v3275 = vmul.f32 %v3207, %v3253
    %v3276 = vmul.f32 %v3208, %v3263
    %v3277 = vmul.f32 %v3209, %v3273
    %v3279 = vperm.slane %v3187, 0
    %v3281 = vmul.f32 %v3274, %v3279
    %v3282 = vmul.f32 %v3275, %v3279
    %v3283 = vmul.f32 %v3276, %v3279
    %v3284 = vmul.f32 %v3277, %v3279
    %v3286 = vperm.slane %v3189, 0
    %v3288 = vadd.f32 %v3281, %v3286
    %v3289 = vadd.f32 %v3282, %v3286
    %v3290 = vadd.f32 %v3283, %v3286
    %v3291 = vadd.f32 %v3284, %v3286
    %s3292 = scalar_lea.vmem %s13, 16
    %v3293 = vld [vmem:[%s3292] sm:$0xf]
    %v3294 = vld [vmem:[%s3292 + $0x4] sm:$0xf]
    %v3295 = vld [vmem:[%s3292 + $0x8] sm:$0xf]
    %v3296 = vld [vmem:[%s3292 + $0xc] sm:$0xf]
    %v3297 = vpack.c.bf16 %v3289, %v3288
    %v3298 = vpack.c.bf16 %v3291, %v3290
    %s3299 = scalar_lea.vmem %s14, 1
    %v3300 = vld [vmem:[%s3299] sm:$0x1]
    %v3302 = vperm.slane %v3300, 0
    %v3308 = vunpack.c.l.b16 %v3293
    %v3309 = vunpack.c.l.b16 %v3294
    %v3310 = vunpack.c.l.b16 %v3295
    %v3311 = vunpack.c.l.b16 %v3296
    %v3312 = vpack.c.b16 %v3309, %v3308
    %v3313 = vpack.c.b16 %v3311, %v3310
    %v3317 = vsel %vm108, %v3297, 0
    %v3320 = vsel %vm108, %v3298, 0
    %3322 = vmatpush.bf16.msra.mxu0 0
    %3323 = vmatpush.bf16.msra.mxu0 0
    %3324 = vmatpush.bf16.msra.mxu0 0
    %3325 = vmatpush.bf16.msra.mxu0 0
    %3326 = vmatpush.bf16.msra.mxu0 0
    %3327 = vmatpush.bf16.msra.mxu0 0
    %3328 = vmatpush.bf16.msra.mxu0 %v3313
    %3329 = vmatpush.bf16.msra.mxu0 %v3312
    %3330 = vmatmul.bf16.gmra.mxu0 %v3317
    %v3331 = vpop.f32.mrf.mxu0
    %v3332 = vadd.f32 %v3302, %v3331
    %v3333 = vpop.f32.mrf.mxu0
    %v3334 = vadd.f32 %v3302, %v3333
    %3335 = vmatmul.bf16.gmra.mxu0 %v3320
    %v3336 = vpop.f32.mrf.mxu0
    %v3337 = vadd.f32 %v3302, %v3336
    %v3338 = vpop.f32.mrf.mxu0
    %v3339 = vadd.f32 %v3302, %v3338
    %3340 = vdwg.mxu0
    %v3341 = vmax.f32 %v3332, 0.0
    %v3342 = vmax.f32 %v3334, 0.0
    %v3343 = vmax.f32 %v3337, 0.0
    %v3344 = vmax.f32 %v3339, 0.0
    %s3345 = scalar_lea.vmem %s15, 32
    %v3346 = vld [vmem:[%s3345] sm:$0xf]
    %v3347 = vld [vmem:[%s3345 + $0x4] sm:$0xf]
    %v3348 = vld [vmem:[%s3345 + $0x8] sm:$0xf]
    %v3349 = vld [vmem:[%s3345 + $0xc] sm:$0xf]
    %v3350 = vld [vmem:[%s3345 + $0x10] sm:$0xf]
    %v3351 = vld [vmem:[%s3345 + $0x14] sm:$0xf]
    %v3352 = vld [vmem:[%s3345 + $0x18] sm:$0xf]
    %v3353 = vld [vmem:[%s3345 + $0x1c] sm:$0xf]
    %v3354 = vpack.c.bf16 %v3342, %v3341
    %v3355 = vpack.c.bf16 %v3344, %v3343
    %s3356 = scalar_lea.vmem %s16, 1
    %v3357 = vld [vmem:[%s3356] sm:$0x1]
    %v3359 = vperm.slane %v3357, 0
    %v3369 = vunpack.c.l.b16 %v3346
    %v3370 = vunpack.c.l.b16 %v3347
    %v3371 = vunpack.c.l.b16 %v3348
    %v3372 = vunpack.c.l.b16 %v3349
    %v3373 = vunpack.c.l.b16 %v3350
    %v3374 = vunpack.c.l.b16 %v3351
    %v3375 = vunpack.c.l.b16 %v3352
    %v3376 = vunpack.c.l.b16 %v3353
    %v3377 = vpack.c.b16 %v3370, %v3369
    %v3378 = vpack.c.b16 %v3372, %v3371
    %v3379 = vpack.c.b16 %v3374, %v3373
    %v3380 = vpack.c.b16 %v3376, %v3375
    %v3386 = vsel %vm1701, %v3354, 0
    %v3389 = vsel %vm1701, %v3355, 0
    %3391 = vmatpush.bf16.msra.mxu0 0
    %3392 = vmatpush.bf16.msra.mxu0 0
    %3393 = vmatpush.bf16.msra.mxu0 0
    %3394 = vmatpush.bf16.msra.mxu0 0
    %3395 = vmatpush.bf16.msra.mxu0 %v3380
    %3396 = vmatpush.bf16.msra.mxu0 %v3379
    %3397 = vmatpush.bf16.msra.mxu0 %v3378
    %3398 = vmatpush.bf16.msra.mxu0 %v3377
    %3399 = vmatmul.bf16.gmra.mxu0 %v3386
    %v3400 = vpop.f32.mrf.mxu0
    %v3401 = vadd.f32 %v3359, %v3400
    %v3402 = vpop.f32.mrf.mxu0
    %v3403 = vadd.f32 %v3359, %v3402
    %3404 = vmatmul.bf16.gmra.mxu0 %v3389
    %v3405 = vpop.f32.mrf.mxu0
    %v3406 = vadd.f32 %v3359, %v3405
    %v3407 = vpop.f32.mrf.mxu0
    %v3408 = vadd.f32 %v3359, %v3407
    %3409 = vdwg.mxu0
    %v3410 = vadd.f32 %v3288, %v3401
    %v3411 = vadd.f32 %v3289, %v3403
    %v3412 = vadd.f32 %v3290, %v3406
    %v3413 = vadd.f32 %v3291, %v3408
    %s3414 = scalar_lea.vmem %s19, 1
    %v3415 = vld [vmem:[%s3414] sm:$0x1]
    %s3416 = scalar_lea.vmem %s20, 1
    %v3417 = vld [vmem:[%s3416] sm:$0x1]
    %v3418 = vsel %vm108, %v3410, 0.0
    %3419 = vadd.xlane.f32.xlu0 %v3418
    %v3420 = vpop.xlane.xlu0 %3419
    %v3421 = vsel %vm108, %v3411, 0.0
    %3422 = vadd.xlane.f32.xlu0 %v3421
    %v3423 = vpop.xlane.xlu0 %3422
    %v3424 = vsel %vm108, %v3412, 0.0
    %3425 = vadd.xlane.f32.xlu0 %v3424
    %v3426 = vpop.xlane.xlu0 %3425
    %v3427 = vsel %vm1511, %v3413, 0.0
    %3428 = vadd.xlane.f32.xlu0 %v3427
    %v3429 = vpop.xlane.xlu0 %3428
    %v3430 = vmul.f32 %v3420, %v1521
    %v3431 = vmul.f32 %v3423, %v1521
    %v3432 = vmul.f32 %v3426, %v1521
    %v3433 = vmul.f32 %v3429, %v1521
    %v3434 = vsub.f32 %v3410, %v3430
    %v3435 = vsub.f32 %v3411, %v3431
    %v3436 = vsub.f32 %v3412, %v3432
    %v3437 = vsub.f32 %v3413, %v3433
    %v3438 = vmul.f32 %v3434, %v3434
    %v3439 = vmul.f32 %v3435, %v3435
    %v3440 = vmul.f32 %v3436, %v3436
    %v3441 = vmul.f32 %v3437, %v3437
    %v3442 = vsel %vm108, %v3438, 0.0
    %3443 = vadd.xlane.f32.xlu0 %v3442
    %v3444 = vpop.xlane.xlu0 %3443
    %v3445 = vsel %vm108, %v3439, 0.0
    %3446 = vadd.xlane.f32.xlu0 %v3445
    %v3447 = vpop.xlane.xlu0 %3446
    %v3448 = vsel %vm108, %v3440, 0.0
    %3449 = vadd.xlane.f32.xlu0 %v3448
    %v3450 = vpop.xlane.xlu0 %3449
    %v3451 = vsel %vm1511, %v3441, 0.0
    %3452 = vadd.xlane.f32.xlu0 %v3451
    %v3453 = vpop.xlane.xlu0 %3452
    %v3454 = vmul.f32 %v3444, %v1521
    %v3455 = vmul.f32 %v3447, %v1521
    %v3456 = vmul.f32 %v3450, %v1521
    %v3457 = vmul.f32 %v3453, %v1521
    %v3458 = vadd.f32 %v3454, 1e-05
    %v3459 = vadd.f32 %v3455, 1e-05
    %v3460 = vadd.f32 %v3456, 1e-05
    %v3461 = vadd.f32 %v3457, 1e-05
    %v3462 = vrsqrt.pop %v3458
    %v3463 = vmul.f32 %v3462, %v3458
    %v3464 = vmul.f32 %v3463, %v3462
    %v3465 = vmul.f32 0.5, %v3464
    %v3466 = vsub.f32 1.5, %v3465
    %v3467 = vmul.f32 %v3462, %v3466
    %vm3468 = vweird.f32 %v3458
    %vm3469 = vweird.f32 %v3462
    %vm3470 = vmor %vm3468, %vm3469
    %v3471 = vsel %vm3470, %v3462, %v3467
    %v3472 = vrsqrt.pop %v3459
    %v3473 = vmul.f32 %v3472, %v3459
    %v3474 = vmul.f32 %v3473, %v3472
    %v3475 = vmul.f32 0.5, %v3474
    %v3476 = vsub.f32 1.5, %v3475
    %v3477 = vmul.f32 %v3472, %v3476
    %vm3478 = vweird.f32 %v3459
    %vm3479 = vweird.f32 %v3472
    %vm3480 = vmor %vm3478, %vm3479
    %v3481 = vsel %vm3480, %v3472, %v3477
    %v3482 = vrsqrt.pop %v3460
    %v3483 = vmul.f32 %v3482, %v3460
    %v3484 = vmul.f32 %v3483, %v3482
    %v3485 = vmul.f32 0.5, %v3484
    %v3486 = vsub.f32 1.5, %v3485
    %v3487 = vmul.f32 %v3482, %v3486
    %vm3488 = vweird.f32 %v3460
    %vm3489 = vweird.f32 %v3482
    %vm3490 = vmor %vm3488, %vm3489
    %v3491 = vsel %vm3490, %v3482, %v3487
    %v3492 = vrsqrt.pop %v3461
    %v3493 = vmul.f32 %v3492, %v3461
    %v3494 = vmul.f32 %v3493, %v3492
    %v3495 = vmul.f32 0.5, %v3494
    %v3496 = vsub.f32 1.5, %v3495
    %v3497 = vmul.f32 %v3492, %v3496
    %vm3498 = vweird.f32 %v3461
    %vm3499 = vweird.f32 %v3492
    %vm3500 = vmor %vm3498, %vm3499
    %v3501 = vsel %vm3500, %v3492, %v3497
    %v3502 = vmul.f32 %v3434, %v3471
    %v3503 = vmul.f32 %v3435, %v3481
    %v3504 = vmul.f32 %v3436, %v3491
    %v3505 = vmul.f32 %v3437, %v3501
    %v3507 = vperm.slane %v3415, 0
    %v3509 = vmul.f32 %v3502, %v3507
    %v3510 = vmul.f32 %v3503, %v3507
    %v3511 = vmul.f32 %v3504, %v3507
    %v3512 = vmul.f32 %v3505, %v3507
    %v3514 = vperm.slane %v3417, 0
    %v3516 = vadd.f32 %v3509, %v3514
    %v3517 = vadd.f32 %v3510, %v3514
    %v3518 = vadd.f32 %v3511, %v3514
    %v3519 = vadd.f32 %v3512, %v3514
    %v3520 = vld [vmem:[%s21] sm:$0xff]
    %v3521 = vld [vmem:[%s21 + $0x8] sm:$0xff]
    %v3522 = vld [vmem:[%s21 + $0x10] sm:$0xff]
    %v3523 = vld [vmem:[%s21 + $0x18] sm:$0xff]
    %v3525 = vsel %vm108, %v3516, 0
    %v3528 = vsel %vm108, %v3517, 0
    %v3531 = vsel %vm108, %v3518, 0
    %v3534 = vsel %vm108, %v3519, 0
    %3536 = vmatpush.msra.mxu0 0.0
    %3537 = vmatpush.msra.mxu0 0.0
    %3538 = vmatpush.msra.mxu0 0.0
    %3539 = vmatpush.msra.mxu0 0.0
    %3540 = vmatpush.msra.mxu0 0.0
    %3541 = vmatpush.msra.mxu0 0.0
    %3542 = vmatpush.msra.mxu0 0.0
    %3543 = vmatpush.msra.mxu0 0.0
    %3544 = vmatpush.msra.mxu0 0.0
    %3545 = vmatpush.msra.mxu0 0.0
    %3546 = vmatpush.msra.mxu0 0.0
    %3547 = vmatpush.msra.mxu0 0.0
    %3548 = vmatpush.msra.mxu0 %v3523
    %3549 = vmatpush.msra.mxu0 %v3522
    %3550 = vmatpush.msra.mxu0 %v3521
    %3551 = vmatpush.msra.mxu0 %v3520
    %3552 = vmatmul.f32.gmra.mxu0 %v3525
    %v3553 = vpop.f32.mrf.mxu0
    %v3554 = vadd.f32 0.0, %v3553
    %3555 = vmatmul.f32.gmra.mxu0 %v3528
    %v3556 = vpop.f32.mrf.mxu0
    %v3557 = vadd.f32 0.0, %v3556
    %3558 = vmatmul.f32.gmra.mxu0 %v3531
    %v3559 = vpop.f32.mrf.mxu0
    %v3560 = vadd.f32 0.0, %v3559
    %3561 = vmatmul.f32.gmra.mxu0 %v3534
    %v3562 = vpop.f32.mrf.mxu0
    %v3563 = vadd.f32 0.0, %v3562
    %3564 = vdwg.mxu0
    %v3569 = vrot.slane %v3554, 5
    %v3570 = vrot.slane %v3554, 6
    %v3571 = vrot.slane %v3554, 7
    %v3572 = vrot.slane %v3557, 1
    %v3573 = vrot.slane %v3557, 2
    %v3574 = vrot.slane %v3557, 3
    %v3575 = vrot.slane %v3557, 4
    %v3576 = vrot.slane %v3560, 2
    %v3577 = vrot.slane %v3560, 3
    %v3578 = vrot.slane %v3560, 4
    %v3579 = vrot.slane %v3560, 5
    %v3580 = vrot.slane %v3560, 6
    %v3581 = vrot.slane %v3560, 7
    %v3582 = vrot.slane %v3563, 1
    %v3597 = vld [vmem:[#allocation2] sm:$0x1]
    %v3599 = vperm.slane %v3597, 0
    %3600 = vset.pattern.permute.xlu0 0
    %3601 = vperm.xlu0 %3600, %v3599
    %v3602 = vpop.permute.xlu0 %3601
    %v3604 = vadd.f32 %v3569, %v3602
    %v3605 = vadd.f32 %v3570, %v3602
    %v3606 = vadd.f32 %v3571, %v3602
    %v3607 = vadd.f32 %v3557, %v3602
    %v3608 = vadd.f32 %v3572, %v3602
    %v3609 = vadd.f32 %v3573, %v3602
    %v3610 = vadd.f32 %v3574, %v3602
    %v3611 = vadd.f32 %v3575, %v3602
    %v3612 = vadd.f32 %v3576, %v3602
    %v3613 = vadd.f32 %v3577, %v3602
    %v3614 = vadd.f32 %v3578, %v3602
    %v3615 = vadd.f32 %v3579, %v3602
    %v3616 = vadd.f32 %v3580, %v3602
    %v3617 = vadd.f32 %v3581, %v3602
    %v3618 = vadd.f32 %v3563, %v3602
    %v3619 = vadd.f32 %v3582, %v3602
    %v3620 = vlaneseq
    %v3621 = vand.u32 %v3620, 127
    %3638 = vst [vmem:[#allocation1] ss:$9 sm:$0xff] %v3604
    %s3639 = scalar_lea.vmem [#allocation1], 1
    %3640 = vst [vmem:[%s3639] ss:$9 sm:$0xff] %v3605
    %s3641 = scalar_lea.vmem [#allocation1], 2
    %3642 = vst [vmem:[%s3641] ss:$9 sm:$0xff] %v3606
    %s3643 = scalar_lea.vmem [#allocation1], 3
    %3644 = vst [vmem:[%s3643] ss:$9 sm:$0xff] %v3607
    %s3645 = scalar_lea.vmem [#allocation1], 4
    %3646 = vst [vmem:[%s3645] ss:$9 sm:$0xff] %v3608
    %s3647 = scalar_lea.vmem [#allocation1], 5
    %3648 = vst [vmem:[%s3647] ss:$9 sm:$0xff] %v3609
    %s3649 = scalar_lea.vmem [#allocation1], 6
    %3650 = vst [vmem:[%s3649] ss:$9 sm:$0xff] %v3610
    %s3651 = scalar_lea.vmem [#allocation1], 7
    %3652 = vst [vmem:[%s3651] ss:$9 sm:$0xff] %v3611
    %v3653 = vld [vmem:[#allocation1] sm:$0xff]
    %3654 = vst [vmem:[#allocation1] ss:$9 sm:$0xff] %v3612
    %3655 = vst [vmem:[%s3639] ss:$9 sm:$0xff] %v3613
    %3656 = vst [vmem:[%s3641] ss:$9 sm:$0xff] %v3614
    %3657 = vst [vmem:[%s3643] ss:$9 sm:$0xff] %v3615
    %3658 = vst [vmem:[%s3645] ss:$9 sm:$0xff] %v3616
    %3659 = vst [vmem:[%s3647] ss:$9 sm:$0xff] %v3617
    %3660 = vst [vmem:[%s3649] ss:$9 sm:$0xff] %v3618
    %3661 = vst [vmem:[%s3651] ss:$9 sm:$0xff] %v3619
    %v3662 = vld [vmem:[#allocation1] sm:$0xff]
    %3663 = vset.pattern.permute.xlu0 0
    %3664 = vperm.xlu0 %3663, %v3653
    %v3665 = vpop.permute.xlu0 %3664
    %3666 = vset.pattern.permute.xlu0 0
    %3667 = vperm.xlu0 %3666, %v3662
    %v3668 = vpop.permute.xlu0 %3667
    %v3669 = vperm.slane %v3665, %v3621
    %v3670 = vperm.slane %v3668, %v3621
    %v3671 = vsel %vm340, %v3670, %v3669
    %vm3673 = vcmask 58368
    %v3674 = vsel %vm3673, %v3671, -inf
    %3675 = vmax.xlane.f32.xlu0 %v3674
    %v3676 = vpop.xlane.xlu0 %3675
    %v3678 = vperm.slane %v3676, 0
    %v3679 = vperm.slane %v3676, 1
    %3680 = vst [vmem:[#allocation1] ss:$9 sm:$0xff] %v3678
    %s3681 = scalar_lea.vmem [#allocation1], 1
    %3682 = vst [vmem:[%s3681] ss:$9 sm:$0xff] %v3679
    %v3683 = vld [vmem:[#allocation1] sm:$0xff]
    %v3684 = vperm.slane %v3683, 0
    %v3685 = vlaneseq
    %v3686 = vshrl.u32 %v3685, 7
    %3688 = vset.pattern.permute.xlu0 %v3686
    %3689 = vperm.xlu0 %3688, %v3684
    %v3690 = vpop.permute.xlu0 %3689
    %v3691 = vperm.slane %v3683, 1
    %v3692 = vlaneseq
    %v3693 = vshrl.u32 %v3692, 7
    %3695 = vset.pattern.permute.xlu0 %v3693
    %3696 = vperm.xlu0 %3695, %v3691
    %v3697 = vpop.permute.xlu0 %3696
    %v3698 = vrot.slane %v3690, 1
    %v3699 = vrot.slane %v3690, 2
    %v3700 = vrot.slane %v3690, 3
    %v3701 = vrot.slane %v3690, 4
    %v3702 = vrot.slane %v3690, 5
    %v3703 = vrot.slane %v3690, 6
    %v3704 = vrot.slane %v3690, 7
    %v3705 = vrot.slane %v3697, 1
    %v3706 = vrot.slane %v3697, 2
    %v3707 = vrot.slane %v3697, 3
    %v3708 = vrot.slane %v3697, 4
    %v3709 = vrot.slane %v3697, 5
    %v3710 = vrot.slane %v3697, 6
    %v3711 = vrot.slane %v3697, 7
    %vm3728 = vcmp.ge.f32.partialorder %v3604, %v3690
    %vm3729 = vcmp.ge.f32.partialorder %v3605, %v3698
    %vm3730 = vcmp.ge.f32.partialorder %v3606, %v3699
    %vm3731 = vcmp.ge.f32.partialorder %v3607, %v3700
    %vm3732 = vcmp.ge.f32.partialorder %v3608, %v3701
    %vm3733 = vcmp.ge.f32.partialorder %v3609, %v3702
    %vm3734 = vcmp.ge.f32.partialorder %v3610, %v3703
    %vm3735 = vcmp.ge.f32.partialorder %v3611, %v3704
    %vm3736 = vcmp.ge.f32.partialorder %v3612, %v3697
    %vm3737 = vcmp.ge.f32.partialorder %v3613, %v3705
    %vm3738 = vcmp.ge.f32.partialorder %v3614, %v3706
    %vm3739 = vcmp.ge.f32.partialorder %v3615, %v3707
    %vm3740 = vcmp.ge.f32.partialorder %v3616, %v3708
    %vm3741 = vcmp.ge.f32.partialorder %v3617, %v3709
    %vm3742 = vcmp.ge.f32.partialorder %v3618, %v3710
    %vm3743 = vcmp.ge.f32.partialorder %v3619, %v3711
    %v3744 = vrot.slane %v3621, 1
    %3745 = vst [vmem:[#allocation1] ss:$9 sm:$0xff] %v3621
    %s3746 = scalar_lea.vmem [#allocation1], 1
    %3747 = vst [vmem:[%s3746] ss:$9 sm:$0xff] %v3744
    %v3748 = vld [vmem:[#allocation1] sm:$0xff]
    %v3749 = vperm.slane %v3748, 0
    %v3750 = vlaneseq
    %v3751 = vshrl.u32 %v3750, 7
    %3753 = vset.pattern.permute.xlu0 %v3751
    %3754 = vperm.xlu0 %3753, %v3749
    %v3755 = vpop.permute.xlu0 %3754
    %v3756 = vperm.slane %v3748, 1
    %v3757 = vlaneseq
    %v3758 = vshrl.u32 %v3757, 7
    %3760 = vset.pattern.permute.xlu0 %v3758
    %3761 = vperm.xlu0 %3760, %v3756
    %v3762 = vpop.permute.xlu0 %3761
    %v3763 = vrot.slane %v3755, 1
    %v3764 = vrot.slane %v3755, 2
    %v3765 = vrot.slane %v3755, 3
    %v3766 = vrot.slane %v3755, 4
    %v3767 = vrot.slane %v3755, 5
    %v3768 = vrot.slane %v3755, 6
    %v3769 = vrot.slane %v3755, 7
    %v3770 = vrot.slane %v3762, 1
    %v3771 = vrot.slane %v3762, 2
    %v3772 = vrot.slane %v3762, 3
    %v3773 = vrot.slane %v3762, 4
    %v3774 = vrot.slane %v3762, 5
    %v3775 = vrot.slane %v3762, 6
    %v3776 = vrot.slane %v3762, 7
    %v3777 = vsel %vm3728, %v3755, 8
    %v3778 = vsel %vm3729, %v3763, 8
    %v3779 = vsel %vm3730, %v3764, 8
    %v3780 = vsel %vm3731, %v3765, 8
    %v3781 = vsel %vm3732, %v3766, 8
    %v3782 = vsel %vm3733, %v3767, 8
    %v3783 = vsel %vm3734, %v3768, 8
    %v3784 = vsel %vm3735, %v3769, 8
    %v3785 = vsel %vm3736, %v3762, 8
    %v3786 = vsel %vm3737, %v3770, 8
    %v3787 = vsel %vm3738, %v3771, 8
    %v3788 = vsel %vm3739, %v3772, 8
    %v3789 = vsel %vm3740, %v3773, 8
    %v3790 = vsel %vm3741, %v3774, 8
    %v3791 = vsel %vm3742, %v3775, 8
    %v3792 = vsel %vm3743, %v3776, 8
    %3793 = vst [vmem:[#allocation1] ss:$9 sm:$0xff] %v3777
    %s3794 = scalar_lea.vmem [#allocation1], 1
    %3795 = vst [vmem:[%s3794] ss:$9 sm:$0xff] %v3778
    %s3796 = scalar_lea.vmem [#allocation1], 2
    %3797 = vst [vmem:[%s3796] ss:$9 sm:$0xff] %v3779
    %s3798 = scalar_lea.vmem [#allocation1], 3
    %3799 = vst [vmem:[%s3798] ss:$9 sm:$0xff] %v3780
    %s3800 = scalar_lea.vmem [#allocation1], 4
    %3801 = vst [vmem:[%s3800] ss:$9 sm:$0xff] %v3781
    %s3802 = scalar_lea.vmem [#allocation1], 5
    %3803 = vst [vmem:[%s3802] ss:$9 sm:$0xff] %v3782
    %s3804 = scalar_lea.vmem [#allocation1], 6
    %3805 = vst [vmem:[%s3804] ss:$9 sm:$0xff] %v3783
    %s3806 = scalar_lea.vmem [#allocation1], 7
    %3807 = vst [vmem:[%s3806] ss:$9 sm:$0xff] %v3784
    %v3808 = vld [vmem:[#allocation1] sm:$0xff]
    %3809 = vst [vmem:[#allocation1] ss:$9 sm:$0xff] %v3785
    %3810 = vst [vmem:[%s3794] ss:$9 sm:$0xff] %v3786
    %3811 = vst [vmem:[%s3796] ss:$9 sm:$0xff] %v3787
    %3812 = vst [vmem:[%s3798] ss:$9 sm:$0xff] %v3788
    %3813 = vst [vmem:[%s3800] ss:$9 sm:$0xff] %v3789
    %3814 = vst [vmem:[%s3802] ss:$9 sm:$0xff] %v3790
    %3815 = vst [vmem:[%s3804] ss:$9 sm:$0xff] %v3791
    %3816 = vst [vmem:[%s3806] ss:$9 sm:$0xff] %v3792
    %v3817 = vld [vmem:[#allocation1] sm:$0xff]
    %3818 = vset.pattern.permute.xlu0 0
    %3819 = vperm.xlu0 %3818, %v3808
    %v3820 = vpop.permute.xlu0 %3819
    %3821 = vset.pattern.permute.xlu0 0
    %3822 = vperm.xlu0 %3821, %v3817
    %v3823 = vpop.permute.xlu0 %3822
    %v3824 = vperm.slane %v3820, %v3621
    %v3825 = vperm.slane %v3823, %v3621
    %v3826 = vsel %vm340, %v3825, %v3824
    %v3827 = vsel %vm3673, %v3826, 2147483647
    %v3828 = vand.u32 %v3827, 65535
    %v3829 = vshra.s32 %v3827, 16
    %v3830 = vcvt.s32.f32 %v3828
    %v3831 = vcvt.s32.f32 %v3829
    %3832 = vmin.xlane.f32.xlu0 %v3831
    %v3833 = vpop.xlane.xlu0 %3832
    %vm3834 = vcmp.eq.f32.partialorder %v3831, %v3833
    %v3835 = vsel %vm3834, %v3830, inf
    %3836 = vmin.xlane.f32.xlu0 %v3835
    %v3837 = vpop.xlane.xlu0 %3836
    %v3838 = vcvt.f32.s32 %v3837
    %v3839 = vcvt.f32.s32 %v3833
    %v3840 = vshll.u32 %v3839, 16
    %v3841 = vadd.s32 %v3840, %v3838
    %vm3842 = vcmp.eq.s32.totalorder %v3621, %v3841
    %v3843 = vsel %vm3842, 1, 0
    %v3844 = vcvt.s32.f32 %v3843
    %v3845 = vld [vmem:[%s1] sm:$0xff]
    %v3846 = vld [vmem:[%s1 + $0x8] sm:$0xff]
    %v3848 = vrot.slane %v3844, 1
    %vm3849 = vcmask 64512
    %v3850 = vsel %vm3849, %v3844, 0
    %3852 = vmatpush.msra.mxu0 0.0
    %3853 = vmatpush.msra.mxu0 0.0
    %3854 = vmatpush.msra.mxu0 0.0
    %3855 = vmatpush.msra.mxu0 0.0
    %3856 = vmatpush.msra.mxu0 0.0
    %3857 = vmatpush.msra.mxu0 0.0
    %3858 = vmatpush.msra.mxu0 0.0
    %3859 = vmatpush.msra.mxu0 0.0
    %3860 = vmatpush.msra.mxu0 0.0
    %3861 = vmatpush.msra.mxu0 0.0
    %3862 = vmatpush.msra.mxu0 0.0
    %3863 = vmatpush.msra.mxu0 0.0
    %3864 = vmatpush.msra.mxu0 0.0
    %3865 = vmatpush.msra.mxu0 0.0
    %3866 = vmatpush.msra.mxu0 0.0
    %3867 = vmatpush.msra.mxu0 %v3845
    %3868 = vmatmul.f32.gmra.mxu0 %v3850
    %v3869 = vpop.f32.mrf.mxu0
    %v3870 = vadd.f32 0.0, %v3869
    %3871 = vdwg.mxu0
    %v3872 = vsel %vm3849, %v3848, 0
    %3874 = vmatpush.msra.mxu0 0.0
    %3875 = vmatpush.msra.mxu0 0.0
    %3876 = vmatpush.msra.mxu0 0.0
    %3877 = vmatpush.msra.mxu0 0.0
    %3878 = vmatpush.msra.mxu0 0.0
    %3879 = vmatpush.msra.mxu0 0.0
    %3880 = vmatpush.msra.mxu0 0.0
    %3881 = vmatpush.msra.mxu0 0.0
    %3882 = vmatpush.msra.mxu0 0.0
    %3883 = vmatpush.msra.mxu0 0.0
    %3884 = vmatpush.msra.mxu0 0.0
    %3885 = vmatpush.msra.mxu0 0.0
    %3886 = vmatpush.msra.mxu0 0.0
    %3887 = vmatpush.msra.mxu0 0.0
    %3888 = vmatpush.msra.mxu0 0.0
    %3889 = vmatpush.msra.mxu0 %v3846
    %3890 = vmatmul.f32.gmra.mxu0 %v3872
    %v3891 = vpop.f32.mrf.mxu0
    %v3892 = vadd.f32 0.0, %v3891
    %3893 = vdwg.mxu0
    %v3896 = vrot.slane %v3892, 7
    %v3897 = vsel %vm340, %v3896, %v3870
    %3899 = vst.msk [vmem:[#allocation3] sm:$0x3] %vm1511, %v3897
    %3900 = vst.msk [vmem:[#allocation5] sm:$0x3] %vm3673, %v3844
    %3901 = vst [vmem:[#allocation1] ss:$9 sm:$0xff] %v3604
    %s3902 = scalar_lea.vmem [#allocation1], 1
    %3903 = vst [vmem:[%s3902] ss:$9 sm:$0xff] %v3605
    %s3904 = scalar_lea.vmem [#allocation1], 2
    %3905 = vst [vmem:[%s3904] ss:$9 sm:$0xff] %v3606
    %s3906 = scalar_lea.vmem [#allocation1], 3
    %3907 = vst [vmem:[%s3906] ss:$9 sm:$0xff] %v3607
    %s3908 = scalar_lea.vmem [#allocation1], 4
    %3909 = vst [vmem:[%s3908] ss:$9 sm:$0xff] %v3608
    %s3910 = scalar_lea.vmem [#allocation1], 5
    %3911 = vst [vmem:[%s3910] ss:$9 sm:$0xff] %v3609
    %s3912 = scalar_lea.vmem [#allocation1], 6
    %3913 = vst [vmem:[%s3912] ss:$9 sm:$0xff] %v3610
    %s3914 = scalar_lea.vmem [#allocation1], 7
    %3915 = vst [vmem:[%s3914] ss:$9 sm:$0xff] %v3611
    %v3916 = vld [vmem:[#allocation1] sm:$0xff]
    %3917 = vst [vmem:[#allocation1] ss:$9 sm:$0xff] %v3612
    %3918 = vst [vmem:[%s3902] ss:$9 sm:$0xff] %v3613
    %3919 = vst [vmem:[%s3904] ss:$9 sm:$0xff] %v3614
    %3920 = vst [vmem:[%s3906] ss:$9 sm:$0xff] %v3615
    %3921 = vst [vmem:[%s3908] ss:$9 sm:$0xff] %v3616
    %3922 = vst [vmem:[%s3910] ss:$9 sm:$0xff] %v3617
    %3923 = vst [vmem:[%s3912] ss:$9 sm:$0xff] %v3618
    %3924 = vst [vmem:[%s3914] ss:$9 sm:$0xff] %v3619
    %v3925 = vld [vmem:[#allocation1] sm:$0xff]
    %3926 = vset.pattern.permute.xlu0 0
    %3927 = vperm.xlu0 %3926, %v3916
    %v3928 = vpop.permute.xlu0 %3927
    %3929 = vset.pattern.permute.xlu0 0
    %3930 = vperm.xlu0 %3929, %v3925
    %v3931 = vpop.permute.xlu0 %3930
    %v3932 = vperm.slane %v3928, %v3621
    %v3933 = vperm.slane %v3931, %v3621
    %v3934 = vsel %vm340, %v3933, %v3932
    %3936 = vst.msk [vmem:[#allocation7] sm:$0x3] %vm3673, %v3934
    // Predicated region
    $region94: #{tpu_custom_call.1} parent=1 // pred_check
      _
    $region95: #{tpu_custom_call.1} parent=1 // pred_check_branch
      %3938 = sbr.rel (0) target = $region97
    $region96: #{tpu_custom_call.1} parent=1 // pred_region
      %3940 = vsyncadd [#allocation4], 0
      %s3942 = sshll.u32 [#allocation3], 4
      %s3943 = int_to_ptr.vmem [resolvable:$true] %s3942
      %s3944 = sshll.u32 %s23, 4
      %s3945 = int_to_ptr.hbm [resolvable:$true] %s3944
      %3947 = dma.vmem_to_hbm [thread:$0]  %s3943, 32, %s3945, [#allocation4]
    $region97: #{tpu_custom_call.1} parent=1 // pred_fallthru
      _
    // Predicated region
    $region98: #{tpu_custom_call.1} parent=1 // pred_check
      _
    $region99: #{tpu_custom_call.1} parent=1 // pred_check_branch
      %3949 = sbr.rel (0) target = $region101
    $region100: #{tpu_custom_call.1} parent=1 // pred_region
      %3951 = vsyncadd [#allocation6], 0
      %s3953 = sshll.u32 [#allocation5], 4
      %s3954 = int_to_ptr.vmem [resolvable:$true] %s3953
      %s3955 = sshll.u32 %s24, 4
      %s3956 = int_to_ptr.hbm [resolvable:$true] %s3955
      %3958 = dma.vmem_to_hbm [thread:$0]  %s3954, 32, %s3956, [#allocation6]
    $region101: #{tpu_custom_call.1} parent=1 // pred_fallthru
      _
    // Predicated region
    $region102: #{tpu_custom_call.1} parent=1 // pred_check
      _
    $region103: #{tpu_custom_call.1} parent=1 // pred_check_branch
      %3960 = sbr.rel (0) target = $region105
    $region104: #{tpu_custom_call.1} parent=1 // pred_region
      %3962 = vsyncadd [#allocation6], 0
      %s3964 = sshll.u32 [#allocation7], 4
      %s3965 = int_to_ptr.vmem [resolvable:$true] %s3964
      %s3966 = sshll.u32 %s25, 4
      %s3967 = int_to_ptr.hbm [resolvable:$true] %s3966
      %3969 = dma.vmem_to_hbm [thread:$0]  %s3965, 32, %s3967, [#allocation6]
    $region105: #{tpu_custom_call.1} parent=1 // pred_fallthru
      _
    // Predicated region
    $region106: #{tpu_custom_call.1} parent=1 // pred_check
      _
    $region107: #{tpu_custom_call.1} parent=1 // pred_check_branch
      %3971 = sbr.rel (0) target = $region109
    $region108: #{tpu_custom_call.1} parent=1 // pred_region
      %3973 = dma.done [#allocation4], 32
    $region109: #{tpu_custom_call.1} parent=1 // pred_fallthru
      _
    // Predicated region
    $region110: #{tpu_custom_call.1} parent=1 // pred_check
      _
    $region111: #{tpu_custom_call.1} parent=1 // pred_check_branch
      %3975 = sbr.rel (0) target = $region113
    $region112: #{tpu_custom_call.1} parent=1 // pred_region
      %3977 = dma.done [#allocation6], 32
    $region113: #{tpu_custom_call.1} parent=1 // pred_fallthru
      _
    // Predicated region
    $region114: #{tpu_custom_call.1} parent=1 // pred_check
      _
    $region115: #{tpu_custom_call.1} parent=1 // pred_check_branch
      %3979 = sbr.rel (0) target = $region117
    $region116: #{tpu_custom_call.1} parent=1 // pred_region
      %3981 = dma.done [#allocation6], 32
    $region117: #{tpu_custom_call.1} parent=1 // pred_fallthru
      _
    %3982 = vsyncpa [#allocation4], 1
    %3983 = vsyncpa [#allocation6], 1

</llo_original>
